<compile_context>
chip_gen: v5e
topology: v5e:2x2
jax: 0.10.0
libtpu: 0.0.40
codegen_flags: <defaults>
</compile_context>

<pallas_src>
import math

import jax
import jax.numpy as jnp
from jax.experimental import pallas as pl
from jax.experimental.pallas import tpu as pltpu


# ------------------------------ helpers ------------------------------------ #

def _largest_divisor_leq(n, cap):
    best = 1
    for d in range(1, min(n, cap) + 1):
        if n % d == 0:
            best = d
    return best


def _row_tile(m, cap=256):
    """Row tile for the projection matmuls (divides m; 8-aligned when tiling)."""
    if m <= cap:
        return m
    for cand in range(cap, 7, -1):
        if m % cand == 0 and cand % 8 == 0:
            return cand
    return m


# ----------------------------- Pallas kernels ------------------------------ #

def _proj_embed_kernel(x_ref, w_ref, b_ref, gf_ref, gb_ref):
    """Input gates for both directions from the embedding input.

    x:[tm, E] @ w:[E, 8H] + b:[1, 8H] -> split into fwd [tm,4H] / bwd [tm,4H].
    """
    g = (jnp.dot(x_ref[...], w_ref[...], preferred_element_type=jnp.float32)
         + b_ref[...])
    n = gf_ref.shape[-1]
    gf_ref[...] = g[:, :n]
    gb_ref[...] = g[:, n:]


def _proj_hidden_kernel(xf_ref, xb_ref, wt_ref, wb_ref, b_ref, gf_ref, gb_ref):
    """Input gates for both directions from the previous layer's (h_fwd, h_bwd).

    Avoids materializing concat([h_fwd, h_bwd], -1): the [2H, 8H] input weight
    is pre-split into its top ([:H]) and bottom ([H:]) row halves.
    """
    g = (jnp.dot(xf_ref[...], wt_ref[...], preferred_element_type=jnp.float32)
         + jnp.dot(xb_ref[...], wb_ref[...], preferred_element_type=jnp.float32)
         + b_ref[...])
    n = gf_ref.shape[-1]
    gf_ref[...] = g[:, :n]
    gb_ref[...] = g[:, n:]


def _lstm_cell(gates, c_prev, H):
    i = jax.nn.sigmoid(gates[:, 0 * H:1 * H])
    f = jax.nn.sigmoid(gates[:, 1 * H:2 * H])
    g = jnp.tanh(gates[:, 2 * H:3 * H])
    o = jax.nn.sigmoid(gates[:, 3 * H:4 * H])
    c_new = f * c_prev + i * g
    h_new = o * jnp.tanh(c_new)
    return h_new, c_new


def _bilstm_rec_kernel(gxf_ref, gxb_ref, whf_ref, whb_ref,
                       hf_ref, hb_ref,
                       hf_scr, cf_scr, hb_scr, cb_scr):
    """Fused fwd+bwd LSTM recurrence over one chunk of TC timesteps.

    gxf_ref: [TC, B, 4H] precomputed x@W_ih_f + b_f for chunk c (forward time).
    gxb_ref: [TC, B, 4H] same for the backward direction; the BlockSpec
             index_map hands us the *mirrored* chunk (nchunks-1-c) and we walk
             it in reverse inside the chunk, so no reversed copy of x is needed.
    whf/whb: [H, 4H] recurrent weights (VMEM-resident across the grid).
    hf_ref:  [TC, B, H] fwd hidden states for chunk c.
    hb_ref:  [TC, B, H] bwd hidden states for the mirrored chunk (stored at the
             original time index, exactly like torch's bidirectional output).
    """
    c_idx = pl.program_id(0)
    tc = gxf_ref.shape[0]
    H = whf_ref.shape[0]

    @pl.when(c_idx == 0)
    def _():
        hf_scr[...] = jnp.zeros_like(hf_scr)
        cf_scr[...] = jnp.zeros_like(cf_scr)
        hb_scr[...] = jnp.zeros_like(hb_scr)
        cb_scr[...] = jnp.zeros_like(cb_scr)

    def step(i, carry):
        h_f, c_f, h_b, c_b = carry
        j = tc - 1 - i
        g_f = (jnp.dot(h_f, whf_ref[...], preferred_element_type=jnp.float32)
               + gxf_ref[i])
        g_b = (jnp.dot(h_b, whb_ref[...], preferred_element_type=jnp.float32)
               + gxb_ref[j])
        h_f, c_f = _lstm_cell(g_f, c_f, H)
        h_b, c_b = _lstm_cell(g_b, c_b, H)
        hf_ref[i] = h_f
        hb_ref[j] = h_b
        return h_f, c_f, h_b, c_b

    carry0 = (hf_scr[...], cf_scr[...], hb_scr[...], cb_scr[...])
    h_f, c_f, h_b, c_b = jax.lax.fori_loop(0, tc, step, carry0, unroll=True)
    hf_scr[...] = h_f
    cf_scr[...] = c_f
    hb_scr[...] = h_b
    cb_scr[...] = c_b


def _bilstm_rec_last_kernel(gxf_ref, gxb_ref, whf_ref, whb_ref,
                            wof_ref, wob_ref, bo_ref,
                            o_ref,
                            hf_scr, cf_scr, hb_scr, cb_scr, hbT_scr):
    """Final-layer recurrence fused with the linear head.

    Only out[:, -1, :] of the last LSTM layer is needed, so this variant never
    writes per-timestep hidden states to HBM.  The backward hidden at original
    time T-1 is produced at the very first backward step (chunk 0, step 0) and
    is captured into a scratch; the forward hidden at time T-1 is simply the
    final forward carry.  The head matmul is done in the last chunk's epilogue.
    """
    c_idx = pl.program_id(0)
    nchunks = pl.num_programs(0)
    tc = gxf_ref.shape[0]
    H = whf_ref.shape[0]

    @pl.when(c_idx == 0)
    def _():
        hf_scr[...] = jnp.zeros_like(hf_scr)
        cf_scr[...] = jnp.zeros_like(cf_scr)
        hb_scr[...] = jnp.zeros_like(hb_scr)
        cb_scr[...] = jnp.zeros_like(cb_scr)
        hbT_scr[...] = jnp.zeros_like(hbT_scr)

    first_chunk = c_idx == 0

    def step(i, carry):
        h_f, c_f, h_b, c_b, h_bT = carry
        j = tc - 1 - i
        g_f = (jnp.dot(h_f, whf_ref[...], preferred_element_type=jnp.float32)
               + gxf_ref[i])
        g_b = (jnp.dot(h_b, whb_ref[...], preferred_element_type=jnp.float32)
               + gxb_ref[j])
        h_f, c_f = _lstm_cell(g_f, c_f, H)
        h_b, c_b = _lstm_cell(g_b, c_b, H)
        # Capture bwd hidden at original time T-1 (first backward step overall).
        h_bT = jnp.where(jnp.logical_and(first_chunk, i == 0), h_b, h_bT)
        return h_f, c_f, h_b, c_b, h_bT

    carry0 = (hf_scr[...], cf_scr[...], hb_scr[...], cb_scr[...], hbT_scr[...])
    h_f, c_f, h_b, c_b, h_bT = jax.lax.fori_loop(0, tc, step, carry0, unroll=True)
    hf_scr[...] = h_f
    cf_scr[...] = c_f
    hb_scr[...] = h_b
    cb_scr[...] = c_b
    hbT_scr[...] = h_bT

    @pl.when(c_idx == nchunks - 1)
    def _():
        o_ref[...] = (jnp.dot(hf_scr[...], wof_ref[...],
                              preferred_element_type=jnp.float32)
                      + jnp.dot(hbT_scr[...], wob_ref[...],
                                preferred_element_type=jnp.float32)
                      + bo_ref[...])


# ----------------------------- kernel wrappers ------------------------------ #

def proj_embed(x2d, w_in, b_cat):
    """[M, E] @ [E, 8H] + [1, 8H] -> (gx_fwd [M, 4H], gx_bwd [M, 4H])."""
    M, E = x2d.shape
    G2 = w_in.shape[1]
    G = G2 // 2
    tm = _row_tile(M)
    return pl.pallas_call(
        _proj_embed_kernel,
        out_shape=(jax.ShapeDtypeStruct((M, G), jnp.float32),
                   jax.ShapeDtypeStruct((M, G), jnp.float32)),
        grid_spec=pltpu.PrefetchScalarGridSpec(
            num_scalar_prefetch=0,
            grid=(M // tm,),
            in_specs=[
                pl.BlockSpec((tm, E), lambda i: (i, 0)),
                pl.BlockSpec((E, G2), lambda i: (0, 0)),   # resident weight
                pl.BlockSpec((1, G2), lambda i: (0, 0)),   # resident bias
            ],
            out_specs=[
                pl.BlockSpec((tm, G), lambda i: (i, 0)),
                pl.BlockSpec((tm, G), lambda i: (i, 0)),
            ],
        ),
        compiler_params=pltpu.CompilerParams(dimension_semantics=("parallel",)),
    )(x2d, w_in, b_cat)


def proj_hidden(hf2d, hb2d, w_top, w_bot, b_cat):
    """h_fwd@W_top + h_bwd@W_bot + b -> (gx_fwd, gx_bwd); W_{top,bot}: [H, 8H]."""
    M, H = hf2d.shape
    G2 = w_top.shape[1]
    G = G2 // 2
    tm = _row_tile(M)
    return pl.pallas_call(
        _proj_hidden_kernel,
        out_shape=(jax.ShapeDtypeStruct((M, G), jnp.float32),
                   jax.ShapeDtypeStruct((M, G), jnp.float32)),
        grid_spec=pltpu.PrefetchScalarGridSpec(
            num_scalar_prefetch=0,
            grid=(M // tm,),
            in_specs=[
                pl.BlockSpec((tm, H), lambda i: (i, 0)),
                pl.BlockSpec((tm, H), lambda i: (i, 0)),
                pl.BlockSpec((H, G2), lambda i: (0, 0)),
                pl.BlockSpec((H, G2), lambda i: (0, 0)),
                pl.BlockSpec((1, G2), lambda i: (0, 0)),
            ],
            out_specs=[
                pl.BlockSpec((tm, G), lambda i: (i, 0)),
                pl.BlockSpec((tm, G), lambda i: (i, 0)),
            ],
        ),
        compiler_params=pltpu.CompilerParams(dimension_semantics=("parallel",)),
    )(hf2d, hb2d, w_top, w_bot, b_cat)


def bilstm_recurrence(gx_f, gx_b, w_hh_f, w_hh_b, max_chunk=16):
    """Fused bidirectional recurrence (intermediate layers).

    gx_f/gx_b: [T, B, 4H] precomputed input gates (forward time order for both).
    Returns (h_fwd [T,B,H], h_bwd [T,B,H]), both indexed by original time.
    """
    T, B, G = gx_f.shape
    H = w_hh_f.shape[0]
    tc = _largest_divisor_leq(T, max_chunk)
    nchunks = T // tc
    return pl.pallas_call(
        _bilstm_rec_kernel,
        out_shape=(jax.ShapeDtypeStruct((T, B, H), jnp.float32),
                   jax.ShapeDtypeStruct((T, B, H), jnp.float32)),
        grid_spec=pltpu.PrefetchScalarGridSpec(
            num_scalar_prefetch=0,
            grid=(nchunks,),
            in_specs=[
                pl.BlockSpec((tc, B, G), lambda c: (c, 0, 0)),
                # backward direction: mirrored chunk via index_map (no x[::-1])
                pl.BlockSpec((tc, B, G), lambda c: (nchunks - 1 - c, 0, 0)),
                pl.BlockSpec((H, G), lambda c: (0, 0)),    # W_hh_f resident
                pl.BlockSpec((H, G), lambda c: (0, 0)),    # W_hh_b resident
            ],
            out_specs=[
                pl.BlockSpec((tc, B, H), lambda c: (c, 0, 0)),
                pl.BlockSpec((tc, B, H), lambda c: (nchunks - 1 - c, 0, 0)),
            ],
            scratch_shapes=[
                pltpu.VMEM((B, H), jnp.float32),   # h fwd
                pltpu.VMEM((B, H), jnp.float32),   # c fwd
                pltpu.VMEM((B, H), jnp.float32),   # h bwd
                pltpu.VMEM((B, H), jnp.float32),   # c bwd
            ],
        ),
        compiler_params=pltpu.CompilerParams(
            dimension_semantics=("arbitrary",)),   # recurrence: sequential grid
    )(gx_f, gx_b, w_hh_f, w_hh_b)


def bilstm_recurrence_last(gx_f, gx_b, w_hh_f, w_hh_b,
                           w_out_f, w_out_b, b_out, max_chunk=16):
    """Final layer: recurrence fused with the last-step linear head -> [B, O]."""
    T, B, G = gx_f.shape
    H = w_hh_f.shape[0]
    O = w_out_f.shape[1]
    tc = _largest_divisor_leq(T, max_chunk)
    nchunks = T // tc
    return pl.pallas_call(
        _bilstm_rec_last_kernel,
        out_shape=jax.ShapeDtypeStruct((B, O), jnp.float32),
        grid_spec=pltpu.PrefetchScalarGridSpec(
            num_scalar_prefetch=0,
            grid=(nchunks,),
            in_specs=[
                pl.BlockSpec((tc, B, G), lambda c: (c, 0, 0)),
                pl.BlockSpec((tc, B, G), lambda c: (nchunks - 1 - c, 0, 0)),
                pl.BlockSpec((H, G), lambda c: (0, 0)),    # W_hh_f resident
                pl.BlockSpec((H, G), lambda c: (0, 0)),    # W_hh_b resident
                pl.BlockSpec((H, O), lambda c: (0, 0)),    # W_out fwd half
                pl.BlockSpec((H, O), lambda c: (0, 0)),    # W_out bwd half
                pl.BlockSpec((1, O), lambda c: (0, 0)),    # b_out
            ],
            out_specs=pl.BlockSpec((B, O), lambda c: (0, 0)),  # VMEM-resident
            scratch_shapes=[
                pltpu.VMEM((B, H), jnp.float32),   # h fwd
                pltpu.VMEM((B, H), jnp.float32),   # c fwd
                pltpu.VMEM((B, H), jnp.float32),   # h bwd
                pltpu.VMEM((B, H), jnp.float32),   # c bwd
                pltpu.VMEM((B, H), jnp.float32),   # h bwd @ t = T-1 (captured)
            ],
        ),
        compiler_params=pltpu.CompilerParams(
            dimension_semantics=("arbitrary",)),
    )(gx_f, gx_b, w_hh_f, w_hh_b, w_out_f, w_out_b, b_out)


# ------------------------------ model wrapper ------------------------------ #

def init_params(key, vocab_len, embed_size, hidden_dim, output_dim, num_layers):
    keys = iter(jax.random.split(key, 4 + 8 * num_layers))
    params = {}
    params["embed"] = jax.random.normal(next(keys), (vocab_len, embed_size), jnp.float32)
    bound = 1.0 / math.sqrt(hidden_dim)
    layers = []
    for l in range(num_layers):
        d_in = embed_size if l == 0 else 2 * hidden_dim
        layer = {}
        for direction in ("fwd", "bwd"):
            w_ih = jax.random.uniform(next(keys), (d_in, 4 * hidden_dim),
                                      jnp.float32, -bound, bound)
            w_hh = jax.random.uniform(next(keys), (hidden_dim, 4 * hidden_dim),
                                      jnp.float32, -bound, bound)
            b_ih = jax.random.uniform(next(keys), (4 * hidden_dim,),
                                      jnp.float32, -bound, bound)
            b_hh = jax.random.uniform(next(keys), (4 * hidden_dim,),
                                      jnp.float32, -bound, bound)
            layer[direction] = (w_ih, w_hh, (b_ih + b_hh)[None, :])
        layers.append(layer)
    params["lstm"] = layers
    lin_bound = 1.0 / math.sqrt(2 * hidden_dim)
    params["w_out"] = jax.random.uniform(next(keys), (2 * hidden_dim, output_dim),
                                         jnp.float32, -lin_bound, lin_bound)
    params["b_out"] = jax.random.uniform(next(keys), (1, output_dim),
                                         jnp.float32, -lin_bound, lin_bound)
    return params


def pack_params(params):
    """One-time repack into the layouts the Pallas kernels consume.

    Per layer: both directions' W_ih are concatenated into one [D_in, 8H]
    input-projection weight (for layers > 0 split into [:H]/[H:] row halves so
    the previous layer's h_fwd/h_bwd never need concatenation); biases become
    [1, 8H]; W_hh stays per-direction [H, 4H]; the head weight is row-split.
    NOTE: weights stay f32 here for exact parity with the f32 reference; on
    v6e/v7x, storing W_ih/W_hh in bf16 (f32 accumulation, f32 h/c state) would
    halve weight residency and HBM traffic.
    """
    H = params["lstm"][0]["fwd"][1].shape[0]
    packed = {"embed": params["embed"], "b_out": params["b_out"],
              "w_out_f": params["w_out"][:H], "w_out_b": params["w_out"][H:]}
    layers = []
    for l, layer in enumerate(params["lstm"]):
        w_ih_f, w_hh_f, b_f = layer["fwd"]
        w_ih_b, w_hh_b, b_b = layer["bwd"]
        w_in_cat = jnp.concatenate([w_ih_f, w_ih_b], axis=1)        # [D_in, 8H]
        entry = {"w_hh_f": w_hh_f, "w_hh_b": w_hh_b,
                 "b_cat": jnp.concatenate([b_f, b_b], axis=1)}       # [1, 8H]
        if l == 0:
            entry["w_in"] = w_in_cat
        else:
            entry["w_in_top"] = w_in_cat[:H]   # rows fed by h_fwd of prev layer
            entry["w_in_bot"] = w_in_cat[H:]   # rows fed by h_bwd of prev layer
        layers.append(entry)
    packed["lstm"] = layers
    return packed


def bilstm_forward(tokens, packed):
    # TODO(synk): embedding gather is left to XLA (jnp.take) and inter-layer
    # dropout is omitted (inference-mode semantics). h0/c0 zeros match torch.
    # Gather directly into time-major [T, B, E] (transpose the tiny token
    # matrix, not the embedded activations).
    emb = jnp.take(packed["embed"], tokens.T.astype(jnp.int32), axis=0)  # [T, B, E]
    T, B, E = emb.shape
    x = emb.astype(jnp.float32)

    n_layers = len(packed["lstm"])
    hf = hb = None
    for l, layer in enumerate(packed["lstm"]):
        H = layer["w_hh_f"].shape[0]
        if l == 0:
            gf2, gb2 = proj_embed(x.reshape(T * B, E), layer["w_in"], layer["b_cat"])
        else:
            Hp = hf.shape[-1]
            gf2, gb2 = proj_hidden(hf.reshape(T * B, Hp), hb.reshape(T * B, Hp),
                                   layer["w_in_top"], layer["w_in_bot"],
                                   layer["b_cat"])
        gx_f = gf2.reshape(T, B, 4 * H)
        gx_b = gb2.reshape(T, B, 4 * H)
        if l == n_layers - 1:
            # Final layer: recurrence + last-step linear head fused; no
            # [T,B,H] outputs ever hit HBM for this layer.
            return bilstm_recurrence_last(gx_f, gx_b,
                                          layer["w_hh_f"], layer["w_hh_b"],
                                          packed["w_out_f"], packed["w_out_b"],
                                          packed["b_out"])
        hf, hb = bilstm_recurrence(gx_f, gx_b, layer["w_hh_f"], layer["w_hh_b"])


bilstm_forward_jit = jax.jit(bilstm_forward)


# ------------------------- pure-JAX reference check ------------------------ #

def _lstm_layer_ref(x_tbd, w_ih, w_hh, b):
    T, B, _ = x_tbd.shape
    H = w_hh.shape[0]

    def step(carry, x_t):
        h, c = carry
        gates = x_t @ w_ih + h @ w_hh + b
        i = jax.nn.sigmoid(gates[:, 0 * H:1 * H])
        f = jax.nn.sigmoid(gates[:, 1 * H:2 * H])
        g = jnp.tanh(gates[:, 2 * H:3 * H])
        o = jax.nn.sigmoid(gates[:, 3 * H:4 * H])
        c = f * c + i * g
        h = o * jnp.tanh(c)
        return (h, c), h

    init = (jnp.zeros((B, H), jnp.float32), jnp.zeros((B, H), jnp.float32))
    _, hs = jax.lax.scan(step, init, x_tbd)
    return hs


def bilstm_forward_ref(tokens, params):
    emb = jnp.take(params["embed"], tokens.astype(jnp.int32), axis=0)
    x = jnp.transpose(emb, (1, 0, 2)).astype(jnp.float32)
    for layer in params["lstm"]:
        w_ih_f, w_hh_f, b_f = layer["fwd"]
        w_ih_b, w_hh_b, b_b = layer["bwd"]
        h_fwd = _lstm_layer_ref(x, w_ih_f, w_hh_f, b_f)
        h_bwd = _lstm_layer_ref(x[::-1], w_ih_b, w_hh_b, b_b)[::-1]
        x = jnp.concatenate([h_fwd, h_bwd], axis=-1)
    return x[-1] @ params["w_out"] + params["b_out"]


# ----------------------------------- main ----------------------------------- #

if __name__ == "__main__":
    B, T = 2, 8
    vocab_len, embed_size, hidden_dim, output_dim, num_layers = 50, 32, 32, 4, 2

    key = jax.random.PRNGKey(0)
    pkey, tkey = jax.random.split(key)
    params = init_params(pkey, vocab_len, embed_size, hidden_dim, output_dim, num_layers)
    packed = pack_params(params)
    tokens = jax.random.randint(tkey, (B, T), 0, vocab_len, dtype=jnp.int32)

    out = bilstm_forward_jit(tokens, packed)
    out = jax.block_until_ready(out)

    ref = bilstm_forward_ref(tokens, params)
    assert out.shape == (B, output_dim), out.shape
    if not jnp.allclose(out, ref, rtol=2e-3, atol=2e-3):
        raise AssertionError(f"Pallas output mismatch:\n{out}\nvs ref\n{ref}")

    print("KERNEL_OK")
</pallas_src>

<mosaic_0001>
module attributes {stable_mosaic.version = 11 : i64} {
  func.func @_bilstm_rec_kernel(%arg0: i32, %arg1: memref<8x2x128xf32, #tpu.memory_space<vmem>>, %arg2: memref<8x2x128xf32, #tpu.memory_space<vmem>>, %arg3: memref<32x128xf32, #tpu.memory_space<vmem>>, %arg4: memref<32x128xf32, #tpu.memory_space<vmem>>, %arg5: memref<8x2x32xf32, #tpu.memory_space<vmem>>, %arg6: memref<8x2x32xf32, #tpu.memory_space<vmem>>, %arg7: memref<2x32xf32, #tpu.memory_space<vmem>>, %arg8: memref<2x32xf32, #tpu.memory_space<vmem>>, %arg9: memref<2x32xf32, #tpu.memory_space<vmem>>, %arg10: memref<2x32xf32, #tpu.memory_space<vmem>>) attributes {dimension_semantics = [#tpu.dimension_semantics<arbitrary>], iteration_bounds = array<i64: 1>, scalar_prefetch = 0 : i64, scratch_operands = 4 : i64, tpu.core_type = #tpu.core_type<tc>, window_params = [{transform_indices = @transform_0, window_bounds = array<i64: 8, 2, 128>}, {transform_indices = @transform_1, window_bounds = array<i64: 8, 2, 128>}, {pipeline_mode = #tpu.pipeline_mode<synchronous>, transform_indices = @transform_2, window_bounds = array<i64: 32, 128>}, {pipeline_mode = #tpu.pipeline_mode<synchronous>, transform_indices = @transform_3, window_bounds = array<i64: 32, 128>}, {transform_indices = @transform_4, window_bounds = array<i64: 8, 2, 32>}, {transform_indices = @transform_5, window_bounds = array<i64: 8, 2, 32>}]} {
    %c0_i32 = arith.constant 0 : i32
    %0 = arith.cmpi eq, %arg0, %c0_i32 : i32
    %1 = arith.extui %0 : i1 to i32
    %c0_i32_0 = arith.constant 0 : i32
    %2 = arith.cmpi ne, %1, %c0_i32_0 : i32
    scf.if %2 {
      %cst_184 = arith.constant 0.000000e+00 : f32
      %579 = vector.broadcast %cst_184 : f32 to vector<2x32xf32>
      %c0_185 = arith.constant 0 : index
      %c0_186 = arith.constant 0 : index
      %580 = vector.load %arg7[%c0_185, %c0_186] : memref<2x32xf32, #tpu.memory_space<vmem>>, vector<2x32xf32>
      tpu.vector_store %arg7[%c0_185, %c0_186], %579 {strides = array<i32>} : memref<2x32xf32, #tpu.memory_space<vmem>>, vector<2x32xf32>,
      %cst_187 = arith.constant 0.000000e+00 : f32
      %581 = vector.broadcast %cst_187 : f32 to vector<2x32xf32>
      %c0_188 = arith.constant 0 : index
      %c0_189 = arith.constant 0 : index
      %582 = vector.load %arg8[%c0_188, %c0_189] : memref<2x32xf32, #tpu.memory_space<vmem>>, vector<2x32xf32>
      tpu.vector_store %arg8[%c0_188, %c0_189], %581 {strides = array<i32>} : memref<2x32xf32, #tpu.memory_space<vmem>>, vector<2x32xf32>,
      %cst_190 = arith.constant 0.000000e+00 : f32
      %583 = vector.broadcast %cst_190 : f32 to vector<2x32xf32>
      %c0_191 = arith.constant 0 : index
      %c0_192 = arith.constant 0 : index
      %584 = vector.load %arg9[%c0_191, %c0_192] : memref<2x32xf32, #tpu.memory_space<vmem>>, vector<2x32xf32>
      tpu.vector_store %arg9[%c0_191, %c0_192], %583 {strides = array<i32>} : memref<2x32xf32, #tpu.memory_space<vmem>>, vector<2x32xf32>,
      %cst_193 = arith.constant 0.000000e+00 : f32
      %585 = vector.broadcast %cst_193 : f32 to vector<2x32xf32>
      %c0_194 = arith.constant 0 : index
      %c0_195 = arith.constant 0 : index
      %586 = vector.load %arg10[%c0_194, %c0_195] : memref<2x32xf32, #tpu.memory_space<vmem>>, vector<2x32xf32>
      tpu.vector_store %arg10[%c0_194, %c0_195], %585 {strides = array<i32>} : memref<2x32xf32, #tpu.memory_space<vmem>>, vector<2x32xf32>,
    } else {
    }
    %c0 = arith.constant 0 : index
    %c0_1 = arith.constant 0 : index
    %3 = vector.load %arg7[%c0, %c0_1] : memref<2x32xf32, #tpu.memory_space<vmem>>, vector<2x32xf32>
    %c0_2 = arith.constant 0 : index
    %c0_3 = arith.constant 0 : index
    %4 = vector.load %arg8[%c0_2, %c0_3] : memref<2x32xf32, #tpu.memory_space<vmem>>, vector<2x32xf32>
    %c0_4 = arith.constant 0 : index
    %c0_5 = arith.constant 0 : index
    %5 = vector.load %arg9[%c0_4, %c0_5] : memref<2x32xf32, #tpu.memory_space<vmem>>, vector<2x32xf32>
    %c0_6 = arith.constant 0 : index
    %c0_7 = arith.constant 0 : index
    %6 = vector.load %arg10[%c0_6, %c0_7] : memref<2x32xf32, #tpu.memory_space<vmem>>, vector<2x32xf32>
    %c0_i32_8 = arith.constant 0 : i32
    %c7_i32 = arith.constant 7 : i32
    %7 = arith.subi %c7_i32, %c0_i32_8 : i32
    %c0_9 = arith.constant 0 : index
    %c0_10 = arith.constant 0 : index
    %8 = vector.load %arg3[%c0_9, %c0_10] : memref<32x128xf32, #tpu.memory_space<vmem>>, vector<32x128xf32>
    %cst = arith.constant dense<0.000000e+00> : vector<2x128xf32>
    %9 = tpu.matmul %3, %8, %cst {dimension_numbers = #tpu.dot_dimension_numbers<[1], [0], [0], [1], [0, 0, 1, 1], [], []>} : vector<2x32xf32>, vector<32x128xf32>, vector<2x128xf32> -> vector<2x128xf32>
    %10 = arith.index_cast %c0_i32_8 : i32 to index
    %c0_11 = arith.constant 0 : index
    %c0_12 = arith.constant 0 : index
    %11 = vector.load %arg1[%10, %c0_11, %c0_12] : memref<8x2x128xf32, #tpu.memory_space<vmem>>, vector<1x2x128xf32>
    %12 = vector.shape_cast %11 : vector<1x2x128xf32> to vector<2x128xf32>
    %13 = arith.addf %9, %12 : vector<2x128xf32>
    %c0_13 = arith.constant 0 : index
    %c0_14 = arith.constant 0 : index
    %14 = vector.load %arg4[%c0_13, %c0_14] : memref<32x128xf32, #tpu.memory_space<vmem>>, vector<32x128xf32>
    %cst_15 = arith.constant dense<0.000000e+00> : vector<2x128xf32>
    %15 = tpu.matmul %5, %14, %cst_15 {dimension_numbers = #tpu.dot_dimension_numbers<[1], [0], [0], [1], [0, 0, 1, 1], [], []>} : vector<2x32xf32>, vector<32x128xf32>, vector<2x128xf32> -> vector<2x128xf32>
    %16 = arith.index_cast %7 : i32 to index
    %c0_16 = arith.constant 0 : index
    %c0_17 = arith.constant 0 : index
    %17 = vector.load %arg2[%16, %c0_16, %c0_17] : memref<8x2x128xf32, #tpu.memory_space<vmem>>, vector<1x2x128xf32>
    %18 = vector.shape_cast %17 : vector<1x2x128xf32> to vector<2x128xf32>
    %19 = arith.addf %15, %18 : vector<2x128xf32>
    %20 = vector.extract_strided_slice %13 {offsets = [0, 0], sizes = [2, 32], strides = [1, 1]} : vector<2x128xf32> to vector<2x32xf32>
    %21 = arith.negf %20 : vector<2x32xf32>
    %22 = math.exp %21 : vector<2x32xf32>
    %cst_18 = arith.constant 1.000000e+00 : f32
    %23 = vector.broadcast %cst_18 : f32 to vector<2x32xf32>
    %24 = arith.addf %23, %22 : vector<2x32xf32>
    %25 = arith.divf %23, %24 : vector<2x32xf32>
    %26 = vector.extract_strided_slice %13 {offsets = [0, 32], sizes = [2, 32], strides = [1, 1]} : vector<2x128xf32> to vector<2x32xf32>
    %27 = arith.negf %26 : vector<2x32xf32>
    %28 = math.exp %27 : vector<2x32xf32>
    %cst_19 = arith.constant 1.000000e+00 : f32
    %29 = vector.broadcast %cst_19 : f32 to vector<2x32xf32>
    %30 = arith.addf %29, %28 : vector<2x32xf32>
    %31 = arith.divf %29, %30 : vector<2x32xf32>
    %32 = vector.extract_strided_slice %13 {offsets = [0, 64], sizes = [2, 32], strides = [1, 1]} : vector<2x128xf32> to vector<2x32xf32>
    %33 = math.tanh %32 : vector<2x32xf32>
    %34 = vector.extract_strided_slice %13 {offsets = [0, 96], sizes = [2, 32], strides = [1, 1]} : vector<2x128xf32> to vector<2x32xf32>
    %35 = arith.negf %34 : vector<2x32xf32>
    %36 = math.exp %35 : vector<2x32xf32>
    %cst_20 = arith.constant 1.000000e+00 : f32
    %37 = vector.broadcast %cst_20 : f32 to vector<2x32xf32>
    %38 = arith.addf %37, %36 : vector<2x32xf32>
    %39 = arith.divf %37, %38 : vector<2x32xf32>
    %40 = arith.mulf %31, %4 : vector<2x32xf32>
    %41 = arith.mulf %25, %33 : vector<2x32xf32>
    %42 = arith.addf %40, %41 : vector<2x32xf32>
    %43 = math.tanh %42 : vector<2x32xf32>
    %44 = arith.mulf %39, %43 : vector<2x32xf32>
    %45 = vector.extract_strided_slice %19 {offsets = [0, 0], sizes = [2, 32], strides = [1, 1]} : vector<2x128xf32> to vector<2x32xf32>
    %46 = arith.negf %45 : vector<2x32xf32>
    %47 = math.exp %46 : vector<2x32xf32>
    %cst_21 = arith.constant 1.000000e+00 : f32
    %48 = vector.broadcast %cst_21 : f32 to vector<2x32xf32>
    %49 = arith.addf %48, %47 : vector<2x32xf32>
    %50 = arith.divf %48, %49 : vector<2x32xf32>
    %51 = vector.extract_strided_slice %19 {offsets = [0, 32], sizes = [2, 32], strides = [1, 1]} : vector<2x128xf32> to vector<2x32xf32>
    %52 = arith.negf %51 : vector<2x32xf32>
    %53 = math.exp %52 : vector<2x32xf32>
    %cst_22 = arith.constant 1.000000e+00 : f32
    %54 = vector.broadcast %cst_22 : f32 to vector<2x32xf32>
    %55 = arith.addf %54, %53 : vector<2x32xf32>
    %56 = arith.divf %54, %55 : vector<2x32xf32>
    %57 = vector.extract_strided_slice %19 {offsets = [0, 64], sizes = [2, 32], strides = [1, 1]} : vector<2x128xf32> to vector<2x32xf32>
    %58 = math.tanh %57 : vector<2x32xf32>
    %59 = vector.extract_strided_slice %19 {offsets = [0, 96], sizes = [2, 32], strides = [1, 1]} : vector<2x128xf32> to vector<2x32xf32>
    %60 = arith.negf %59 : vector<2x32xf32>
    %61 = math.exp %60 : vector<2x32xf32>
    %cst_23 = arith.constant 1.000000e+00 : f32
    %62 = vector.broadcast %cst_23 : f32 to vector<2x32xf32>
    %63 = arith.addf %62, %61 : vector<2x32xf32>
    %64 = arith.divf %62, %63 : vector<2x32xf32>
    %65 = arith.mulf %56, %6 : vector<2x32xf32>
    %66 = arith.mulf %50, %58 : vector<2x32xf32>
    %67 = arith.addf %65, %66 : vector<2x32xf32>
    %68 = math.tanh %67 : vector<2x32xf32>
    %69 = arith.mulf %64, %68 : vector<2x32xf32>
    %70 = arith.index_cast %c0_i32_8 : i32 to index
    %c0_24 = arith.constant 0 : index
    %c0_25 = arith.constant 0 : index
    %71 = vector.load %arg5[%70, %c0_24, %c0_25] : memref<8x2x32xf32, #tpu.memory_space<vmem>>, vector<1x2x32xf32>
    %72 = vector.shape_cast %71 : vector<1x2x32xf32> to vector<2x32xf32>
    %73 = vector.shape_cast %44 : vector<2x32xf32> to vector<1x2x32xf32>
    tpu.vector_store %arg5[%70, %c0_24, %c0_25], %73 {strides = array<i32>} : memref<8x2x32xf32, #tpu.memory_space<vmem>>, vector<1x2x32xf32>,
    %74 = arith.index_cast %7 : i32 to index
    %c0_26 = arith.constant 0 : index
    %c0_27 = arith.constant 0 : index
    %75 = vector.load %arg6[%74, %c0_26, %c0_27] : memref<8x2x32xf32, #tpu.memory_space<vmem>>, vector<1x2x32xf32>
    %76 = vector.shape_cast %75 : vector<1x2x32xf32> to vector<2x32xf32>
    %77 = vector.shape_cast %69 : vector<2x32xf32> to vector<1x2x32xf32>
    tpu.vector_store %arg6[%74, %c0_26, %c0_27], %77 {strides = array<i32>} : memref<8x2x32xf32, #tpu.memory_space<vmem>>, vector<1x2x32xf32>,
    %c1_i32 = arith.constant 1 : i32
    %c7_i32_28 = arith.constant 7 : i32
    %78 = arith.subi %c7_i32_28, %c1_i32 : i32
    %c0_29 = arith.constant 0 : index
    %c0_30 = arith.constant 0 : index
    %79 = vector.load %arg3[%c0_29, %c0_30] : memref<32x128xf32, #tpu.memory_space<vmem>>, vector<32x128xf32>
    %cst_31 = arith.constant dense<0.000000e+00> : vector<2x128xf32>
    %80 = tpu.matmul %44, %79, %cst_31 {dimension_numbers = #tpu.dot_dimension_numbers<[1], [0], [0], [1], [0, 0, 1, 1], [], []>} : vector<2x32xf32>, vector<32x128xf32>, vector<2x128xf32> -> vector<2x128xf32>
    %81 = arith.index_cast %c1_i32 : i32 to index
    %c0_32 = arith.constant 0 : index
    %c0_33 = arith.constant 0 : index
    %82 = vector.load %arg1[%81, %c0_32, %c0_33] : memref<8x2x128xf32, #tpu.memory_space<vmem>>, vector<1x2x128xf32>
    %83 = vector.shape_cast %82 : vector<1x2x128xf32> to vector<2x128xf32>
    %84 = arith.addf %80, %83 : vector<2x128xf32>
    %c0_34 = arith.constant 0 : index
    %c0_35 = arith.constant 0 : index
    %85 = vector.load %arg4[%c0_34, %c0_35] : memref<32x128xf32, #tpu.memory_space<vmem>>, vector<32x128xf32>
    %cst_36 = arith.constant dense<0.000000e+00> : vector<2x128xf32>
    %86 = tpu.matmul %69, %85, %cst_36 {dimension_numbers = #tpu.dot_dimension_numbers<[1], [0], [0], [1], [0, 0, 1, 1], [], []>} : vector<2x32xf32>, vector<32x128xf32>, vector<2x128xf32> -> vector<2x128xf32>
    %87 = arith.index_cast %78 : i32 to index
    %c0_37 = arith.constant 0 : index
    %c0_38 = arith.constant 0 : index
    %88 = vector.load %arg2[%87, %c0_37, %c0_38] : memref<8x2x128xf32, #tpu.memory_space<vmem>>, vector<1x2x128xf32>
    %89 = vector.shape_cast %88 : vector<1x2x128xf32> to vector<2x128xf32>
    %90 = arith.addf %86, %89 : vector<2x128xf32>
    %91 = vector.extract_strided_slice %84 {offsets = [0, 0], sizes = [2, 32], strides = [1, 1]} : vector<2x128xf32> to vector<2x32xf32>
    %92 = arith.negf %91 : vector<2x32xf32>
    %93 = math.exp %92 : vector<2x32xf32>
    %cst_39 = arith.constant 1.000000e+00 : f32
    %94 = vector.broadcast %cst_39 : f32 to vector<2x32xf32>
    %95 = arith.addf %94, %93 : vector<2x32xf32>
    %96 = arith.divf %94, %95 : vector<2x32xf32>
    %97 = vector.extract_strided_slice %84 {offsets = [0, 32], sizes = [2, 32], strides = [1, 1]} : vector<2x128xf32> to vector<2x32xf32>
    %98 = arith.negf %97 : vector<2x32xf32>
    %99 = math.exp %98 : vector<2x32xf32>
    %cst_40 = arith.constant 1.000000e+00 : f32
    %100 = vector.broadcast %cst_40 : f32 to vector<2x32xf32>
    %101 = arith.addf %100, %99 : vector<2x32xf32>
    %102 = arith.divf %100, %101 : vector<2x32xf32>
    %103 = vector.extract_strided_slice %84 {offsets = [0, 64], sizes = [2, 32], strides = [1, 1]} : vector<2x128xf32> to vector<2x32xf32>
    %104 = math.tanh %103 : vector<2x32xf32>
    %105 = vector.extract_strided_slice %84 {offsets = [0, 96], sizes = [2, 32], strides = [1, 1]} : vector<2x128xf32> to vector<2x32xf32>
    %106 = arith.negf %105 : vector<2x32xf32>
    %107 = math.exp %106 : vector<2x32xf32>
    %cst_41 = arith.constant 1.000000e+00 : f32
    %108 = vector.broadcast %cst_41 : f32 to vector<2x32xf32>
    %109 = arith.addf %108, %107 : vector<2x32xf32>
    %110 = arith.divf %108, %109 : vector<2x32xf32>
    %111 = arith.mulf %102, %42 : vector<2x32xf32>
    %112 = arith.mulf %96, %104 : vector<2x32xf32>
    %113 = arith.addf %111, %112 : vector<2x32xf32>
    %114 = math.tanh %113 : vector<2x32xf32>
    %115 = arith.mulf %110, %114 : vector<2x32xf32>
    %116 = vector.extract_strided_slice %90 {offsets = [0, 0], sizes = [2, 32], strides = [1, 1]} : vector<2x128xf32> to vector<2x32xf32>
    %117 = arith.negf %116 : vector<2x32xf32>
    %118 = math.exp %117 : vector<2x32xf32>
    %cst_42 = arith.constant 1.000000e+00 : f32
    %119 = vector.broadcast %cst_42 : f32 to vector<2x32xf32>
    %120 = arith.addf %119, %118 : vector<2x32xf32>
    %121 = arith.divf %119, %120 : vector<2x32xf32>
    %122 = vector.extract_strided_slice %90 {offsets = [0, 32], sizes = [2, 32], strides = [1, 1]} : vector<2x128xf32> to vector<2x32xf32>
    %123 = arith.negf %122 : vector<2x32xf32>
    %124 = math.exp %123 : vector<2x32xf32>
    %cst_43 = arith.constant 1.000000e+00 : f32
    %125 = vector.broadcast %cst_43 : f32 to vector<2x32xf32>
    %126 = arith.addf %125, %124 : vector<2x32xf32>
    %127 = arith.divf %125, %126 : vector<2x32xf32>
    %128 = vector.extract_strided_slice %90 {offsets = [0, 64], sizes = [2, 32], strides = [1, 1]} : vector<2x128xf32> to vector<2x32xf32>
    %129 = math.tanh %128 : vector<2x32xf32>
    %130 = vector.extract_strided_slice %90 {offsets = [0, 96], sizes = [2, 32], strides = [1, 1]} : vector<2x128xf32> to vector<2x32xf32>
    %131 = arith.negf %130 : vector<2x32xf32>
    %132 = math.exp %131 : vector<2x32xf32>
    %cst_44 = arith.constant 1.000000e+00 : f32
    %133 = vector.broadcast %cst_44 : f32 to vector<2x32xf32>
    %134 = arith.addf %133, %132 : vector<2x32xf32>
    %135 = arith.divf %133, %134 : vector<2x32xf32>
    %136 = arith.mulf %127, %67 : vector<2x32xf32>
    %137 = arith.mulf %121, %129 : vector<2x32xf32>
    %138 = arith.addf %136, %137 : vector<2x32xf32>
    %139 = math.tanh %138 : vector<2x32xf32>
    %140 = arith.mulf %135, %139 : vector<2x32xf32>
    %141 = arith.index_cast %c1_i32 : i32 to index
    %c0_45 = arith.constant 0 : index
    %c0_46 = arith.constant 0 : index
    %142 = vector.load %arg5[%141, %c0_45, %c0_46] : memref<8x2x32xf32, #tpu.memory_space<vmem>>, vector<1x2x32xf32>
    %143 = vector.shape_cast %142 : vector<1x2x32xf32> to vector<2x32xf32>
    %144 = vector.shape_cast %115 : vector<2x32xf32> to vector<1x2x32xf32>
    tpu.vector_store %arg5[%141, %c0_45, %c0_46], %144 {strides = array<i32>} : memref<8x2x32xf32, #tpu.memory_space<vmem>>, vector<1x2x32xf32>,
    %145 = arith.index_cast %78 : i32 to index
    %c0_47 = arith.constant 0 : index
    %c0_48 = arith.constant 0 : index
    %146 = vector.load %arg6[%145, %c0_47, %c0_48] : memref<8x2x32xf32, #tpu.memory_space<vmem>>, vector<1x2x32xf32>
    %147 = vector.shape_cast %146 : vector<1x2x32xf32> to vector<2x32xf32>
    %148 = vector.shape_cast %140 : vector<2x32xf32> to vector<1x2x32xf32>
    tpu.vector_store %arg6[%145, %c0_47, %c0_48], %148 {strides = array<i32>} : memref<8x2x32xf32, #tpu.memory_space<vmem>>, vector<1x2x32xf32>,
    %c2_i32 = arith.constant 2 : i32
    %c7_i32_49 = arith.constant 7 : i32
    %149 = arith.subi %c7_i32_49, %c2_i32 : i32
    %c0_50 = arith.constant 0 : index
    %c0_51 = arith.constant 0 : index
    %150 = vector.load %arg3[%c0_50, %c0_51] : memref<32x128xf32, #tpu.memory_space<vmem>>, vector<32x128xf32>
    %cst_52 = arith.constant dense<0.000000e+00> : vector<2x128xf32>
    %151 = tpu.matmul %115, %150, %cst_52 {dimension_numbers = #tpu.dot_dimension_numbers<[1], [0], [0], [1], [0, 0, 1, 1], [], []>} : vector<2x32xf32>, vector<32x128xf32>, vector<2x128xf32> -> vector<2x128xf32>
    %152 = arith.index_cast %c2_i32 : i32 to index
    %c0_53 = arith.constant 0 : index
    %c0_54 = arith.constant 0 : index
    %153 = vector.load %arg1[%152, %c0_53, %c0_54] : memref<8x2x128xf32, #tpu.memory_space<vmem>>, vector<1x2x128xf32>
    %154 = vector.shape_cast %153 : vector<1x2x128xf32> to vector<2x128xf32>
    %155 = arith.addf %151, %154 : vector<2x128xf32>
    %c0_55 = arith.constant 0 : index
    %c0_56 = arith.constant 0 : index
    %156 = vector.load %arg4[%c0_55, %c0_56] : memref<32x128xf32, #tpu.memory_space<vmem>>, vector<32x128xf32>
    %cst_57 = arith.constant dense<0.000000e+00> : vector<2x128xf32>
    %157 = tpu.matmul %140, %156, %cst_57 {dimension_numbers = #tpu.dot_dimension_numbers<[1], [0], [0], [1], [0, 0, 1, 1], [], []>} : vector<2x32xf32>, vector<32x128xf32>, vector<2x128xf32> -> vector<2x128xf32>
    %158 = arith.index_cast %149 : i32 to index
    %c0_58 = arith.constant 0 : index
    %c0_59 = arith.constant 0 : index
    %159 = vector.load %arg2[%158, %c0_58, %c0_59] : memref<8x2x128xf32, #tpu.memory_space<vmem>>, vector<1x2x128xf32>
    %160 = vector.shape_cast %159 : vector<1x2x128xf32> to vector<2x128xf32>
    %161 = arith.addf %157, %160 : vector<2x128xf32>
    %162 = vector.extract_strided_slice %155 {offsets = [0, 0], sizes = [2, 32], strides = [1, 1]} : vector<2x128xf32> to vector<2x32xf32>
    %163 = arith.negf %162 : vector<2x32xf32>
    %164 = math.exp %163 : vector<2x32xf32>
    %cst_60 = arith.constant 1.000000e+00 : f32
    %165 = vector.broadcast %cst_60 : f32 to vector<2x32xf32>
    %166 = arith.addf %165, %164 : vector<2x32xf32>
    %167 = arith.divf %165, %166 : vector<2x32xf32>
    %168 = vector.extract_strided_slice %155 {offsets = [0, 32], sizes = [2, 32], strides = [1, 1]} : vector<2x128xf32> to vector<2x32xf32>
    %169 = arith.negf %168 : vector<2x32xf32>
    %170 = math.exp %169 : vector<2x32xf32>
    %cst_61 = arith.constant 1.000000e+00 : f32
    %171 = vector.broadcast %cst_61 : f32 to vector<2x32xf32>
    %172 = arith.addf %171, %170 : vector<2x32xf32>
    %173 = arith.divf %171, %172 : vector<2x32xf32>
    %174 = vector.extract_strided_slice %155 {offsets = [0, 64], sizes = [2, 32], strides = [1, 1]} : vector<2x128xf32> to vector<2x32xf32>
    %175 = math.tanh %174 : vector<2x32xf32>
    %176 = vector.extract_strided_slice %155 {offsets = [0, 96], sizes = [2, 32], strides = [1, 1]} : vector<2x128xf32> to vector<2x32xf32>
    %177 = arith.negf %176 : vector<2x32xf32>
    %178 = math.exp %177 : vector<2x32xf32>
    %cst_62 = arith.constant 1.000000e+00 : f32
    %179 = vector.broadcast %cst_62 : f32 to vector<2x32xf32>
    %180 = arith.addf %179, %178 : vector<2x32xf32>
    %181 = arith.divf %179, %180 : vector<2x32xf32>
    %182 = arith.mulf %173, %113 : vector<2x32xf32>
    %183 = arith.mulf %167, %175 : vector<2x32xf32>
    %184 = arith.addf %182, %183 : vector<2x32xf32>
    %185 = math.tanh %184 : vector<2x32xf32>
    %186 = arith.mulf %181, %185 : vector<2x32xf32>
    %187 = vector.extract_strided_slice %161 {offsets = [0, 0], sizes = [2, 32], strides = [1, 1]} : vector<2x128xf32> to vector<2x32xf32>
    %188 = arith.negf %187 : vector<2x32xf32>
    %189 = math.exp %188 : vector<2x32xf32>
    %cst_63 = arith.constant 1.000000e+00 : f32
    %190 = vector.broadcast %cst_63 : f32 to vector<2x32xf32>
    %191 = arith.addf %190, %189 : vector<2x32xf32>
    %192 = arith.divf %190, %191 : vector<2x32xf32>
    %193 = vector.extract_strided_slice %161 {offsets = [0, 32], sizes = [2, 32], strides = [1, 1]} : vector<2x128xf32> to vector<2x32xf32>
    %194 = arith.negf %193 : vector<2x32xf32>
    %195 = math.exp %194 : vector<2x32xf32>
    %cst_64 = arith.constant 1.000000e+00 : f32
    %196 = vector.broadcast %cst_64 : f32 to vector<2x32xf32>
    %197 = arith.addf %196, %195 : vector<2x32xf32>
    %198 = arith.divf %196, %197 : vector<2x32xf32>
    %199 = vector.extract_strided_slice %161 {offsets = [0, 64], sizes = [2, 32], strides = [1, 1]} : vector<2x128xf32> to vector<2x32xf32>
    %200 = math.tanh %199 : vector<2x32xf32>
    %201 = vector.extract_strided_slice %161 {offsets = [0, 96], sizes = [2, 32], strides = [1, 1]} : vector<2x128xf32> to vector<2x32xf32>
    %202 = arith.negf %201 : vector<2x32xf32>
    %203 = math.exp %202 : vector<2x32xf32>
    %cst_65 = arith.constant 1.000000e+00 : f32
    %204 = vector.broadcast %cst_65 : f32 to vector<2x32xf32>
    %205 = arith.addf %204, %203 : vector<2x32xf32>
    %206 = arith.divf %204, %205 : vector<2x32xf32>
    %207 = arith.mulf %198, %138 : vector<2x32xf32>
    %208 = arith.mulf %192, %200 : vector<2x32xf32>
    %209 = arith.addf %207, %208 : vector<2x32xf32>
    %210 = math.tanh %209 : vector<2x32xf32>
    %211 = arith.mulf %206, %210 : vector<2x32xf32>
    %212 = arith.index_cast %c2_i32 : i32 to index
    %c0_66 = arith.constant 0 : index
    %c0_67 = arith.constant 0 : index
    %213 = vector.load %arg5[%212, %c0_66, %c0_67] : memref<8x2x32xf32, #tpu.memory_space<vmem>>, vector<1x2x32xf32>
    %214 = vector.shape_cast %213 : vector<1x2x32xf32> to vector<2x32xf32>
    %215 = vector.shape_cast %186 : vector<2x32xf32> to vector<1x2x32xf32>
    tpu.vector_store %arg5[%212, %c0_66, %c0_67], %215 {strides = array<i32>} : memref<8x2x32xf32, #tpu.memory_space<vmem>>, vector<1x2x32xf32>,
    %216 = arith.index_cast %149 : i32 to index
    %c0_68 = arith.constant 0 : index
    %c0_69 = arith.constant 0 : index
    %217 = vector.load %arg6[%216, %c0_68, %c0_69] : memref<8x2x32xf32, #tpu.memory_space<vmem>>, vector<1x2x32xf32>
    %218 = vector.shape_cast %217 : vector<1x2x32xf32> to vector<2x32xf32>
    %219 = vector.shape_cast %211 : vector<2x32xf32> to vector<1x2x32xf32>
    tpu.vector_store %arg6[%216, %c0_68, %c0_69], %219 {strides = array<i32>} : memref<8x2x32xf32, #tpu.memory_space<vmem>>, vector<1x2x32xf32>,
    %c3_i32 = arith.constant 3 : i32
    %c7_i32_70 = arith.constant 7 : i32
    %220 = arith.subi %c7_i32_70, %c3_i32 : i32
    %c0_71 = arith.constant 0 : index
    %c0_72 = arith.constant 0 : index
    %221 = vector.load %arg3[%c0_71, %c0_72] : memref<32x128xf32, #tpu.memory_space<vmem>>, vector<32x128xf32>
    %cst_73 = arith.constant dense<0.000000e+00> : vector<2x128xf32>
    %222 = tpu.matmul %186, %221, %cst_73 {dimension_numbers = #tpu.dot_dimension_numbers<[1], [0], [0], [1], [0, 0, 1, 1], [], []>} : vector<2x32xf32>, vector<32x128xf32>, vector<2x128xf32> -> vector<2x128xf32>
    %223 = arith.index_cast %c3_i32 : i32 to index
    %c0_74 = arith.constant 0 : index
    %c0_75 = arith.constant 0 : index
    %224 = vector.load %arg1[%223, %c0_74, %c0_75] : memref<8x2x128xf32, #tpu.memory_space<vmem>>, vector<1x2x128xf32>
    %225 = vector.shape_cast %224 : vector<1x2x128xf32> to vector<2x128xf32>
    %226 = arith.addf %222, %225 : vector<2x128xf32>
    %c0_76 = arith.constant 0 : index
    %c0_77 = arith.constant 0 : index
    %227 = vector.load %arg4[%c0_76, %c0_77] : memref<32x128xf32, #tpu.memory_space<vmem>>, vector<32x128xf32>
    %cst_78 = arith.constant dense<0.000000e+00> : vector<2x128xf32>
    %228 = tpu.matmul %211, %227, %cst_78 {dimension_numbers = #tpu.dot_dimension_numbers<[1], [0], [0], [1], [0, 0, 1, 1], [], []>} : vector<2x32xf32>, vector<32x128xf32>, vector<2x128xf32> -> vector<2x128xf32>
    %229 = arith.index_cast %220 : i32 to index
    %c0_79 = arith.constant 0 : index
    %c0_80 = arith.constant 0 : index
    %230 = vector.load %arg2[%229, %c0_79, %c0_80] : memref<8x2x128xf32, #tpu.memory_space<vmem>>, vector<1x2x128xf32>
    %231 = vector.shape_cast %230 : vector<1x2x128xf32> to vector<2x128xf32>
    %232 = arith.addf %228, %231 : vector<2x128xf32>
    %233 = vector.extract_strided_slice %226 {offsets = [0, 0], sizes = [2, 32], strides = [1, 1]} : vector<2x128xf32> to vector<2x32xf32>
    %234 = arith.negf %233 : vector<2x32xf32>
    %235 = math.exp %234 : vector<2x32xf32>
    %cst_81 = arith.constant 1.000000e+00 : f32
    %236 = vector.broadcast %cst_81 : f32 to vector<2x32xf32>
    %237 = arith.addf %236, %235 : vector<2x32xf32>
    %238 = arith.divf %236, %237 : vector<2x32xf32>
    %239 = vector.extract_strided_slice %226 {offsets = [0, 32], sizes = [2, 32], strides = [1, 1]} : vector<2x128xf32> to vector<2x32xf32>
    %240 = arith.negf %239 : vector<2x32xf32>
    %241 = math.exp %240 : vector<2x32xf32>
    %cst_82 = arith.constant 1.000000e+00 : f32
    %242 = vector.broadcast %cst_82 : f32 to vector<2x32xf32>
    %243 = arith.addf %242, %241 : vector<2x32xf32>
    %244 = arith.divf %242, %243 : vector<2x32xf32>
    %245 = vector.extract_strided_slice %226 {offsets = [0, 64], sizes = [2, 32], strides = [1, 1]} : vector<2x128xf32> to vector<2x32xf32>
    %246 = math.tanh %245 : vector<2x32xf32>
    %247 = vector.extract_strided_slice %226 {offsets = [0, 96], sizes = [2, 32], strides = [1, 1]} : vector<2x128xf32> to vector<2x32xf32>
    %248 = arith.negf %247 : vector<2x32xf32>
    %249 = math.exp %248 : vector<2x32xf32>
    %cst_83 = arith.constant 1.000000e+00 : f32
    %250 = vector.broadcast %cst_83 : f32 to vector<2x32xf32>
    %251 = arith.addf %250, %249 : vector<2x32xf32>
    %252 = arith.divf %250, %251 : vector<2x32xf32>
    %253 = arith.mulf %244, %184 : vector<2x32xf32>
    %254 = arith.mulf %238, %246 : vector<2x32xf32>
    %255 = arith.addf %253, %254 : vector<2x32xf32>
    %256 = math.tanh %255 : vector<2x32xf32>
    %257 = arith.mulf %252, %256 : vector<2x32xf32>
    %258 = vector.extract_strided_slice %232 {offsets = [0, 0], sizes = [2, 32], strides = [1, 1]} : vector<2x128xf32> to vector<2x32xf32>
    %259 = arith.negf %258 : vector<2x32xf32>
    %260 = math.exp %259 : vector<2x32xf32>
    %cst_84 = arith.constant 1.000000e+00 : f32
    %261 = vector.broadcast %cst_84 : f32 to vector<2x32xf32>
    %262 = arith.addf %261, %260 : vector<2x32xf32>
    %263 = arith.divf %261, %262 : vector<2x32xf32>
    %264 = vector.extract_strided_slice %232 {offsets = [0, 32], sizes = [2, 32], strides = [1, 1]} : vector<2x128xf32> to vector<2x32xf32>
    %265 = arith.negf %264 : vector<2x32xf32>
    %266 = math.exp %265 : vector<2x32xf32>
    %cst_85 = arith.constant 1.000000e+00 : f32
    %267 = vector.broadcast %cst_85 : f32 to vector<2x32xf32>
    %268 = arith.addf %267, %266 : vector<2x32xf32>
    %269 = arith.divf %267, %268 : vector<2x32xf32>
    %270 = vector.extract_strided_slice %232 {offsets = [0, 64], sizes = [2, 32], strides = [1, 1]} : vector<2x128xf32> to vector<2x32xf32>
    %271 = math.tanh %270 : vector<2x32xf32>
    %272 = vector.extract_strided_slice %232 {offsets = [0, 96], sizes = [2, 32], strides = [1, 1]} : vector<2x128xf32> to vector<2x32xf32>
    %273 = arith.negf %272 : vector<2x32xf32>
    %274 = math.exp %273 : vector<2x32xf32>
    %cst_86 = arith.constant 1.000000e+00 : f32
    %275 = vector.broadcast %cst_86 : f32 to vector<2x32xf32>
    %276 = arith.addf %275, %274 : vector<2x32xf32>
    %277 = arith.divf %275, %276 : vector<2x32xf32>
    %278 = arith.mulf %269, %209 : vector<2x32xf32>
    %279 = arith.mulf %263, %271 : vector<2x32xf32>
    %280 = arith.addf %278, %279 : vector<2x32xf32>
    %281 = math.tanh %280 : vector<2x32xf32>
    %282 = arith.mulf %277, %281 : vector<2x32xf32>
    %283 = arith.index_cast %c3_i32 : i32 to index
    %c0_87 = arith.constant 0 : index
    %c0_88 = arith.constant 0 : index
    %284 = vector.load %arg5[%283, %c0_87, %c0_88] : memref<8x2x32xf32, #tpu.memory_space<vmem>>, vector<1x2x32xf32>
    %285 = vector.shape_cast %284 : vector<1x2x32xf32> to vector<2x32xf32>
    %286 = vector.shape_cast %257 : vector<2x32xf32> to vector<1x2x32xf32>
    tpu.vector_store %arg5[%283, %c0_87, %c0_88], %286 {strides = array<i32>} : memref<8x2x32xf32, #tpu.memory_space<vmem>>, vector<1x2x32xf32>,
    %287 = arith.index_cast %220 : i32 to index
    %c0_89 = arith.constant 0 : index
    %c0_90 = arith.constant 0 : index
    %288 = vector.load %arg6[%287, %c0_89, %c0_90] : memref<8x2x32xf32, #tpu.memory_space<vmem>>, vector<1x2x32xf32>
    %289 = vector.shape_cast %288 : vector<1x2x32xf32> to vector<2x32xf32>
    %290 = vector.shape_cast %282 : vector<2x32xf32> to vector<1x2x32xf32>
    tpu.vector_store %arg6[%287, %c0_89, %c0_90], %290 {strides = array<i32>} : memref<8x2x32xf32, #tpu.memory_space<vmem>>, vector<1x2x32xf32>,
    %c4_i32 = arith.constant 4 : i32
    %c7_i32_91 = arith.constant 7 : i32
    %291 = arith.subi %c7_i32_91, %c4_i32 : i32
    %c0_92 = arith.constant 0 : index
    %c0_93 = arith.constant 0 : index
    %292 = vector.load %arg3[%c0_92, %c0_93] : memref<32x128xf32, #tpu.memory_space<vmem>>, vector<32x128xf32>
    %cst_94 = arith.constant dense<0.000000e+00> : vector<2x128xf32>
    %293 = tpu.matmul %257, %292, %cst_94 {dimension_numbers = #tpu.dot_dimension_numbers<[1], [0], [0], [1], [0, 0, 1, 1], [], []>} : vector<2x32xf32>, vector<32x128xf32>, vector<2x128xf32> -> vector<2x128xf32>
    %294 = arith.index_cast %c4_i32 : i32 to index
    %c0_95 = arith.constant 0 : index
    %c0_96 = arith.constant 0 : index
    %295 = vector.load %arg1[%294, %c0_95, %c0_96] : memref<8x2x128xf32, #tpu.memory_space<vmem>>, vector<1x2x128xf32>
    %296 = vector.shape_cast %295 : vector<1x2x128xf32> to vector<2x128xf32>
    %297 = arith.addf %293, %296 : vector<2x128xf32>
    %c0_97 = arith.constant 0 : index
    %c0_98 = arith.constant 0 : index
    %298 = vector.load %arg4[%c0_97, %c0_98] : memref<32x128xf32, #tpu.memory_space<vmem>>, vector<32x128xf32>
    %cst_99 = arith.constant dense<0.000000e+00> : vector<2x128xf32>
    %299 = tpu.matmul %282, %298, %cst_99 {dimension_numbers = #tpu.dot_dimension_numbers<[1], [0], [0], [1], [0, 0, 1, 1], [], []>} : vector<2x32xf32>, vector<32x128xf32>, vector<2x128xf32> -> vector<2x128xf32>
    %300 = arith.index_cast %291 : i32 to index
    %c0_100 = arith.constant 0 : index
    %c0_101 = arith.constant 0 : index
    %301 = vector.load %arg2[%300, %c0_100, %c0_101] : memref<8x2x128xf32, #tpu.memory_space<vmem>>, vector<1x2x128xf32>
    %302 = vector.shape_cast %301 : vector<1x2x128xf32> to vector<2x128xf32>
    %303 = arith.addf %299, %302 : vector<2x128xf32>
    %304 = vector.extract_strided_slice %297 {offsets = [0, 0], sizes = [2, 32], strides = [1, 1]} : vector<2x128xf32> to vector<2x32xf32>
    %305 = arith.negf %304 : vector<2x32xf32>
    %306 = math.exp %305 : vector<2x32xf32>
    %cst_102 = arith.constant 1.000000e+00 : f32
    %307 = vector.broadcast %cst_102 : f32 to vector<2x32xf32>
    %308 = arith.addf %307, %306 : vector<2x32xf32>
    %309 = arith.divf %307, %308 : vector<2x32xf32>
    %310 = vector.extract_strided_slice %297 {offsets = [0, 32], sizes = [2, 32], strides = [1, 1]} : vector<2x128xf32> to vector<2x32xf32>
    %311 = arith.negf %310 : vector<2x32xf32>
    %312 = math.exp %311 : vector<2x32xf32>
    %cst_103 = arith.constant 1.000000e+00 : f32
    %313 = vector.broadcast %cst_103 : f32 to vector<2x32xf32>
    %314 = arith.addf %313, %312 : vector<2x32xf32>
    %315 = arith.divf %313, %314 : vector<2x32xf32>
    %316 = vector.extract_strided_slice %297 {offsets = [0, 64], sizes = [2, 32], strides = [1, 1]} : vector<2x128xf32> to vector<2x32xf32>
    %317 = math.tanh %316 : vector<2x32xf32>
    %318 = vector.extract_strided_slice %297 {offsets = [0, 96], sizes = [2, 32], strides = [1, 1]} : vector<2x128xf32> to vector<2x32xf32>
    %319 = arith.negf %318 : vector<2x32xf32>
    %320 = math.exp %319 : vector<2x32xf32>
    %cst_104 = arith.constant 1.000000e+00 : f32
    %321 = vector.broadcast %cst_104 : f32 to vector<2x32xf32>
    %322 = arith.addf %321, %320 : vector<2x32xf32>
    %323 = arith.divf %321, %322 : vector<2x32xf32>
    %324 = arith.mulf %315, %255 : vector<2x32xf32>
    %325 = arith.mulf %309, %317 : vector<2x32xf32>
    %326 = arith.addf %324, %325 : vector<2x32xf32>
    %327 = math.tanh %326 : vector<2x32xf32>
    %328 = arith.mulf %323, %327 : vector<2x32xf32>
    %329 = vector.extract_strided_slice %303 {offsets = [0, 0], sizes = [2, 32], strides = [1, 1]} : vector<2x128xf32> to vector<2x32xf32>
    %330 = arith.negf %329 : vector<2x32xf32>
    %331 = math.exp %330 : vector<2x32xf32>
    %cst_105 = arith.constant 1.000000e+00 : f32
    %332 = vector.broadcast %cst_105 : f32 to vector<2x32xf32>
    %333 = arith.addf %332, %331 : vector<2x32xf32>
    %334 = arith.divf %332, %333 : vector<2x32xf32>
    %335 = vector.extract_strided_slice %303 {offsets = [0, 32], sizes = [2, 32], strides = [1, 1]} : vector<2x128xf32> to vector<2x32xf32>
    %336 = arith.negf %335 : vector<2x32xf32>
    %337 = math.exp %336 : vector<2x32xf32>
    %cst_106 = arith.constant 1.000000e+00 : f32
    %338 = vector.broadcast %cst_106 : f32 to vector<2x32xf32>
    %339 = arith.addf %338, %337 : vector<2x32xf32>
    %340 = arith.divf %338, %339 : vector<2x32xf32>
    %341 = vector.extract_strided_slice %303 {offsets = [0, 64], sizes = [2, 32], strides = [1, 1]} : vector<2x128xf32> to vector<2x32xf32>
    %342 = math.tanh %341 : vector<2x32xf32>
    %343 = vector.extract_strided_slice %303 {offsets = [0, 96], sizes = [2, 32], strides = [1, 1]} : vector<2x128xf32> to vector<2x32xf32>
    %344 = arith.negf %343 : vector<2x32xf32>
    %345 = math.exp %344 : vector<2x32xf32>
    %cst_107 = arith.constant 1.000000e+00 : f32
    %346 = vector.broadcast %cst_107 : f32 to vector<2x32xf32>
    %347 = arith.addf %346, %345 : vector<2x32xf32>
    %348 = arith.divf %346, %347 : vector<2x32xf32>
    %349 = arith.mulf %340, %280 : vector<2x32xf32>
    %350 = arith.mulf %334, %342 : vector<2x32xf32>
    %351 = arith.addf %349, %350 : vector<2x32xf32>
    %352 = math.tanh %351 : vector<2x32xf32>
    %353 = arith.mulf %348, %352 : vector<2x32xf32>
    %354 = arith.index_cast %c4_i32 : i32 to index
    %c0_108 = arith.constant 0 : index
    %c0_109 = arith.constant 0 : index
    %355 = vector.load %arg5[%354, %c0_108, %c0_109] : memref<8x2x32xf32, #tpu.memory_space<vmem>>, vector<1x2x32xf32>
    %356 = vector.shape_cast %355 : vector<1x2x32xf32> to vector<2x32xf32>
    %357 = vector.shape_cast %328 : vector<2x32xf32> to vector<1x2x32xf32>
    tpu.vector_store %arg5[%354, %c0_108, %c0_109], %357 {strides = array<i32>} : memref<8x2x32xf32, #tpu.memory_space<vmem>>, vector<1x2x32xf32>,
    %358 = arith.index_cast %291 : i32 to index
    %c0_110 = arith.constant 0 : index
    %c0_111 = arith.constant 0 : index
    %359 = vector.load %arg6[%358, %c0_110, %c0_111] : memref<8x2x32xf32, #tpu.memory_space<vmem>>, vector<1x2x32xf32>
    %360 = vector.shape_cast %359 : vector<1x2x32xf32> to vector<2x32xf32>
    %361 = vector.shape_cast %353 : vector<2x32xf32> to vector<1x2x32xf32>
    tpu.vector_store %arg6[%358, %c0_110, %c0_111], %361 {strides = array<i32>} : memref<8x2x32xf32, #tpu.memory_space<vmem>>, vector<1x2x32xf32>,
    %c5_i32 = arith.constant 5 : i32
    %c7_i32_112 = arith.constant 7 : i32
    %362 = arith.subi %c7_i32_112, %c5_i32 : i32
    %c0_113 = arith.constant 0 : index
    %c0_114 = arith.constant 0 : index
    %363 = vector.load %arg3[%c0_113, %c0_114] : memref<32x128xf32, #tpu.memory_space<vmem>>, vector<32x128xf32>
    %cst_115 = arith.constant dense<0.000000e+00> : vector<2x128xf32>
    %364 = tpu.matmul %328, %363, %cst_115 {dimension_numbers = #tpu.dot_dimension_numbers<[1], [0], [0], [1], [0, 0, 1, 1], [], []>} : vector<2x32xf32>, vector<32x128xf32>, vector<2x128xf32> -> vector<2x128xf32>
    %365 = arith.index_cast %c5_i32 : i32 to index
    %c0_116 = arith.constant 0 : index
    %c0_117 = arith.constant 0 : index
    %366 = vector.load %arg1[%365, %c0_116, %c0_117] : memref<8x2x128xf32, #tpu.memory_space<vmem>>, vector<1x2x128xf32>
    %367 = vector.shape_cast %366 : vector<1x2x128xf32> to vector<2x128xf32>
    %368 = arith.addf %364, %367 : vector<2x128xf32>
    %c0_118 = arith.constant 0 : index
    %c0_119 = arith.constant 0 : index
    %369 = vector.load %arg4[%c0_118, %c0_119] : memref<32x128xf32, #tpu.memory_space<vmem>>, vector<32x128xf32>
    %cst_120 = arith.constant dense<0.000000e+00> : vector<2x128xf32>
    %370 = tpu.matmul %353, %369, %cst_120 {dimension_numbers = #tpu.dot_dimension_numbers<[1], [0], [0], [1], [0, 0, 1, 1], [], []>} : vector<2x32xf32>, vector<32x128xf32>, vector<2x128xf32> -> vector<2x128xf32>
    %371 = arith.index_cast %362 : i32 to index
    %c0_121 = arith.constant 0 : index
    %c0_122 = arith.constant 0 : index
    %372 = vector.load %arg2[%371, %c0_121, %c0_122] : memref<8x2x128xf32, #tpu.memory_space<vmem>>, vector<1x2x128xf32>
    %373 = vector.shape_cast %372 : vector<1x2x128xf32> to vector<2x128xf32>
    %374 = arith.addf %370, %373 : vector<2x128xf32>
    %375 = vector.extract_strided_slice %368 {offsets = [0, 0], sizes = [2, 32], strides = [1, 1]} : vector<2x128xf32> to vector<2x32xf32>
    %376 = arith.negf %375 : vector<2x32xf32>
    %377 = math.exp %376 : vector<2x32xf32>
    %cst_123 = arith.constant 1.000000e+00 : f32
    %378 = vector.broadcast %cst_123 : f32 to vector<2x32xf32>
    %379 = arith.addf %378, %377 : vector<2x32xf32>
    %380 = arith.divf %378, %379 : vector<2x32xf32>
    %381 = vector.extract_strided_slice %368 {offsets = [0, 32], sizes = [2, 32], strides = [1, 1]} : vector<2x128xf32> to vector<2x32xf32>
    %382 = arith.negf %381 : vector<2x32xf32>
    %383 = math.exp %382 : vector<2x32xf32>
    %cst_124 = arith.constant 1.000000e+00 : f32
    %384 = vector.broadcast %cst_124 : f32 to vector<2x32xf32>
    %385 = arith.addf %384, %383 : vector<2x32xf32>
    %386 = arith.divf %384, %385 : vector<2x32xf32>
    %387 = vector.extract_strided_slice %368 {offsets = [0, 64], sizes = [2, 32], strides = [1, 1]} : vector<2x128xf32> to vector<2x32xf32>
    %388 = math.tanh %387 : vector<2x32xf32>
    %389 = vector.extract_strided_slice %368 {offsets = [0, 96], sizes = [2, 32], strides = [1, 1]} : vector<2x128xf32> to vector<2x32xf32>
    %390 = arith.negf %389 : vector<2x32xf32>
    %391 = math.exp %390 : vector<2x32xf32>
    %cst_125 = arith.constant 1.000000e+00 : f32
    %392 = vector.broadcast %cst_125 : f32 to vector<2x32xf32>
    %393 = arith.addf %392, %391 : vector<2x32xf32>
    %394 = arith.divf %392, %393 : vector<2x32xf32>
    %395 = arith.mulf %386, %326 : vector<2x32xf32>
    %396 = arith.mulf %380, %388 : vector<2x32xf32>
    %397 = arith.addf %395, %396 : vector<2x32xf32>
    %398 = math.tanh %397 : vector<2x32xf32>
    %399 = arith.mulf %394, %398 : vector<2x32xf32>
    %400 = vector.extract_strided_slice %374 {offsets = [0, 0], sizes = [2, 32], strides = [1, 1]} : vector<2x128xf32> to vector<2x32xf32>
    %401 = arith.negf %400 : vector<2x32xf32>
    %402 = math.exp %401 : vector<2x32xf32>
    %cst_126 = arith.constant 1.000000e+00 : f32
    %403 = vector.broadcast %cst_126 : f32 to vector<2x32xf32>
    %404 = arith.addf %403, %402 : vector<2x32xf32>
    %405 = arith.divf %403, %404 : vector<2x32xf32>
    %406 = vector.extract_strided_slice %374 {offsets = [0, 32], sizes = [2, 32], strides = [1, 1]} : vector<2x128xf32> to vector<2x32xf32>
    %407 = arith.negf %406 : vector<2x32xf32>
    %408 = math.exp %407 : vector<2x32xf32>
    %cst_127 = arith.constant 1.000000e+00 : f32
    %409 = vector.broadcast %cst_127 : f32 to vector<2x32xf32>
    %410 = arith.addf %409, %408 : vector<2x32xf32>
    %411 = arith.divf %409, %410 : vector<2x32xf32>
    %412 = vector.extract_strided_slice %374 {offsets = [0, 64], sizes = [2, 32], strides = [1, 1]} : vector<2x128xf32> to vector<2x32xf32>
    %413 = math.tanh %412 : vector<2x32xf32>
    %414 = vector.extract_strided_slice %374 {offsets = [0, 96], sizes = [2, 32], strides = [1, 1]} : vector<2x128xf32> to vector<2x32xf32>
    %415 = arith.negf %414 : vector<2x32xf32>
    %416 = math.exp %415 : vector<2x32xf32>
    %cst_128 = arith.constant 1.000000e+00 : f32
    %417 = vector.broadcast %cst_128 : f32 to vector<2x32xf32>
    %418 = arith.addf %417, %416 : vector<2x32xf32>
    %419 = arith.divf %417, %418 : vector<2x32xf32>
    %420 = arith.mulf %411, %351 : vector<2x32xf32>
    %421 = arith.mulf %405, %413 : vector<2x32xf32>
    %422 = arith.addf %420, %421 : vector<2x32xf32>
    %423 = math.tanh %422 : vector<2x32xf32>
    %424 = arith.mulf %419, %423 : vector<2x32xf32>
    %425 = arith.index_cast %c5_i32 : i32 to index
    %c0_129 = arith.constant 0 : index
    %c0_130 = arith.constant 0 : index
    %426 = vector.load %arg5[%425, %c0_129, %c0_130] : memref<8x2x32xf32, #tpu.memory_space<vmem>>, vector<1x2x32xf32>
    %427 = vector.shape_cast %426 : vector<1x2x32xf32> to vector<2x32xf32>
    %428 = vector.shape_cast %399 : vector<2x32xf32> to vector<1x2x32xf32>
    tpu.vector_store %arg5[%425, %c0_129, %c0_130], %428 {strides = array<i32>} : memref<8x2x32xf32, #tpu.memory_space<vmem>>, vector<1x2x32xf32>,
    %429 = arith.index_cast %362 : i32 to index
    %c0_131 = arith.constant 0 : index
    %c0_132 = arith.constant 0 : index
    %430 = vector.load %arg6[%429, %c0_131, %c0_132] : memref<8x2x32xf32, #tpu.memory_space<vmem>>, vector<1x2x32xf32>
    %431 = vector.shape_cast %430 : vector<1x2x32xf32> to vector<2x32xf32>
    %432 = vector.shape_cast %424 : vector<2x32xf32> to vector<1x2x32xf32>
    tpu.vector_store %arg6[%429, %c0_131, %c0_132], %432 {strides = array<i32>} : memref<8x2x32xf32, #tpu.memory_space<vmem>>, vector<1x2x32xf32>,
    %c6_i32 = arith.constant 6 : i32
    %c7_i32_133 = arith.constant 7 : i32
    %433 = arith.subi %c7_i32_133, %c6_i32 : i32
    %c0_134 = arith.constant 0 : index
    %c0_135 = arith.constant 0 : index
    %434 = vector.load %arg3[%c0_134, %c0_135] : memref<32x128xf32, #tpu.memory_space<vmem>>, vector<32x128xf32>
    %cst_136 = arith.constant dense<0.000000e+00> : vector<2x128xf32>
    %435 = tpu.matmul %399, %434, %cst_136 {dimension_numbers = #tpu.dot_dimension_numbers<[1], [0], [0], [1], [0, 0, 1, 1], [], []>} : vector<2x32xf32>, vector<32x128xf32>, vector<2x128xf32> -> vector<2x128xf32>
    %436 = arith.index_cast %c6_i32 : i32 to index
    %c0_137 = arith.constant 0 : index
    %c0_138 = arith.constant 0 : index
    %437 = vector.load %arg1[%436, %c0_137, %c0_138] : memref<8x2x128xf32, #tpu.memory_space<vmem>>, vector<1x2x128xf32>
    %438 = vector.shape_cast %437 : vector<1x2x128xf32> to vector<2x128xf32>
    %439 = arith.addf %435, %438 : vector<2x128xf32>
    %c0_139 = arith.constant 0 : index
    %c0_140 = arith.constant 0 : index
    %440 = vector.load %arg4[%c0_139, %c0_140] : memref<32x128xf32, #tpu.memory_space<vmem>>, vector<32x128xf32>
    %cst_141 = arith.constant dense<0.000000e+00> : vector<2x128xf32>
    %441 = tpu.matmul %424, %440, %cst_141 {dimension_numbers = #tpu.dot_dimension_numbers<[1], [0], [0], [1], [0, 0, 1, 1], [], []>} : vector<2x32xf32>, vector<32x128xf32>, vector<2x128xf32> -> vector<2x128xf32>
    %442 = arith.index_cast %433 : i32 to index
    %c0_142 = arith.constant 0 : index
    %c0_143 = arith.constant 0 : index
    %443 = vector.load %arg2[%442, %c0_142, %c0_143] : memref<8x2x128xf32, #tpu.memory_space<vmem>>, vector<1x2x128xf32>
    %444 = vector.shape_cast %443 : vector<1x2x128xf32> to vector<2x128xf32>
    %445 = arith.addf %441, %444 : vector<2x128xf32>
    %446 = vector.extract_strided_slice %439 {offsets = [0, 0], sizes = [2, 32], strides = [1, 1]} : vector<2x128xf32> to vector<2x32xf32>
    %447 = arith.negf %446 : vector<2x32xf32>
    %448 = math.exp %447 : vector<2x32xf32>
    %cst_144 = arith.constant 1.000000e+00 : f32
    %449 = vector.broadcast %cst_144 : f32 to vector<2x32xf32>
    %450 = arith.addf %449, %448 : vector<2x32xf32>
    %451 = arith.divf %449, %450 : vector<2x32xf32>
    %452 = vector.extract_strided_slice %439 {offsets = [0, 32], sizes = [2, 32], strides = [1, 1]} : vector<2x128xf32> to vector<2x32xf32>
    %453 = arith.negf %452 : vector<2x32xf32>
    %454 = math.exp %453 : vector<2x32xf32>
    %cst_145 = arith.constant 1.000000e+00 : f32
    %455 = vector.broadcast %cst_145 : f32 to vector<2x32xf32>
    %456 = arith.addf %455, %454 : vector<2x32xf32>
    %457 = arith.divf %455, %456 : vector<2x32xf32>
    %458 = vector.extract_strided_slice %439 {offsets = [0, 64], sizes = [2, 32], strides = [1, 1]} : vector<2x128xf32> to vector<2x32xf32>
    %459 = math.tanh %458 : vector<2x32xf32>
    %460 = vector.extract_strided_slice %439 {offsets = [0, 96], sizes = [2, 32], strides = [1, 1]} : vector<2x128xf32> to vector<2x32xf32>
    %461 = arith.negf %460 : vector<2x32xf32>
    %462 = math.exp %461 : vector<2x32xf32>
    %cst_146 = arith.constant 1.000000e+00 : f32
    %463 = vector.broadcast %cst_146 : f32 to vector<2x32xf32>
    %464 = arith.addf %463, %462 : vector<2x32xf32>
    %465 = arith.divf %463, %464 : vector<2x32xf32>
    %466 = arith.mulf %457, %397 : vector<2x32xf32>
    %467 = arith.mulf %451, %459 : vector<2x32xf32>
    %468 = arith.addf %466, %467 : vector<2x32xf32>
    %469 = math.tanh %468 : vector<2x32xf32>
    %470 = arith.mulf %465, %469 : vector<2x32xf32>
    %471 = vector.extract_strided_slice %445 {offsets = [0, 0], sizes = [2, 32], strides = [1, 1]} : vector<2x128xf32> to vector<2x32xf32>
    %472 = arith.negf %471 : vector<2x32xf32>
    %473 = math.exp %472 : vector<2x32xf32>
    %cst_147 = arith.constant 1.000000e+00 : f32
    %474 = vector.broadcast %cst_147 : f32 to vector<2x32xf32>
    %475 = arith.addf %474, %473 : vector<2x32xf32>
    %476 = arith.divf %474, %475 : vector<2x32xf32>
    %477 = vector.extract_strided_slice %445 {offsets = [0, 32], sizes = [2, 32], strides = [1, 1]} : vector<2x128xf32> to vector<2x32xf32>
    %478 = arith.negf %477 : vector<2x32xf32>
    %479 = math.exp %478 : vector<2x32xf32>
    %cst_148 = arith.constant 1.000000e+00 : f32
    %480 = vector.broadcast %cst_148 : f32 to vector<2x32xf32>
    %481 = arith.addf %480, %479 : vector<2x32xf32>
    %482 = arith.divf %480, %481 : vector<2x32xf32>
    %483 = vector.extract_strided_slice %445 {offsets = [0, 64], sizes = [2, 32], strides = [1, 1]} : vector<2x128xf32> to vector<2x32xf32>
    %484 = math.tanh %483 : vector<2x32xf32>
    %485 = vector.extract_strided_slice %445 {offsets = [0, 96], sizes = [2, 32], strides = [1, 1]} : vector<2x128xf32> to vector<2x32xf32>
    %486 = arith.negf %485 : vector<2x32xf32>
    %487 = math.exp %486 : vector<2x32xf32>
    %cst_149 = arith.constant 1.000000e+00 : f32
    %488 = vector.broadcast %cst_149 : f32 to vector<2x32xf32>
    %489 = arith.addf %488, %487 : vector<2x32xf32>
    %490 = arith.divf %488, %489 : vector<2x32xf32>
    %491 = arith.mulf %482, %422 : vector<2x32xf32>
    %492 = arith.mulf %476, %484 : vector<2x32xf32>
    %493 = arith.addf %491, %492 : vector<2x32xf32>
    %494 = math.tanh %493 : vector<2x32xf32>
    %495 = arith.mulf %490, %494 : vector<2x32xf32>
    %496 = arith.index_cast %c6_i32 : i32 to index
    %c0_150 = arith.constant 0 : index
    %c0_151 = arith.constant 0 : index
    %497 = vector.load %arg5[%496, %c0_150, %c0_151] : memref<8x2x32xf32, #tpu.memory_space<vmem>>, vector<1x2x32xf32>
    %498 = vector.shape_cast %497 : vector<1x2x32xf32> to vector<2x32xf32>
    %499 = vector.shape_cast %470 : vector<2x32xf32> to vector<1x2x32xf32>
    tpu.vector_store %arg5[%496, %c0_150, %c0_151], %499 {strides = array<i32>} : memref<8x2x32xf32, #tpu.memory_space<vmem>>, vector<1x2x32xf32>,
    %500 = arith.index_cast %433 : i32 to index
    %c0_152 = arith.constant 0 : index
    %c0_153 = arith.constant 0 : index
    %501 = vector.load %arg6[%500, %c0_152, %c0_153] : memref<8x2x32xf32, #tpu.memory_space<vmem>>, vector<1x2x32xf32>
    %502 = vector.shape_cast %501 : vector<1x2x32xf32> to vector<2x32xf32>
    %503 = vector.shape_cast %495 : vector<2x32xf32> to vector<1x2x32xf32>
    tpu.vector_store %arg6[%500, %c0_152, %c0_153], %503 {strides = array<i32>} : memref<8x2x32xf32, #tpu.memory_space<vmem>>, vector<1x2x32xf32>,
    %c7_i32_154 = arith.constant 7 : i32
    %c7_i32_155 = arith.constant 7 : i32
    %504 = arith.subi %c7_i32_155, %c7_i32_154 : i32
    %c0_156 = arith.constant 0 : index
    %c0_157 = arith.constant 0 : index
    %505 = vector.load %arg3[%c0_156, %c0_157] : memref<32x128xf32, #tpu.memory_space<vmem>>, vector<32x128xf32>
    %cst_158 = arith.constant dense<0.000000e+00> : vector<2x128xf32>
    %506 = tpu.matmul %470, %505, %cst_158 {dimension_numbers = #tpu.dot_dimension_numbers<[1], [0], [0], [1], [0, 0, 1, 1], [], []>} : vector<2x32xf32>, vector<32x128xf32>, vector<2x128xf32> -> vector<2x128xf32>
    %507 = arith.index_cast %c7_i32_154 : i32 to index
    %c0_159 = arith.constant 0 : index
    %c0_160 = arith.constant 0 : index
    %508 = vector.load %arg1[%507, %c0_159, %c0_160] : memref<8x2x128xf32, #tpu.memory_space<vmem>>, vector<1x2x128xf32>
    %509 = vector.shape_cast %508 : vector<1x2x128xf32> to vector<2x128xf32>
    %510 = arith.addf %506, %509 : vector<2x128xf32>
    %c0_161 = arith.constant 0 : index
    %c0_162 = arith.constant 0 : index
    %511 = vector.load %arg4[%c0_161, %c0_162] : memref<32x128xf32, #tpu.memory_space<vmem>>, vector<32x128xf32>
    %cst_163 = arith.constant dense<0.000000e+00> : vector<2x128xf32>
    %512 = tpu.matmul %495, %511, %cst_163 {dimension_numbers = #tpu.dot_dimension_numbers<[1], [0], [0], [1], [0, 0, 1, 1], [], []>} : vector<2x32xf32>, vector<32x128xf32>, vector<2x128xf32> -> vector<2x128xf32>
    %513 = arith.index_cast %504 : i32 to index
    %c0_164 = arith.constant 0 : index
    %c0_165 = arith.constant 0 : index
    %514 = vector.load %arg2[%513, %c0_164, %c0_165] : memref<8x2x128xf32, #tpu.memory_space<vmem>>, vector<1x2x128xf32>
    %515 = vector.shape_cast %514 : vector<1x2x128xf32> to vector<2x128xf32>
    %516 = arith.addf %512, %515 : vector<2x128xf32>
    %517 = vector.extract_strided_slice %510 {offsets = [0, 0], sizes = [2, 32], strides = [1, 1]} : vector<2x128xf32> to vector<2x32xf32>
    %518 = arith.negf %517 : vector<2x32xf32>
    %519 = math.exp %518 : vector<2x32xf32>
    %cst_166 = arith.constant 1.000000e+00 : f32
    %520 = vector.broadcast %cst_166 : f32 to vector<2x32xf32>
    %521 = arith.addf %520, %519 : vector<2x32xf32>
    %522 = arith.divf %520, %521 : vector<2x32xf32>
    %523 = vector.extract_strided_slice %510 {offsets = [0, 32], sizes = [2, 32], strides = [1, 1]} : vector<2x128xf32> to vector<2x32xf32>
    %524 = arith.negf %523 : vector<2x32xf32>
    %525 = math.exp %524 : vector<2x32xf32>
    %cst_167 = arith.constant 1.000000e+00 : f32
    %526 = vector.broadcast %cst_167 : f32 to vector<2x32xf32>
    %527 = arith.addf %526, %525 : vector<2x32xf32>
    %528 = arith.divf %526, %527 : vector<2x32xf32>
    %529 = vector.extract_strided_slice %510 {offsets = [0, 64], sizes = [2, 32], strides = [1, 1]} : vector<2x128xf32> to vector<2x32xf32>
    %530 = math.tanh %529 : vector<2x32xf32>
    %531 = vector.extract_strided_slice %510 {offsets = [0, 96], sizes = [2, 32], strides = [1, 1]} : vector<2x128xf32> to vector<2x32xf32>
    %532 = arith.negf %531 : vector<2x32xf32>
    %533 = math.exp %532 : vector<2x32xf32>
    %cst_168 = arith.constant 1.000000e+00 : f32
    %534 = vector.broadcast %cst_168 : f32 to vector<2x32xf32>
    %535 = arith.addf %534, %533 : vector<2x32xf32>
    %536 = arith.divf %534, %535 : vector<2x32xf32>
    %537 = arith.mulf %528, %468 : vector<2x32xf32>
    %538 = arith.mulf %522, %530 : vector<2x32xf32>
    %539 = arith.addf %537, %538 : vector<2x32xf32>
    %540 = math.tanh %539 : vector<2x32xf32>
    %541 = arith.mulf %536, %540 : vector<2x32xf32>
    %542 = vector.extract_strided_slice %516 {offsets = [0, 0], sizes = [2, 32], strides = [1, 1]} : vector<2x128xf32> to vector<2x32xf32>
    %543 = arith.negf %542 : vector<2x32xf32>
    %544 = math.exp %543 : vector<2x32xf32>
    %cst_169 = arith.constant 1.000000e+00 : f32
    %545 = vector.broadcast %cst_169 : f32 to vector<2x32xf32>
    %546 = arith.addf %545, %544 : vector<2x32xf32>
    %547 = arith.divf %545, %546 : vector<2x32xf32>
    %548 = vector.extract_strided_slice %516 {offsets = [0, 32], sizes = [2, 32], strides = [1, 1]} : vector<2x128xf32> to vector<2x32xf32>
    %549 = arith.negf %548 : vector<2x32xf32>
    %550 = math.exp %549 : vector<2x32xf32>
    %cst_170 = arith.constant 1.000000e+00 : f32
    %551 = vector.broadcast %cst_170 : f32 to vector<2x32xf32>
    %552 = arith.addf %551, %550 : vector<2x32xf32>
    %553 = arith.divf %551, %552 : vector<2x32xf32>
    %554 = vector.extract_strided_slice %516 {offsets = [0, 64], sizes = [2, 32], strides = [1, 1]} : vector<2x128xf32> to vector<2x32xf32>
    %555 = math.tanh %554 : vector<2x32xf32>
    %556 = vector.extract_strided_slice %516 {offsets = [0, 96], sizes = [2, 32], strides = [1, 1]} : vector<2x128xf32> to vector<2x32xf32>
    %557 = arith.negf %556 : vector<2x32xf32>
    %558 = math.exp %557 : vector<2x32xf32>
    %cst_171 = arith.constant 1.000000e+00 : f32
    %559 = vector.broadcast %cst_171 : f32 to vector<2x32xf32>
    %560 = arith.addf %559, %558 : vector<2x32xf32>
    %561 = arith.divf %559, %560 : vector<2x32xf32>
    %562 = arith.mulf %553, %493 : vector<2x32xf32>
    %563 = arith.mulf %547, %555 : vector<2x32xf32>
    %564 = arith.addf %562, %563 : vector<2x32xf32>
    %565 = math.tanh %564 : vector<2x32xf32>
    %566 = arith.mulf %561, %565 : vector<2x32xf32>
    %567 = arith.index_cast %c7_i32_154 : i32 to index
    %c0_172 = arith.constant 0 : index
    %c0_173 = arith.constant 0 : index
    %568 = vector.load %arg5[%567, %c0_172, %c0_173] : memref<8x2x32xf32, #tpu.memory_space<vmem>>, vector<1x2x32xf32>
    %569 = vector.shape_cast %568 : vector<1x2x32xf32> to vector<2x32xf32>
    %570 = vector.shape_cast %541 : vector<2x32xf32> to vector<1x2x32xf32>
    tpu.vector_store %arg5[%567, %c0_172, %c0_173], %570 {strides = array<i32>} : memref<8x2x32xf32, #tpu.memory_space<vmem>>, vector<1x2x32xf32>,
    %571 = arith.index_cast %504 : i32 to index
    %c0_174 = arith.constant 0 : index
    %c0_175 = arith.constant 0 : index
    %572 = vector.load %arg6[%571, %c0_174, %c0_175] : memref<8x2x32xf32, #tpu.memory_space<vmem>>, vector<1x2x32xf32>
    %573 = vector.shape_cast %572 : vector<1x2x32xf32> to vector<2x32xf32>
    %574 = vector.shape_cast %566 : vector<2x32xf32> to vector<1x2x32xf32>
    tpu.vector_store %arg6[%571, %c0_174, %c0_175], %574 {strides = array<i32>} : memref<8x2x32xf32, #tpu.memory_space<vmem>>, vector<1x2x32xf32>,
    %c8_i32 = arith.constant 8 : i32
    %c0_176 = arith.constant 0 : index
    %c0_177 = arith.constant 0 : index
    %575 = vector.load %arg7[%c0_176, %c0_177] : memref<2x32xf32, #tpu.memory_space<vmem>>, vector<2x32xf32>
    tpu.vector_store %arg7[%c0_176, %c0_177], %541 {strides = array<i32>} : memref<2x32xf32, #tpu.memory_space<vmem>>, vector<2x32xf32>,
    %c0_178 = arith.constant 0 : index
    %c0_179 = arith.constant 0 : index
    %576 = vector.load %arg8[%c0_178, %c0_179] : memref<2x32xf32, #tpu.memory_space<vmem>>, vector<2x32xf32>
    tpu.vector_store %arg8[%c0_178, %c0_179], %539 {strides = array<i32>} : memref<2x32xf32, #tpu.memory_space<vmem>>, vector<2x32xf32>,
    %c0_180 = arith.constant 0 : index
    %c0_181 = arith.constant 0 : index
    %577 = vector.load %arg9[%c0_180, %c0_181] : memref<2x32xf32, #tpu.memory_space<vmem>>, vector<2x32xf32>
    tpu.vector_store %arg9[%c0_180, %c0_181], %566 {strides = array<i32>} : memref<2x32xf32, #tpu.memory_space<vmem>>, vector<2x32xf32>,
    %c0_182 = arith.constant 0 : index
    %c0_183 = arith.constant 0 : index
    %578 = vector.load %arg10[%c0_182, %c0_183] : memref<2x32xf32, #tpu.memory_space<vmem>>, vector<2x32xf32>
    tpu.vector_store %arg10[%c0_182, %c0_183], %564 {strides = array<i32>} : memref<2x32xf32, #tpu.memory_space<vmem>>, vector<2x32xf32>,
    return
  }
  func.func @transform_0(%arg0: i32) -> (i32, i32, i32) {
    %c0_i32 = arith.constant 0 : i32
    %c0_i32_0 = arith.constant 0 : i32
    %c0_i32_1 = arith.constant 0 : i32
    return %arg0, %c0_i32, %c0_i32_0 : i32, i32, i32
  }
  func.func @transform_1(%arg0: i32) -> (i32, i32, i32) {
    %c0_i32 = arith.constant 0 : i32
    %0 = arith.subi %c0_i32, %arg0 : i32
    %c0_i32_0 = arith.constant 0 : i32
    %c0_i32_1 = arith.constant 0 : i32
    %c0_i32_2 = arith.constant 0 : i32
    return %0, %c0_i32_0, %c0_i32_1 : i32, i32, i32
  }
  func.func @transform_2(%arg0: i32) -> (i32, i32) {
    %c0_i32 = arith.constant 0 : i32
    %c0_i32_0 = arith.constant 0 : i32
    %c0_i32_1 = arith.constant 0 : i32
    return %c0_i32, %c0_i32_0 : i32, i32
  }
  func.func @transform_3(%arg0: i32) -> (i32, i32) {
    %c0_i32 = arith.constant 0 : i32
    %c0_i32_0 = arith.constant 0 : i32
    %c0_i32_1 = arith.constant 0 : i32
    return %c0_i32, %c0_i32_0 : i32, i32
  }
  func.func @transform_4(%arg0: i32) -> (i32, i32, i32) {
    %c0_i32 = arith.constant 0 : i32
    %c0_i32_0 = arith.constant 0 : i32
    %c0_i32_1 = arith.constant 0 : i32
    return %arg0, %c0_i32, %c0_i32_0 : i32, i32, i32
  }
  func.func @transform_5(%arg0: i32) -> (i32, i32, i32) {
    %c0_i32 = arith.constant 0 : i32
    %0 = arith.subi %c0_i32, %arg0 : i32
    %c0_i32_0 = arith.constant 0 : i32
    %c0_i32_1 = arith.constant 0 : i32
    %c0_i32_2 = arith.constant 0 : i32
    return %0, %c0_i32_0, %c0_i32_1 : i32, i32, i32
  }
}

module attributes {stable_mosaic.version = 11 : i64} {
  func.func @_proj_hidden_kernel(%arg0: i32, %arg1: memref<16x32xf32, #tpu.memory_space<vmem>>, %arg2: memref<16x32xf32, #tpu.memory_space<vmem>>, %arg3: memref<32x256xf32, #tpu.memory_space<vmem>>, %arg4: memref<32x256xf32, #tpu.memory_space<vmem>>, %arg5: memref<1x256xf32, #tpu.memory_space<vmem>>, %arg6: memref<16x128xf32, #tpu.memory_space<vmem>>, %arg7: memref<16x128xf32, #tpu.memory_space<vmem>>) attributes {dimension_semantics = [#tpu.dimension_semantics<parallel>], iteration_bounds = array<i64: 1>, scalar_prefetch = 0 : i64, scratch_operands = 0 : i64, tpu.core_type = #tpu.core_type<tc>, window_params = [{transform_indices = @transform_0, window_bounds = array<i64: 16, 32>}, {transform_indices = @transform_1, window_bounds = array<i64: 16, 32>}, {pipeline_mode = #tpu.pipeline_mode<synchronous>, transform_indices = @transform_2, window_bounds = array<i64: 32, 256>}, {pipeline_mode = #tpu.pipeline_mode<synchronous>, transform_indices = @transform_3, window_bounds = array<i64: 32, 256>}, {pipeline_mode = #tpu.pipeline_mode<synchronous>, transform_indices = @transform_4, window_bounds = array<i64: 1, 256>}, {transform_indices = @transform_5, window_bounds = array<i64: 16, 128>}, {transform_indices = @transform_6, window_bounds = array<i64: 16, 128>}]} {
    %c0 = arith.constant 0 : index
    %c0_0 = arith.constant 0 : index
    %0 = vector.load %arg1[%c0, %c0_0] : memref<16x32xf32, #tpu.memory_space<vmem>>, vector<16x32xf32>
    %c0_1 = arith.constant 0 : index
    %c0_2 = arith.constant 0 : index
    %1 = vector.load %arg3[%c0_1, %c0_2] : memref<32x256xf32, #tpu.memory_space<vmem>>, vector<32x256xf32>
    %cst = arith.constant dense<0.000000e+00> : vector<16x256xf32>
    %2 = tpu.matmul %0, %1, %cst {dimension_numbers = #tpu.dot_dimension_numbers<[1], [0], [0], [1], [0, 0, 1, 1], [], []>} : vector<16x32xf32>, vector<32x256xf32>, vector<16x256xf32> -> vector<16x256xf32>
    %c0_3 = arith.constant 0 : index
    %c0_4 = arith.constant 0 : index
    %3 = vector.load %arg2[%c0_3, %c0_4] : memref<16x32xf32, #tpu.memory_space<vmem>>, vector<16x32xf32>
    %c0_5 = arith.constant 0 : index
    %c0_6 = arith.constant 0 : index
    %4 = vector.load %arg4[%c0_5, %c0_6] : memref<32x256xf32, #tpu.memory_space<vmem>>, vector<32x256xf32>
    %cst_7 = arith.constant dense<0.000000e+00> : vector<16x256xf32>
    %5 = tpu.matmul %3, %4, %cst_7 {dimension_numbers = #tpu.dot_dimension_numbers<[1], [0], [0], [1], [0, 0, 1, 1], [], []>} : vector<16x32xf32>, vector<32x256xf32>, vector<16x256xf32> -> vector<16x256xf32>
    %6 = arith.addf %2, %5 : vector<16x256xf32>
    %c0_8 = arith.constant 0 : index
    %c0_9 = arith.constant 0 : index
    %7 = vector.load %arg5[%c0_8, %c0_9] : memref<1x256xf32, #tpu.memory_space<vmem>>, vector<1x256xf32>
    %8 = vector.broadcast %7 : vector<1x256xf32> to vector<16x256xf32>
    %9 = arith.addf %6, %8 : vector<16x256xf32>
    %10 = vector.extract_strided_slice %9 {offsets = [0, 0], sizes = [16, 128], strides = [1, 1]} : vector<16x256xf32> to vector<16x128xf32>
    %c0_10 = arith.constant 0 : index
    %c0_11 = arith.constant 0 : index
    %11 = vector.load %arg6[%c0_10, %c0_11] : memref<16x128xf32, #tpu.memory_space<vmem>>, vector<16x128xf32>
    tpu.vector_store %arg6[%c0_10, %c0_11], %10 {strides = array<i32>} : memref<16x128xf32, #tpu.memory_space<vmem>>, vector<16x128xf32>,
    %12 = vector.extract_strided_slice %9 {offsets = [0, 128], sizes = [16, 128], strides = [1, 1]} : vector<16x256xf32> to vector<16x128xf32>
    %c0_12 = arith.constant 0 : index
    %c0_13 = arith.constant 0 : index
    %13 = vector.load %arg7[%c0_12, %c0_13] : memref<16x128xf32, #tpu.memory_space<vmem>>, vector<16x128xf32>
    tpu.vector_store %arg7[%c0_12, %c0_13], %12 {strides = array<i32>} : memref<16x128xf32, #tpu.memory_space<vmem>>, vector<16x128xf32>,
    return
  }
  func.func @transform_0(%arg0: i32) -> (i32, i32) {
    %c0_i32 = arith.constant 0 : i32
    %c0_i32_0 = arith.constant 0 : i32
    return %arg0, %c0_i32 : i32, i32
  }
  func.func @transform_1(%arg0: i32) -> (i32, i32) {
    %c0_i32 = arith.constant 0 : i32
    %c0_i32_0 = arith.constant 0 : i32
    return %arg0, %c0_i32 : i32, i32
  }
  func.func @transform_2(%arg0: i32) -> (i32, i32) {
    %c0_i32 = arith.constant 0 : i32
    %c0_i32_0 = arith.constant 0 : i32
    %c0_i32_1 = arith.constant 0 : i32
    return %c0_i32, %c0_i32_0 : i32, i32
  }
  func.func @transform_3(%arg0: i32) -> (i32, i32) {
    %c0_i32 = arith.constant 0 : i32
    %c0_i32_0 = arith.constant 0 : i32
    %c0_i32_1 = arith.constant 0 : i32
    return %c0_i32, %c0_i32_0 : i32, i32
  }
  func.func @transform_4(%arg0: i32) -> (i32, i32) {
    %c0_i32 = arith.constant 0 : i32
    %c0_i32_0 = arith.constant 0 : i32
    %c0_i32_1 = arith.constant 0 : i32
    return %c0_i32, %c0_i32_0 : i32, i32
  }
  func.func @transform_5(%arg0: i32) -> (i32, i32) {
    %c0_i32 = arith.constant 0 : i32
    %c0_i32_0 = arith.constant 0 : i32
    return %arg0, %c0_i32 : i32, i32
  }
  func.func @transform_6(%arg0: i32) -> (i32, i32) {
    %c0_i32 = arith.constant 0 : i32
    %c0_i32_0 = arith.constant 0 : i32
    return %arg0, %c0_i32 : i32, i32
  }
}

module attributes {stable_mosaic.version = 11 : i64} {
  func.func @_proj_embed_kernel(%arg0: i32, %arg1: memref<16x32xf32, #tpu.memory_space<vmem>>, %arg2: memref<32x256xf32, #tpu.memory_space<vmem>>, %arg3: memref<1x256xf32, #tpu.memory_space<vmem>>, %arg4: memref<16x128xf32, #tpu.memory_space<vmem>>, %arg5: memref<16x128xf32, #tpu.memory_space<vmem>>) attributes {dimension_semantics = [#tpu.dimension_semantics<parallel>], iteration_bounds = array<i64: 1>, scalar_prefetch = 0 : i64, scratch_operands = 0 : i64, tpu.core_type = #tpu.core_type<tc>, window_params = [{transform_indices = @transform_0, window_bounds = array<i64: 16, 32>}, {pipeline_mode = #tpu.pipeline_mode<synchronous>, transform_indices = @transform_1, window_bounds = array<i64: 32, 256>}, {pipeline_mode = #tpu.pipeline_mode<synchronous>, transform_indices = @transform_2, window_bounds = array<i64: 1, 256>}, {transform_indices = @transform_3, window_bounds = array<i64: 16, 128>}, {transform_indices = @transform_4, window_bounds = array<i64: 16, 128>}]} {
    %c0 = arith.constant 0 : index
    %c0_0 = arith.constant 0 : index
    %0 = vector.load %arg1[%c0, %c0_0] : memref<16x32xf32, #tpu.memory_space<vmem>>, vector<16x32xf32>
    %c0_1 = arith.constant 0 : index
    %c0_2 = arith.constant 0 : index
    %1 = vector.load %arg2[%c0_1, %c0_2] : memref<32x256xf32, #tpu.memory_space<vmem>>, vector<32x256xf32>
    %cst = arith.constant dense<0.000000e+00> : vector<16x256xf32>
    %2 = tpu.matmul %0, %1, %cst {dimension_numbers = #tpu.dot_dimension_numbers<[1], [0], [0], [1], [0, 0, 1, 1], [], []>} : vector<16x32xf32>, vector<32x256xf32>, vector<16x256xf32> -> vector<16x256xf32>
    %c0_3 = arith.constant 0 : index
    %c0_4 = arith.constant 0 : index
    %3 = vector.load %arg3[%c0_3, %c0_4] : memref<1x256xf32, #tpu.memory_space<vmem>>, vector<1x256xf32>
    %4 = vector.broadcast %3 : vector<1x256xf32> to vector<16x256xf32>
    %5 = arith.addf %2, %4 : vector<16x256xf32>
    %6 = vector.extract_strided_slice %5 {offsets = [0, 0], sizes = [16, 128], strides = [1, 1]} : vector<16x256xf32> to vector<16x128xf32>
    %c0_5 = arith.constant 0 : index
    %c0_6 = arith.constant 0 : index
    %7 = vector.load %arg4[%c0_5, %c0_6] : memref<16x128xf32, #tpu.memory_space<vmem>>, vector<16x128xf32>
    tpu.vector_store %arg4[%c0_5, %c0_6], %6 {strides = array<i32>} : memref<16x128xf32, #tpu.memory_space<vmem>>, vector<16x128xf32>,
    %8 = vector.extract_strided_slice %5 {offsets = [0, 128], sizes = [16, 128], strides = [1, 1]} : vector<16x256xf32> to vector<16x128xf32>
    %c0_7 = arith.constant 0 : index
    %c0_8 = arith.constant 0 : index
    %9 = vector.load %arg5[%c0_7, %c0_8] : memref<16x128xf32, #tpu.memory_space<vmem>>, vector<16x128xf32>
    tpu.vector_store %arg5[%c0_7, %c0_8], %8 {strides = array<i32>} : memref<16x128xf32, #tpu.memory_space<vmem>>, vector<16x128xf32>,
    return
  }
  func.func @transform_0(%arg0: i32) -> (i32, i32) {
    %c0_i32 = arith.constant 0 : i32
    %c0_i32_0 = arith.constant 0 : i32
    return %arg0, %c0_i32 : i32, i32
  }
  func.func @transform_1(%arg0: i32) -> (i32, i32) {
    %c0_i32 = arith.constant 0 : i32
    %c0_i32_0 = arith.constant 0 : i32
    %c0_i32_1 = arith.constant 0 : i32
    return %c0_i32, %c0_i32_0 : i32, i32
  }
  func.func @transform_2(%arg0: i32) -> (i32, i32) {
    %c0_i32 = arith.constant 0 : i32
    %c0_i32_0 = arith.constant 0 : i32
    %c0_i32_1 = arith.constant 0 : i32
    return %c0_i32, %c0_i32_0 : i32, i32
  }
  func.func @transform_3(%arg0: i32) -> (i32, i32) {
    %c0_i32 = arith.constant 0 : i32
    %c0_i32_0 = arith.constant 0 : i32
    return %arg0, %c0_i32 : i32, i32
  }
  func.func @transform_4(%arg0: i32) -> (i32, i32) {
    %c0_i32 = arith.constant 0 : i32
    %c0_i32_0 = arith.constant 0 : i32
    return %arg0, %c0_i32 : i32, i32
  }
}

module attributes {stable_mosaic.version = 11 : i64} {
  func.func @_bilstm_rec_last_kernel(%arg0: i32, %arg1: memref<8x2x128xf32, #tpu.memory_space<vmem>>, %arg2: memref<8x2x128xf32, #tpu.memory_space<vmem>>, %arg3: memref<32x128xf32, #tpu.memory_space<vmem>>, %arg4: memref<32x128xf32, #tpu.memory_space<vmem>>, %arg5: memref<32x4xf32, #tpu.memory_space<vmem>>, %arg6: memref<32x4xf32, #tpu.memory_space<vmem>>, %arg7: memref<1x4xf32, #tpu.memory_space<vmem>>, %arg8: memref<2x4xf32, #tpu.memory_space<vmem>>, %arg9: memref<2x32xf32, #tpu.memory_space<vmem>>, %arg10: memref<2x32xf32, #tpu.memory_space<vmem>>, %arg11: memref<2x32xf32, #tpu.memory_space<vmem>>, %arg12: memref<2x32xf32, #tpu.memory_space<vmem>>, %arg13: memref<2x32xf32, #tpu.memory_space<vmem>>) attributes {dimension_semantics = [#tpu.dimension_semantics<arbitrary>], iteration_bounds = array<i64: 1>, scalar_prefetch = 0 : i64, scratch_operands = 5 : i64, tpu.core_type = #tpu.core_type<tc>, window_params = [{transform_indices = @transform_0, window_bounds = array<i64: 8, 2, 128>}, {transform_indices = @transform_1, window_bounds = array<i64: 8, 2, 128>}, {pipeline_mode = #tpu.pipeline_mode<synchronous>, transform_indices = @transform_2, window_bounds = array<i64: 32, 128>}, {pipeline_mode = #tpu.pipeline_mode<synchronous>, transform_indices = @transform_3, window_bounds = array<i64: 32, 128>}, {pipeline_mode = #tpu.pipeline_mode<synchronous>, transform_indices = @transform_4, window_bounds = array<i64: 32, 4>}, {pipeline_mode = #tpu.pipeline_mode<synchronous>, transform_indices = @transform_5, window_bounds = array<i64: 32, 4>}, {pipeline_mode = #tpu.pipeline_mode<synchronous>, transform_indices = @transform_6, window_bounds = array<i64: 1, 4>}, {pipeline_mode = #tpu.pipeline_mode<synchronous>, transform_indices = @transform_7, window_bounds = array<i64: 2, 4>}]} {
    %c0_i32 = arith.constant 0 : i32
    %0 = arith.cmpi eq, %arg0, %c0_i32 : i32
    %1 = arith.extui %0 : i1 to i32
    %c0_i32_0 = arith.constant 0 : i32
    %2 = arith.cmpi ne, %1, %c0_i32_0 : i32
    scf.if %2 {
      %cst_167 = arith.constant 0.000000e+00 : f32
      %545 = vector.broadcast %cst_167 : f32 to vector<2x32xf32>
      %c0_168 = arith.constant 0 : index
      %c0_169 = arith.constant 0 : index
      %546 = vector.load %arg9[%c0_168, %c0_169] : memref<2x32xf32, #tpu.memory_space<vmem>>, vector<2x32xf32>
      tpu.vector_store %arg9[%c0_168, %c0_169], %545 {strides = array<i32>} : memref<2x32xf32, #tpu.memory_space<vmem>>, vector<2x32xf32>,
      %cst_170 = arith.constant 0.000000e+00 : f32
      %547 = vector.broadcast %cst_170 : f32 to vector<2x32xf32>
      %c0_171 = arith.constant 0 : index
      %c0_172 = arith.constant 0 : index
      %548 = vector.load %arg10[%c0_171, %c0_172] : memref<2x32xf32, #tpu.memory_space<vmem>>, vector<2x32xf32>
      tpu.vector_store %arg10[%c0_171, %c0_172], %547 {strides = array<i32>} : memref<2x32xf32, #tpu.memory_space<vmem>>, vector<2x32xf32>,
      %cst_173 = arith.constant 0.000000e+00 : f32
      %549 = vector.broadcast %cst_173 : f32 to vector<2x32xf32>
      %c0_174 = arith.constant 0 : index
      %c0_175 = arith.constant 0 : index
      %550 = vector.load %arg11[%c0_174, %c0_175] : memref<2x32xf32, #tpu.memory_space<vmem>>, vector<2x32xf32>
      tpu.vector_store %arg11[%c0_174, %c0_175], %549 {strides = array<i32>} : memref<2x32xf32, #tpu.memory_space<vmem>>, vector<2x32xf32>,
      %cst_176 = arith.constant 0.000000e+00 : f32
      %551 = vector.broadcast %cst_176 : f32 to vector<2x32xf32>
      %c0_177 = arith.constant 0 : index
      %c0_178 = arith.constant 0 : index
      %552 = vector.load %arg12[%c0_177, %c0_178] : memref<2x32xf32, #tpu.memory_space<vmem>>, vector<2x32xf32>
      tpu.vector_store %arg12[%c0_177, %c0_178], %551 {strides = array<i32>} : memref<2x32xf32, #tpu.memory_space<vmem>>, vector<2x32xf32>,
      %cst_179 = arith.constant 0.000000e+00 : f32
      %553 = vector.broadcast %cst_179 : f32 to vector<2x32xf32>
      %c0_180 = arith.constant 0 : index
      %c0_181 = arith.constant 0 : index
      %554 = vector.load %arg13[%c0_180, %c0_181] : memref<2x32xf32, #tpu.memory_space<vmem>>, vector<2x32xf32>
      tpu.vector_store %arg13[%c0_180, %c0_181], %553 {strides = array<i32>} : memref<2x32xf32, #tpu.memory_space<vmem>>, vector<2x32xf32>,
    } else {
    }
    %c0_i32_1 = arith.constant 0 : i32
    %3 = arith.cmpi eq, %arg0, %c0_i32_1 : i32
    %c0 = arith.constant 0 : index
    %c0_2 = arith.constant 0 : index
    %4 = vector.load %arg9[%c0, %c0_2] : memref<2x32xf32, #tpu.memory_space<vmem>>, vector<2x32xf32>
    %c0_3 = arith.constant 0 : index
    %c0_4 = arith.constant 0 : index
    %5 = vector.load %arg10[%c0_3, %c0_4] : memref<2x32xf32, #tpu.memory_space<vmem>>, vector<2x32xf32>
    %c0_5 = arith.constant 0 : index
    %c0_6 = arith.constant 0 : index
    %6 = vector.load %arg11[%c0_5, %c0_6] : memref<2x32xf32, #tpu.memory_space<vmem>>, vector<2x32xf32>
    %c0_7 = arith.constant 0 : index
    %c0_8 = arith.constant 0 : index
    %7 = vector.load %arg12[%c0_7, %c0_8] : memref<2x32xf32, #tpu.memory_space<vmem>>, vector<2x32xf32>
    %c0_9 = arith.constant 0 : index
    %c0_10 = arith.constant 0 : index
    %8 = vector.load %arg13[%c0_9, %c0_10] : memref<2x32xf32, #tpu.memory_space<vmem>>, vector<2x32xf32>
    %c0_i32_11 = arith.constant 0 : i32
    %c7_i32 = arith.constant 7 : i32
    %9 = arith.subi %c7_i32, %c0_i32_11 : i32
    %c0_12 = arith.constant 0 : index
    %c0_13 = arith.constant 0 : index
    %10 = vector.load %arg3[%c0_12, %c0_13] : memref<32x128xf32, #tpu.memory_space<vmem>>, vector<32x128xf32>
    %cst = arith.constant dense<0.000000e+00> : vector<2x128xf32>
    %11 = tpu.matmul %4, %10, %cst {dimension_numbers = #tpu.dot_dimension_numbers<[1], [0], [0], [1], [0, 0, 1, 1], [], []>} : vector<2x32xf32>, vector<32x128xf32>, vector<2x128xf32> -> vector<2x128xf32>
    %12 = arith.index_cast %c0_i32_11 : i32 to index
    %c0_14 = arith.constant 0 : index
    %c0_15 = arith.constant 0 : index
    %13 = vector.load %arg1[%12, %c0_14, %c0_15] : memref<8x2x128xf32, #tpu.memory_space<vmem>>, vector<1x2x128xf32>
    %14 = vector.shape_cast %13 : vector<1x2x128xf32> to vector<2x128xf32>
    %15 = arith.addf %11, %14 : vector<2x128xf32>
    %c0_16 = arith.constant 0 : index
    %c0_17 = arith.constant 0 : index
    %16 = vector.load %arg4[%c0_16, %c0_17] : memref<32x128xf32, #tpu.memory_space<vmem>>, vector<32x128xf32>
    %cst_18 = arith.constant dense<0.000000e+00> : vector<2x128xf32>
    %17 = tpu.matmul %6, %16, %cst_18 {dimension_numbers = #tpu.dot_dimension_numbers<[1], [0], [0], [1], [0, 0, 1, 1], [], []>} : vector<2x32xf32>, vector<32x128xf32>, vector<2x128xf32> -> vector<2x128xf32>
    %18 = arith.index_cast %9 : i32 to index
    %c0_19 = arith.constant 0 : index
    %c0_20 = arith.constant 0 : index
    %19 = vector.load %arg2[%18, %c0_19, %c0_20] : memref<8x2x128xf32, #tpu.memory_space<vmem>>, vector<1x2x128xf32>
    %20 = vector.shape_cast %19 : vector<1x2x128xf32> to vector<2x128xf32>
    %21 = arith.addf %17, %20 : vector<2x128xf32>
    %22 = vector.extract_strided_slice %15 {offsets = [0, 0], sizes = [2, 32], strides = [1, 1]} : vector<2x128xf32> to vector<2x32xf32>
    %23 = arith.negf %22 : vector<2x32xf32>
    %24 = math.exp %23 : vector<2x32xf32>
    %cst_21 = arith.constant 1.000000e+00 : f32
    %25 = vector.broadcast %cst_21 : f32 to vector<2x32xf32>
    %26 = arith.addf %25, %24 : vector<2x32xf32>
    %27 = arith.divf %25, %26 : vector<2x32xf32>
    %28 = vector.extract_strided_slice %15 {offsets = [0, 32], sizes = [2, 32], strides = [1, 1]} : vector<2x128xf32> to vector<2x32xf32>
    %29 = arith.negf %28 : vector<2x32xf32>
    %30 = math.exp %29 : vector<2x32xf32>
    %cst_22 = arith.constant 1.000000e+00 : f32
    %31 = vector.broadcast %cst_22 : f32 to vector<2x32xf32>
    %32 = arith.addf %31, %30 : vector<2x32xf32>
    %33 = arith.divf %31, %32 : vector<2x32xf32>
    %34 = vector.extract_strided_slice %15 {offsets = [0, 64], sizes = [2, 32], strides = [1, 1]} : vector<2x128xf32> to vector<2x32xf32>
    %35 = math.tanh %34 : vector<2x32xf32>
    %36 = vector.extract_strided_slice %15 {offsets = [0, 96], sizes = [2, 32], strides = [1, 1]} : vector<2x128xf32> to vector<2x32xf32>
    %37 = arith.negf %36 : vector<2x32xf32>
    %38 = math.exp %37 : vector<2x32xf32>
    %cst_23 = arith.constant 1.000000e+00 : f32
    %39 = vector.broadcast %cst_23 : f32 to vector<2x32xf32>
    %40 = arith.addf %39, %38 : vector<2x32xf32>
    %41 = arith.divf %39, %40 : vector<2x32xf32>
    %42 = arith.mulf %33, %5 : vector<2x32xf32>
    %43 = arith.mulf %27, %35 : vector<2x32xf32>
    %44 = arith.addf %42, %43 : vector<2x32xf32>
    %45 = math.tanh %44 : vector<2x32xf32>
    %46 = arith.mulf %41, %45 : vector<2x32xf32>
    %47 = vector.extract_strided_slice %21 {offsets = [0, 0], sizes = [2, 32], strides = [1, 1]} : vector<2x128xf32> to vector<2x32xf32>
    %48 = arith.negf %47 : vector<2x32xf32>
    %49 = math.exp %48 : vector<2x32xf32>
    %cst_24 = arith.constant 1.000000e+00 : f32
    %50 = vector.broadcast %cst_24 : f32 to vector<2x32xf32>
    %51 = arith.addf %50, %49 : vector<2x32xf32>
    %52 = arith.divf %50, %51 : vector<2x32xf32>
    %53 = vector.extract_strided_slice %21 {offsets = [0, 32], sizes = [2, 32], strides = [1, 1]} : vector<2x128xf32> to vector<2x32xf32>
    %54 = arith.negf %53 : vector<2x32xf32>
    %55 = math.exp %54 : vector<2x32xf32>
    %cst_25 = arith.constant 1.000000e+00 : f32
    %56 = vector.broadcast %cst_25 : f32 to vector<2x32xf32>
    %57 = arith.addf %56, %55 : vector<2x32xf32>
    %58 = arith.divf %56, %57 : vector<2x32xf32>
    %59 = vector.extract_strided_slice %21 {offsets = [0, 64], sizes = [2, 32], strides = [1, 1]} : vector<2x128xf32> to vector<2x32xf32>
    %60 = math.tanh %59 : vector<2x32xf32>
    %61 = vector.extract_strided_slice %21 {offsets = [0, 96], sizes = [2, 32], strides = [1, 1]} : vector<2x128xf32> to vector<2x32xf32>
    %62 = arith.negf %61 : vector<2x32xf32>
    %63 = math.exp %62 : vector<2x32xf32>
    %cst_26 = arith.constant 1.000000e+00 : f32
    %64 = vector.broadcast %cst_26 : f32 to vector<2x32xf32>
    %65 = arith.addf %64, %63 : vector<2x32xf32>
    %66 = arith.divf %64, %65 : vector<2x32xf32>
    %67 = arith.mulf %58, %7 : vector<2x32xf32>
    %68 = arith.mulf %52, %60 : vector<2x32xf32>
    %69 = arith.addf %67, %68 : vector<2x32xf32>
    %70 = math.tanh %69 : vector<2x32xf32>
    %71 = arith.mulf %66, %70 : vector<2x32xf32>
    %c0_i32_27 = arith.constant 0 : i32
    %72 = arith.cmpi eq, %c0_i32_11, %c0_i32_27 : i32
    %73 = arith.andi %3, %72 : i1
    %74 = arith.select %73, %71, %8 : vector<2x32xf32>
    %c1_i32 = arith.constant 1 : i32
    %c7_i32_28 = arith.constant 7 : i32
    %75 = arith.subi %c7_i32_28, %c1_i32 : i32
    %c0_29 = arith.constant 0 : index
    %c0_30 = arith.constant 0 : index
    %76 = vector.load %arg3[%c0_29, %c0_30] : memref<32x128xf32, #tpu.memory_space<vmem>>, vector<32x128xf32>
    %cst_31 = arith.constant dense<0.000000e+00> : vector<2x128xf32>
    %77 = tpu.matmul %46, %76, %cst_31 {dimension_numbers = #tpu.dot_dimension_numbers<[1], [0], [0], [1], [0, 0, 1, 1], [], []>} : vector<2x32xf32>, vector<32x128xf32>, vector<2x128xf32> -> vector<2x128xf32>
    %78 = arith.index_cast %c1_i32 : i32 to index
    %c0_32 = arith.constant 0 : index
    %c0_33 = arith.constant 0 : index
    %79 = vector.load %arg1[%78, %c0_32, %c0_33] : memref<8x2x128xf32, #tpu.memory_space<vmem>>, vector<1x2x128xf32>
    %80 = vector.shape_cast %79 : vector<1x2x128xf32> to vector<2x128xf32>
    %81 = arith.addf %77, %80 : vector<2x128xf32>
    %c0_34 = arith.constant 0 : index
    %c0_35 = arith.constant 0 : index
    %82 = vector.load %arg4[%c0_34, %c0_35] : memref<32x128xf32, #tpu.memory_space<vmem>>, vector<32x128xf32>
    %cst_36 = arith.constant dense<0.000000e+00> : vector<2x128xf32>
    %83 = tpu.matmul %71, %82, %cst_36 {dimension_numbers = #tpu.dot_dimension_numbers<[1], [0], [0], [1], [0, 0, 1, 1], [], []>} : vector<2x32xf32>, vector<32x128xf32>, vector<2x128xf32> -> vector<2x128xf32>
    %84 = arith.index_cast %75 : i32 to index
    %c0_37 = arith.constant 0 : index
    %c0_38 = arith.constant 0 : index
    %85 = vector.load %arg2[%84, %c0_37, %c0_38] : memref<8x2x128xf32, #tpu.memory_space<vmem>>, vector<1x2x128xf32>
    %86 = vector.shape_cast %85 : vector<1x2x128xf32> to vector<2x128xf32>
    %87 = arith.addf %83, %86 : vector<2x128xf32>
    %88 = vector.extract_strided_slice %81 {offsets = [0, 0], sizes = [2, 32], strides = [1, 1]} : vector<2x128xf32> to vector<2x32xf32>
    %89 = arith.negf %88 : vector<2x32xf32>
    %90 = math.exp %89 : vector<2x32xf32>
    %cst_39 = arith.constant 1.000000e+00 : f32
    %91 = vector.broadcast %cst_39 : f32 to vector<2x32xf32>
    %92 = arith.addf %91, %90 : vector<2x32xf32>
    %93 = arith.divf %91, %92 : vector<2x32xf32>
    %94 = vector.extract_strided_slice %81 {offsets = [0, 32], sizes = [2, 32], strides = [1, 1]} : vector<2x128xf32> to vector<2x32xf32>
    %95 = arith.negf %94 : vector<2x32xf32>
    %96 = math.exp %95 : vector<2x32xf32>
    %cst_40 = arith.constant 1.000000e+00 : f32
    %97 = vector.broadcast %cst_40 : f32 to vector<2x32xf32>
    %98 = arith.addf %97, %96 : vector<2x32xf32>
    %99 = arith.divf %97, %98 : vector<2x32xf32>
    %100 = vector.extract_strided_slice %81 {offsets = [0, 64], sizes = [2, 32], strides = [1, 1]} : vector<2x128xf32> to vector<2x32xf32>
    %101 = math.tanh %100 : vector<2x32xf32>
    %102 = vector.extract_strided_slice %81 {offsets = [0, 96], sizes = [2, 32], strides = [1, 1]} : vector<2x128xf32> to vector<2x32xf32>
    %103 = arith.negf %102 : vector<2x32xf32>
    %104 = math.exp %103 : vector<2x32xf32>
    %cst_41 = arith.constant 1.000000e+00 : f32
    %105 = vector.broadcast %cst_41 : f32 to vector<2x32xf32>
    %106 = arith.addf %105, %104 : vector<2x32xf32>
    %107 = arith.divf %105, %106 : vector<2x32xf32>
    %108 = arith.mulf %99, %44 : vector<2x32xf32>
    %109 = arith.mulf %93, %101 : vector<2x32xf32>
    %110 = arith.addf %108, %109 : vector<2x32xf32>
    %111 = math.tanh %110 : vector<2x32xf32>
    %112 = arith.mulf %107, %111 : vector<2x32xf32>
    %113 = vector.extract_strided_slice %87 {offsets = [0, 0], sizes = [2, 32], strides = [1, 1]} : vector<2x128xf32> to vector<2x32xf32>
    %114 = arith.negf %113 : vector<2x32xf32>
    %115 = math.exp %114 : vector<2x32xf32>
    %cst_42 = arith.constant 1.000000e+00 : f32
    %116 = vector.broadcast %cst_42 : f32 to vector<2x32xf32>
    %117 = arith.addf %116, %115 : vector<2x32xf32>
    %118 = arith.divf %116, %117 : vector<2x32xf32>
    %119 = vector.extract_strided_slice %87 {offsets = [0, 32], sizes = [2, 32], strides = [1, 1]} : vector<2x128xf32> to vector<2x32xf32>
    %120 = arith.negf %119 : vector<2x32xf32>
    %121 = math.exp %120 : vector<2x32xf32>
    %cst_43 = arith.constant 1.000000e+00 : f32
    %122 = vector.broadcast %cst_43 : f32 to vector<2x32xf32>
    %123 = arith.addf %122, %121 : vector<2x32xf32>
    %124 = arith.divf %122, %123 : vector<2x32xf32>
    %125 = vector.extract_strided_slice %87 {offsets = [0, 64], sizes = [2, 32], strides = [1, 1]} : vector<2x128xf32> to vector<2x32xf32>
    %126 = math.tanh %125 : vector<2x32xf32>
    %127 = vector.extract_strided_slice %87 {offsets = [0, 96], sizes = [2, 32], strides = [1, 1]} : vector<2x128xf32> to vector<2x32xf32>
    %128 = arith.negf %127 : vector<2x32xf32>
    %129 = math.exp %128 : vector<2x32xf32>
    %cst_44 = arith.constant 1.000000e+00 : f32
    %130 = vector.broadcast %cst_44 : f32 to vector<2x32xf32>
    %131 = arith.addf %130, %129 : vector<2x32xf32>
    %132 = arith.divf %130, %131 : vector<2x32xf32>
    %133 = arith.mulf %124, %69 : vector<2x32xf32>
    %134 = arith.mulf %118, %126 : vector<2x32xf32>
    %135 = arith.addf %133, %134 : vector<2x32xf32>
    %136 = math.tanh %135 : vector<2x32xf32>
    %137 = arith.mulf %132, %136 : vector<2x32xf32>
    %c0_i32_45 = arith.constant 0 : i32
    %138 = arith.cmpi eq, %c1_i32, %c0_i32_45 : i32
    %139 = arith.andi %3, %138 : i1
    %140 = arith.select %139, %137, %74 : vector<2x32xf32>
    %c2_i32 = arith.constant 2 : i32
    %c7_i32_46 = arith.constant 7 : i32
    %141 = arith.subi %c7_i32_46, %c2_i32 : i32
    %c0_47 = arith.constant 0 : index
    %c0_48 = arith.constant 0 : index
    %142 = vector.load %arg3[%c0_47, %c0_48] : memref<32x128xf32, #tpu.memory_space<vmem>>, vector<32x128xf32>
    %cst_49 = arith.constant dense<0.000000e+00> : vector<2x128xf32>
    %143 = tpu.matmul %112, %142, %cst_49 {dimension_numbers = #tpu.dot_dimension_numbers<[1], [0], [0], [1], [0, 0, 1, 1], [], []>} : vector<2x32xf32>, vector<32x128xf32>, vector<2x128xf32> -> vector<2x128xf32>
    %144 = arith.index_cast %c2_i32 : i32 to index
    %c0_50 = arith.constant 0 : index
    %c0_51 = arith.constant 0 : index
    %145 = vector.load %arg1[%144, %c0_50, %c0_51] : memref<8x2x128xf32, #tpu.memory_space<vmem>>, vector<1x2x128xf32>
    %146 = vector.shape_cast %145 : vector<1x2x128xf32> to vector<2x128xf32>
    %147 = arith.addf %143, %146 : vector<2x128xf32>
    %c0_52 = arith.constant 0 : index
    %c0_53 = arith.constant 0 : index
    %148 = vector.load %arg4[%c0_52, %c0_53] : memref<32x128xf32, #tpu.memory_space<vmem>>, vector<32x128xf32>
    %cst_54 = arith.constant dense<0.000000e+00> : vector<2x128xf32>
    %149 = tpu.matmul %137, %148, %cst_54 {dimension_numbers = #tpu.dot_dimension_numbers<[1], [0], [0], [1], [0, 0, 1, 1], [], []>} : vector<2x32xf32>, vector<32x128xf32>, vector<2x128xf32> -> vector<2x128xf32>
    %150 = arith.index_cast %141 : i32 to index
    %c0_55 = arith.constant 0 : index
    %c0_56 = arith.constant 0 : index
    %151 = vector.load %arg2[%150, %c0_55, %c0_56] : memref<8x2x128xf32, #tpu.memory_space<vmem>>, vector<1x2x128xf32>
    %152 = vector.shape_cast %151 : vector<1x2x128xf32> to vector<2x128xf32>
    %153 = arith.addf %149, %152 : vector<2x128xf32>
    %154 = vector.extract_strided_slice %147 {offsets = [0, 0], sizes = [2, 32], strides = [1, 1]} : vector<2x128xf32> to vector<2x32xf32>
    %155 = arith.negf %154 : vector<2x32xf32>
    %156 = math.exp %155 : vector<2x32xf32>
    %cst_57 = arith.constant 1.000000e+00 : f32
    %157 = vector.broadcast %cst_57 : f32 to vector<2x32xf32>
    %158 = arith.addf %157, %156 : vector<2x32xf32>
    %159 = arith.divf %157, %158 : vector<2x32xf32>
    %160 = vector.extract_strided_slice %147 {offsets = [0, 32], sizes = [2, 32], strides = [1, 1]} : vector<2x128xf32> to vector<2x32xf32>
    %161 = arith.negf %160 : vector<2x32xf32>
    %162 = math.exp %161 : vector<2x32xf32>
    %cst_58 = arith.constant 1.000000e+00 : f32
    %163 = vector.broadcast %cst_58 : f32 to vector<2x32xf32>
    %164 = arith.addf %163, %162 : vector<2x32xf32>
    %165 = arith.divf %163, %164 : vector<2x32xf32>
    %166 = vector.extract_strided_slice %147 {offsets = [0, 64], sizes = [2, 32], strides = [1, 1]} : vector<2x128xf32> to vector<2x32xf32>
    %167 = math.tanh %166 : vector<2x32xf32>
    %168 = vector.extract_strided_slice %147 {offsets = [0, 96], sizes = [2, 32], strides = [1, 1]} : vector<2x128xf32> to vector<2x32xf32>
    %169 = arith.negf %168 : vector<2x32xf32>
    %170 = math.exp %169 : vector<2x32xf32>
    %cst_59 = arith.constant 1.000000e+00 : f32
    %171 = vector.broadcast %cst_59 : f32 to vector<2x32xf32>
    %172 = arith.addf %171, %170 : vector<2x32xf32>
    %173 = arith.divf %171, %172 : vector<2x32xf32>
    %174 = arith.mulf %165, %110 : vector<2x32xf32>
    %175 = arith.mulf %159, %167 : vector<2x32xf32>
    %176 = arith.addf %174, %175 : vector<2x32xf32>
    %177 = math.tanh %176 : vector<2x32xf32>
    %178 = arith.mulf %173, %177 : vector<2x32xf32>
    %179 = vector.extract_strided_slice %153 {offsets = [0, 0], sizes = [2, 32], strides = [1, 1]} : vector<2x128xf32> to vector<2x32xf32>
    %180 = arith.negf %179 : vector<2x32xf32>
    %181 = math.exp %180 : vector<2x32xf32>
    %cst_60 = arith.constant 1.000000e+00 : f32
    %182 = vector.broadcast %cst_60 : f32 to vector<2x32xf32>
    %183 = arith.addf %182, %181 : vector<2x32xf32>
    %184 = arith.divf %182, %183 : vector<2x32xf32>
    %185 = vector.extract_strided_slice %153 {offsets = [0, 32], sizes = [2, 32], strides = [1, 1]} : vector<2x128xf32> to vector<2x32xf32>
    %186 = arith.negf %185 : vector<2x32xf32>
    %187 = math.exp %186 : vector<2x32xf32>
    %cst_61 = arith.constant 1.000000e+00 : f32
    %188 = vector.broadcast %cst_61 : f32 to vector<2x32xf32>
    %189 = arith.addf %188, %187 : vector<2x32xf32>
    %190 = arith.divf %188, %189 : vector<2x32xf32>
    %191 = vector.extract_strided_slice %153 {offsets = [0, 64], sizes = [2, 32], strides = [1, 1]} : vector<2x128xf32> to vector<2x32xf32>
    %192 = math.tanh %191 : vector<2x32xf32>
    %193 = vector.extract_strided_slice %153 {offsets = [0, 96], sizes = [2, 32], strides = [1, 1]} : vector<2x128xf32> to vector<2x32xf32>
    %194 = arith.negf %193 : vector<2x32xf32>
    %195 = math.exp %194 : vector<2x32xf32>
    %cst_62 = arith.constant 1.000000e+00 : f32
    %196 = vector.broadcast %cst_62 : f32 to vector<2x32xf32>
    %197 = arith.addf %196, %195 : vector<2x32xf32>
    %198 = arith.divf %196, %197 : vector<2x32xf32>
    %199 = arith.mulf %190, %135 : vector<2x32xf32>
    %200 = arith.mulf %184, %192 : vector<2x32xf32>
    %201 = arith.addf %199, %200 : vector<2x32xf32>
    %202 = math.tanh %201 : vector<2x32xf32>
    %203 = arith.mulf %198, %202 : vector<2x32xf32>
    %c0_i32_63 = arith.constant 0 : i32
    %204 = arith.cmpi eq, %c2_i32, %c0_i32_63 : i32
    %205 = arith.andi %3, %204 : i1
    %206 = arith.select %205, %203, %140 : vector<2x32xf32>
    %c3_i32 = arith.constant 3 : i32
    %c7_i32_64 = arith.constant 7 : i32
    %207 = arith.subi %c7_i32_64, %c3_i32 : i32
    %c0_65 = arith.constant 0 : index
    %c0_66 = arith.constant 0 : index
    %208 = vector.load %arg3[%c0_65, %c0_66] : memref<32x128xf32, #tpu.memory_space<vmem>>, vector<32x128xf32>
    %cst_67 = arith.constant dense<0.000000e+00> : vector<2x128xf32>
    %209 = tpu.matmul %178, %208, %cst_67 {dimension_numbers = #tpu.dot_dimension_numbers<[1], [0], [0], [1], [0, 0, 1, 1], [], []>} : vector<2x32xf32>, vector<32x128xf32>, vector<2x128xf32> -> vector<2x128xf32>
    %210 = arith.index_cast %c3_i32 : i32 to index
    %c0_68 = arith.constant 0 : index
    %c0_69 = arith.constant 0 : index
    %211 = vector.load %arg1[%210, %c0_68, %c0_69] : memref<8x2x128xf32, #tpu.memory_space<vmem>>, vector<1x2x128xf32>
    %212 = vector.shape_cast %211 : vector<1x2x128xf32> to vector<2x128xf32>
    %213 = arith.addf %209, %212 : vector<2x128xf32>
    %c0_70 = arith.constant 0 : index
    %c0_71 = arith.constant 0 : index
    %214 = vector.load %arg4[%c0_70, %c0_71] : memref<32x128xf32, #tpu.memory_space<vmem>>, vector<32x128xf32>
    %cst_72 = arith.constant dense<0.000000e+00> : vector<2x128xf32>
    %215 = tpu.matmul %203, %214, %cst_72 {dimension_numbers = #tpu.dot_dimension_numbers<[1], [0], [0], [1], [0, 0, 1, 1], [], []>} : vector<2x32xf32>, vector<32x128xf32>, vector<2x128xf32> -> vector<2x128xf32>
    %216 = arith.index_cast %207 : i32 to index
    %c0_73 = arith.constant 0 : index
    %c0_74 = arith.constant 0 : index
    %217 = vector.load %arg2[%216, %c0_73, %c0_74] : memref<8x2x128xf32, #tpu.memory_space<vmem>>, vector<1x2x128xf32>
    %218 = vector.shape_cast %217 : vector<1x2x128xf32> to vector<2x128xf32>
    %219 = arith.addf %215, %218 : vector<2x128xf32>
    %220 = vector.extract_strided_slice %213 {offsets = [0, 0], sizes = [2, 32], strides = [1, 1]} : vector<2x128xf32> to vector<2x32xf32>
    %221 = arith.negf %220 : vector<2x32xf32>
    %222 = math.exp %221 : vector<2x32xf32>
    %cst_75 = arith.constant 1.000000e+00 : f32
    %223 = vector.broadcast %cst_75 : f32 to vector<2x32xf32>
    %224 = arith.addf %223, %222 : vector<2x32xf32>
    %225 = arith.divf %223, %224 : vector<2x32xf32>
    %226 = vector.extract_strided_slice %213 {offsets = [0, 32], sizes = [2, 32], strides = [1, 1]} : vector<2x128xf32> to vector<2x32xf32>
    %227 = arith.negf %226 : vector<2x32xf32>
    %228 = math.exp %227 : vector<2x32xf32>
    %cst_76 = arith.constant 1.000000e+00 : f32
    %229 = vector.broadcast %cst_76 : f32 to vector<2x32xf32>
    %230 = arith.addf %229, %228 : vector<2x32xf32>
    %231 = arith.divf %229, %230 : vector<2x32xf32>
    %232 = vector.extract_strided_slice %213 {offsets = [0, 64], sizes = [2, 32], strides = [1, 1]} : vector<2x128xf32> to vector<2x32xf32>
    %233 = math.tanh %232 : vector<2x32xf32>
    %234 = vector.extract_strided_slice %213 {offsets = [0, 96], sizes = [2, 32], strides = [1, 1]} : vector<2x128xf32> to vector<2x32xf32>
    %235 = arith.negf %234 : vector<2x32xf32>
    %236 = math.exp %235 : vector<2x32xf32>
    %cst_77 = arith.constant 1.000000e+00 : f32
    %237 = vector.broadcast %cst_77 : f32 to vector<2x32xf32>
    %238 = arith.addf %237, %236 : vector<2x32xf32>
    %239 = arith.divf %237, %238 : vector<2x32xf32>
    %240 = arith.mulf %231, %176 : vector<2x32xf32>
    %241 = arith.mulf %225, %233 : vector<2x32xf32>
    %242 = arith.addf %240, %241 : vector<2x32xf32>
    %243 = math.tanh %242 : vector<2x32xf32>
    %244 = arith.mulf %239, %243 : vector<2x32xf32>
    %245 = vector.extract_strided_slice %219 {offsets = [0, 0], sizes = [2, 32], strides = [1, 1]} : vector<2x128xf32> to vector<2x32xf32>
    %246 = arith.negf %245 : vector<2x32xf32>
    %247 = math.exp %246 : vector<2x32xf32>
    %cst_78 = arith.constant 1.000000e+00 : f32
    %248 = vector.broadcast %cst_78 : f32 to vector<2x32xf32>
    %249 = arith.addf %248, %247 : vector<2x32xf32>
    %250 = arith.divf %248, %249 : vector<2x32xf32>
    %251 = vector.extract_strided_slice %219 {offsets = [0, 32], sizes = [2, 32], strides = [1, 1]} : vector<2x128xf32> to vector<2x32xf32>
    %252 = arith.negf %251 : vector<2x32xf32>
    %253 = math.exp %252 : vector<2x32xf32>
    %cst_79 = arith.constant 1.000000e+00 : f32
    %254 = vector.broadcast %cst_79 : f32 to vector<2x32xf32>
    %255 = arith.addf %254, %253 : vector<2x32xf32>
    %256 = arith.divf %254, %255 : vector<2x32xf32>
    %257 = vector.extract_strided_slice %219 {offsets = [0, 64], sizes = [2, 32], strides = [1, 1]} : vector<2x128xf32> to vector<2x32xf32>
    %258 = math.tanh %257 : vector<2x32xf32>
    %259 = vector.extract_strided_slice %219 {offsets = [0, 96], sizes = [2, 32], strides = [1, 1]} : vector<2x128xf32> to vector<2x32xf32>
    %260 = arith.negf %259 : vector<2x32xf32>
    %261 = math.exp %260 : vector<2x32xf32>
    %cst_80 = arith.constant 1.000000e+00 : f32
    %262 = vector.broadcast %cst_80 : f32 to vector<2x32xf32>
    %263 = arith.addf %262, %261 : vector<2x32xf32>
    %264 = arith.divf %262, %263 : vector<2x32xf32>
    %265 = arith.mulf %256, %201 : vector<2x32xf32>
    %266 = arith.mulf %250, %258 : vector<2x32xf32>
    %267 = arith.addf %265, %266 : vector<2x32xf32>
    %268 = math.tanh %267 : vector<2x32xf32>
    %269 = arith.mulf %264, %268 : vector<2x32xf32>
    %c0_i32_81 = arith.constant 0 : i32
    %270 = arith.cmpi eq, %c3_i32, %c0_i32_81 : i32
    %271 = arith.andi %3, %270 : i1
    %272 = arith.select %271, %269, %206 : vector<2x32xf32>
    %c4_i32 = arith.constant 4 : i32
    %c7_i32_82 = arith.constant 7 : i32
    %273 = arith.subi %c7_i32_82, %c4_i32 : i32
    %c0_83 = arith.constant 0 : index
    %c0_84 = arith.constant 0 : index
    %274 = vector.load %arg3[%c0_83, %c0_84] : memref<32x128xf32, #tpu.memory_space<vmem>>, vector<32x128xf32>
    %cst_85 = arith.constant dense<0.000000e+00> : vector<2x128xf32>
    %275 = tpu.matmul %244, %274, %cst_85 {dimension_numbers = #tpu.dot_dimension_numbers<[1], [0], [0], [1], [0, 0, 1, 1], [], []>} : vector<2x32xf32>, vector<32x128xf32>, vector<2x128xf32> -> vector<2x128xf32>
    %276 = arith.index_cast %c4_i32 : i32 to index
    %c0_86 = arith.constant 0 : index
    %c0_87 = arith.constant 0 : index
    %277 = vector.load %arg1[%276, %c0_86, %c0_87] : memref<8x2x128xf32, #tpu.memory_space<vmem>>, vector<1x2x128xf32>
    %278 = vector.shape_cast %277 : vector<1x2x128xf32> to vector<2x128xf32>
    %279 = arith.addf %275, %278 : vector<2x128xf32>
    %c0_88 = arith.constant 0 : index
    %c0_89 = arith.constant 0 : index
    %280 = vector.load %arg4[%c0_88, %c0_89] : memref<32x128xf32, #tpu.memory_space<vmem>>, vector<32x128xf32>
    %cst_90 = arith.constant dense<0.000000e+00> : vector<2x128xf32>
    %281 = tpu.matmul %269, %280, %cst_90 {dimension_numbers = #tpu.dot_dimension_numbers<[1], [0], [0], [1], [0, 0, 1, 1], [], []>} : vector<2x32xf32>, vector<32x128xf32>, vector<2x128xf32> -> vector<2x128xf32>
    %282 = arith.index_cast %273 : i32 to index
    %c0_91 = arith.constant 0 : index
    %c0_92 = arith.constant 0 : index
    %283 = vector.load %arg2[%282, %c0_91, %c0_92] : memref<8x2x128xf32, #tpu.memory_space<vmem>>, vector<1x2x128xf32>
    %284 = vector.shape_cast %283 : vector<1x2x128xf32> to vector<2x128xf32>
    %285 = arith.addf %281, %284 : vector<2x128xf32>
    %286 = vector.extract_strided_slice %279 {offsets = [0, 0], sizes = [2, 32], strides = [1, 1]} : vector<2x128xf32> to vector<2x32xf32>
    %287 = arith.negf %286 : vector<2x32xf32>
    %288 = math.exp %287 : vector<2x32xf32>
    %cst_93 = arith.constant 1.000000e+00 : f32
    %289 = vector.broadcast %cst_93 : f32 to vector<2x32xf32>
    %290 = arith.addf %289, %288 : vector<2x32xf32>
    %291 = arith.divf %289, %290 : vector<2x32xf32>
    %292 = vector.extract_strided_slice %279 {offsets = [0, 32], sizes = [2, 32], strides = [1, 1]} : vector<2x128xf32> to vector<2x32xf32>
    %293 = arith.negf %292 : vector<2x32xf32>
    %294 = math.exp %293 : vector<2x32xf32>
    %cst_94 = arith.constant 1.000000e+00 : f32
    %295 = vector.broadcast %cst_94 : f32 to vector<2x32xf32>
    %296 = arith.addf %295, %294 : vector<2x32xf32>
    %297 = arith.divf %295, %296 : vector<2x32xf32>
    %298 = vector.extract_strided_slice %279 {offsets = [0, 64], sizes = [2, 32], strides = [1, 1]} : vector<2x128xf32> to vector<2x32xf32>
    %299 = math.tanh %298 : vector<2x32xf32>
    %300 = vector.extract_strided_slice %279 {offsets = [0, 96], sizes = [2, 32], strides = [1, 1]} : vector<2x128xf32> to vector<2x32xf32>
    %301 = arith.negf %300 : vector<2x32xf32>
    %302 = math.exp %301 : vector<2x32xf32>
    %cst_95 = arith.constant 1.000000e+00 : f32
    %303 = vector.broadcast %cst_95 : f32 to vector<2x32xf32>
    %304 = arith.addf %303, %302 : vector<2x32xf32>
    %305 = arith.divf %303, %304 : vector<2x32xf32>
    %306 = arith.mulf %297, %242 : vector<2x32xf32>
    %307 = arith.mulf %291, %299 : vector<2x32xf32>
    %308 = arith.addf %306, %307 : vector<2x32xf32>
    %309 = math.tanh %308 : vector<2x32xf32>
    %310 = arith.mulf %305, %309 : vector<2x32xf32>
    %311 = vector.extract_strided_slice %285 {offsets = [0, 0], sizes = [2, 32], strides = [1, 1]} : vector<2x128xf32> to vector<2x32xf32>
    %312 = arith.negf %311 : vector<2x32xf32>
    %313 = math.exp %312 : vector<2x32xf32>
    %cst_96 = arith.constant 1.000000e+00 : f32
    %314 = vector.broadcast %cst_96 : f32 to vector<2x32xf32>
    %315 = arith.addf %314, %313 : vector<2x32xf32>
    %316 = arith.divf %314, %315 : vector<2x32xf32>
    %317 = vector.extract_strided_slice %285 {offsets = [0, 32], sizes = [2, 32], strides = [1, 1]} : vector<2x128xf32> to vector<2x32xf32>
    %318 = arith.negf %317 : vector<2x32xf32>
    %319 = math.exp %318 : vector<2x32xf32>
    %cst_97 = arith.constant 1.000000e+00 : f32
    %320 = vector.broadcast %cst_97 : f32 to vector<2x32xf32>
    %321 = arith.addf %320, %319 : vector<2x32xf32>
    %322 = arith.divf %320, %321 : vector<2x32xf32>
    %323 = vector.extract_strided_slice %285 {offsets = [0, 64], sizes = [2, 32], strides = [1, 1]} : vector<2x128xf32> to vector<2x32xf32>
    %324 = math.tanh %323 : vector<2x32xf32>
    %325 = vector.extract_strided_slice %285 {offsets = [0, 96], sizes = [2, 32], strides = [1, 1]} : vector<2x128xf32> to vector<2x32xf32>
    %326 = arith.negf %325 : vector<2x32xf32>
    %327 = math.exp %326 : vector<2x32xf32>
    %cst_98 = arith.constant 1.000000e+00 : f32
    %328 = vector.broadcast %cst_98 : f32 to vector<2x32xf32>
    %329 = arith.addf %328, %327 : vector<2x32xf32>
    %330 = arith.divf %328, %329 : vector<2x32xf32>
    %331 = arith.mulf %322, %267 : vector<2x32xf32>
    %332 = arith.mulf %316, %324 : vector<2x32xf32>
    %333 = arith.addf %331, %332 : vector<2x32xf32>
    %334 = math.tanh %333 : vector<2x32xf32>
    %335 = arith.mulf %330, %334 : vector<2x32xf32>
    %c0_i32_99 = arith.constant 0 : i32
    %336 = arith.cmpi eq, %c4_i32, %c0_i32_99 : i32
    %337 = arith.andi %3, %336 : i1
    %338 = arith.select %337, %335, %272 : vector<2x32xf32>
    %c5_i32 = arith.constant 5 : i32
    %c7_i32_100 = arith.constant 7 : i32
    %339 = arith.subi %c7_i32_100, %c5_i32 : i32
    %c0_101 = arith.constant 0 : index
    %c0_102 = arith.constant 0 : index
    %340 = vector.load %arg3[%c0_101, %c0_102] : memref<32x128xf32, #tpu.memory_space<vmem>>, vector<32x128xf32>
    %cst_103 = arith.constant dense<0.000000e+00> : vector<2x128xf32>
    %341 = tpu.matmul %310, %340, %cst_103 {dimension_numbers = #tpu.dot_dimension_numbers<[1], [0], [0], [1], [0, 0, 1, 1], [], []>} : vector<2x32xf32>, vector<32x128xf32>, vector<2x128xf32> -> vector<2x128xf32>
    %342 = arith.index_cast %c5_i32 : i32 to index
    %c0_104 = arith.constant 0 : index
    %c0_105 = arith.constant 0 : index
    %343 = vector.load %arg1[%342, %c0_104, %c0_105] : memref<8x2x128xf32, #tpu.memory_space<vmem>>, vector<1x2x128xf32>
    %344 = vector.shape_cast %343 : vector<1x2x128xf32> to vector<2x128xf32>
    %345 = arith.addf %341, %344 : vector<2x128xf32>
    %c0_106 = arith.constant 0 : index
    %c0_107 = arith.constant 0 : index
    %346 = vector.load %arg4[%c0_106, %c0_107] : memref<32x128xf32, #tpu.memory_space<vmem>>, vector<32x128xf32>
    %cst_108 = arith.constant dense<0.000000e+00> : vector<2x128xf32>
    %347 = tpu.matmul %335, %346, %cst_108 {dimension_numbers = #tpu.dot_dimension_numbers<[1], [0], [0], [1], [0, 0, 1, 1], [], []>} : vector<2x32xf32>, vector<32x128xf32>, vector<2x128xf32> -> vector<2x128xf32>
    %348 = arith.index_cast %339 : i32 to index
    %c0_109 = arith.constant 0 : index
    %c0_110 = arith.constant 0 : index
    %349 = vector.load %arg2[%348, %c0_109, %c0_110] : memref<8x2x128xf32, #tpu.memory_space<vmem>>, vector<1x2x128xf32>
    %350 = vector.shape_cast %349 : vector<1x2x128xf32> to vector<2x128xf32>
    %351 = arith.addf %347, %350 : vector<2x128xf32>
    %352 = vector.extract_strided_slice %345 {offsets = [0, 0], sizes = [2, 32], strides = [1, 1]} : vector<2x128xf32> to vector<2x32xf32>
    %353 = arith.negf %352 : vector<2x32xf32>
    %354 = math.exp %353 : vector<2x32xf32>
    %cst_111 = arith.constant 1.000000e+00 : f32
    %355 = vector.broadcast %cst_111 : f32 to vector<2x32xf32>
    %356 = arith.addf %355, %354 : vector<2x32xf32>
    %357 = arith.divf %355, %356 : vector<2x32xf32>
    %358 = vector.extract_strided_slice %345 {offsets = [0, 32], sizes = [2, 32], strides = [1, 1]} : vector<2x128xf32> to vector<2x32xf32>
    %359 = arith.negf %358 : vector<2x32xf32>
    %360 = math.exp %359 : vector<2x32xf32>
    %cst_112 = arith.constant 1.000000e+00 : f32
    %361 = vector.broadcast %cst_112 : f32 to vector<2x32xf32>
    %362 = arith.addf %361, %360 : vector<2x32xf32>
    %363 = arith.divf %361, %362 : vector<2x32xf32>
    %364 = vector.extract_strided_slice %345 {offsets = [0, 64], sizes = [2, 32], strides = [1, 1]} : vector<2x128xf32> to vector<2x32xf32>
    %365 = math.tanh %364 : vector<2x32xf32>
    %366 = vector.extract_strided_slice %345 {offsets = [0, 96], sizes = [2, 32], strides = [1, 1]} : vector<2x128xf32> to vector<2x32xf32>
    %367 = arith.negf %366 : vector<2x32xf32>
    %368 = math.exp %367 : vector<2x32xf32>
    %cst_113 = arith.constant 1.000000e+00 : f32
    %369 = vector.broadcast %cst_113 : f32 to vector<2x32xf32>
    %370 = arith.addf %369, %368 : vector<2x32xf32>
    %371 = arith.divf %369, %370 : vector<2x32xf32>
    %372 = arith.mulf %363, %308 : vector<2x32xf32>
    %373 = arith.mulf %357, %365 : vector<2x32xf32>
    %374 = arith.addf %372, %373 : vector<2x32xf32>
    %375 = math.tanh %374 : vector<2x32xf32>
    %376 = arith.mulf %371, %375 : vector<2x32xf32>
    %377 = vector.extract_strided_slice %351 {offsets = [0, 0], sizes = [2, 32], strides = [1, 1]} : vector<2x128xf32> to vector<2x32xf32>
    %378 = arith.negf %377 : vector<2x32xf32>
    %379 = math.exp %378 : vector<2x32xf32>
    %cst_114 = arith.constant 1.000000e+00 : f32
    %380 = vector.broadcast %cst_114 : f32 to vector<2x32xf32>
    %381 = arith.addf %380, %379 : vector<2x32xf32>
    %382 = arith.divf %380, %381 : vector<2x32xf32>
    %383 = vector.extract_strided_slice %351 {offsets = [0, 32], sizes = [2, 32], strides = [1, 1]} : vector<2x128xf32> to vector<2x32xf32>
    %384 = arith.negf %383 : vector<2x32xf32>
    %385 = math.exp %384 : vector<2x32xf32>
    %cst_115 = arith.constant 1.000000e+00 : f32
    %386 = vector.broadcast %cst_115 : f32 to vector<2x32xf32>
    %387 = arith.addf %386, %385 : vector<2x32xf32>
    %388 = arith.divf %386, %387 : vector<2x32xf32>
    %389 = vector.extract_strided_slice %351 {offsets = [0, 64], sizes = [2, 32], strides = [1, 1]} : vector<2x128xf32> to vector<2x32xf32>
    %390 = math.tanh %389 : vector<2x32xf32>
    %391 = vector.extract_strided_slice %351 {offsets = [0, 96], sizes = [2, 32], strides = [1, 1]} : vector<2x128xf32> to vector<2x32xf32>
    %392 = arith.negf %391 : vector<2x32xf32>
    %393 = math.exp %392 : vector<2x32xf32>
    %cst_116 = arith.constant 1.000000e+00 : f32
    %394 = vector.broadcast %cst_116 : f32 to vector<2x32xf32>
    %395 = arith.addf %394, %393 : vector<2x32xf32>
    %396 = arith.divf %394, %395 : vector<2x32xf32>
    %397 = arith.mulf %388, %333 : vector<2x32xf32>
    %398 = arith.mulf %382, %390 : vector<2x32xf32>
    %399 = arith.addf %397, %398 : vector<2x32xf32>
    %400 = math.tanh %399 : vector<2x32xf32>
    %401 = arith.mulf %396, %400 : vector<2x32xf32>
    %c0_i32_117 = arith.constant 0 : i32
    %402 = arith.cmpi eq, %c5_i32, %c0_i32_117 : i32
    %403 = arith.andi %3, %402 : i1
    %404 = arith.select %403, %401, %338 : vector<2x32xf32>
    %c6_i32 = arith.constant 6 : i32
    %c7_i32_118 = arith.constant 7 : i32
    %405 = arith.subi %c7_i32_118, %c6_i32 : i32
    %c0_119 = arith.constant 0 : index
    %c0_120 = arith.constant 0 : index
    %406 = vector.load %arg3[%c0_119, %c0_120] : memref<32x128xf32, #tpu.memory_space<vmem>>, vector<32x128xf32>
    %cst_121 = arith.constant dense<0.000000e+00> : vector<2x128xf32>
    %407 = tpu.matmul %376, %406, %cst_121 {dimension_numbers = #tpu.dot_dimension_numbers<[1], [0], [0], [1], [0, 0, 1, 1], [], []>} : vector<2x32xf32>, vector<32x128xf32>, vector<2x128xf32> -> vector<2x128xf32>
    %408 = arith.index_cast %c6_i32 : i32 to index
    %c0_122 = arith.constant 0 : index
    %c0_123 = arith.constant 0 : index
    %409 = vector.load %arg1[%408, %c0_122, %c0_123] : memref<8x2x128xf32, #tpu.memory_space<vmem>>, vector<1x2x128xf32>
    %410 = vector.shape_cast %409 : vector<1x2x128xf32> to vector<2x128xf32>
    %411 = arith.addf %407, %410 : vector<2x128xf32>
    %c0_124 = arith.constant 0 : index
    %c0_125 = arith.constant 0 : index
    %412 = vector.load %arg4[%c0_124, %c0_125] : memref<32x128xf32, #tpu.memory_space<vmem>>, vector<32x128xf32>
    %cst_126 = arith.constant dense<0.000000e+00> : vector<2x128xf32>
    %413 = tpu.matmul %401, %412, %cst_126 {dimension_numbers = #tpu.dot_dimension_numbers<[1], [0], [0], [1], [0, 0, 1, 1], [], []>} : vector<2x32xf32>, vector<32x128xf32>, vector<2x128xf32> -> vector<2x128xf32>
    %414 = arith.index_cast %405 : i32 to index
    %c0_127 = arith.constant 0 : index
    %c0_128 = arith.constant 0 : index
    %415 = vector.load %arg2[%414, %c0_127, %c0_128] : memref<8x2x128xf32, #tpu.memory_space<vmem>>, vector<1x2x128xf32>
    %416 = vector.shape_cast %415 : vector<1x2x128xf32> to vector<2x128xf32>
    %417 = arith.addf %413, %416 : vector<2x128xf32>
    %418 = vector.extract_strided_slice %411 {offsets = [0, 0], sizes = [2, 32], strides = [1, 1]} : vector<2x128xf32> to vector<2x32xf32>
    %419 = arith.negf %418 : vector<2x32xf32>
    %420 = math.exp %419 : vector<2x32xf32>
    %cst_129 = arith.constant 1.000000e+00 : f32
    %421 = vector.broadcast %cst_129 : f32 to vector<2x32xf32>
    %422 = arith.addf %421, %420 : vector<2x32xf32>
    %423 = arith.divf %421, %422 : vector<2x32xf32>
    %424 = vector.extract_strided_slice %411 {offsets = [0, 32], sizes = [2, 32], strides = [1, 1]} : vector<2x128xf32> to vector<2x32xf32>
    %425 = arith.negf %424 : vector<2x32xf32>
    %426 = math.exp %425 : vector<2x32xf32>
    %cst_130 = arith.constant 1.000000e+00 : f32
    %427 = vector.broadcast %cst_130 : f32 to vector<2x32xf32>
    %428 = arith.addf %427, %426 : vector<2x32xf32>
    %429 = arith.divf %427, %428 : vector<2x32xf32>
    %430 = vector.extract_strided_slice %411 {offsets = [0, 64], sizes = [2, 32], strides = [1, 1]} : vector<2x128xf32> to vector<2x32xf32>
    %431 = math.tanh %430 : vector<2x32xf32>
    %432 = vector.extract_strided_slice %411 {offsets = [0, 96], sizes = [2, 32], strides = [1, 1]} : vector<2x128xf32> to vector<2x32xf32>
    %433 = arith.negf %432 : vector<2x32xf32>
    %434 = math.exp %433 : vector<2x32xf32>
    %cst_131 = arith.constant 1.000000e+00 : f32
    %435 = vector.broadcast %cst_131 : f32 to vector<2x32xf32>
    %436 = arith.addf %435, %434 : vector<2x32xf32>
    %437 = arith.divf %435, %436 : vector<2x32xf32>
    %438 = arith.mulf %429, %374 : vector<2x32xf32>
    %439 = arith.mulf %423, %431 : vector<2x32xf32>
    %440 = arith.addf %438, %439 : vector<2x32xf32>
    %441 = math.tanh %440 : vector<2x32xf32>
    %442 = arith.mulf %437, %441 : vector<2x32xf32>
    %443 = vector.extract_strided_slice %417 {offsets = [0, 0], sizes = [2, 32], strides = [1, 1]} : vector<2x128xf32> to vector<2x32xf32>
    %444 = arith.negf %443 : vector<2x32xf32>
    %445 = math.exp %444 : vector<2x32xf32>
    %cst_132 = arith.constant 1.000000e+00 : f32
    %446 = vector.broadcast %cst_132 : f32 to vector<2x32xf32>
    %447 = arith.addf %446, %445 : vector<2x32xf32>
    %448 = arith.divf %446, %447 : vector<2x32xf32>
    %449 = vector.extract_strided_slice %417 {offsets = [0, 32], sizes = [2, 32], strides = [1, 1]} : vector<2x128xf32> to vector<2x32xf32>
    %450 = arith.negf %449 : vector<2x32xf32>
    %451 = math.exp %450 : vector<2x32xf32>
    %cst_133 = arith.constant 1.000000e+00 : f32
    %452 = vector.broadcast %cst_133 : f32 to vector<2x32xf32>
    %453 = arith.addf %452, %451 : vector<2x32xf32>
    %454 = arith.divf %452, %453 : vector<2x32xf32>
    %455 = vector.extract_strided_slice %417 {offsets = [0, 64], sizes = [2, 32], strides = [1, 1]} : vector<2x128xf32> to vector<2x32xf32>
    %456 = math.tanh %455 : vector<2x32xf32>
    %457 = vector.extract_strided_slice %417 {offsets = [0, 96], sizes = [2, 32], strides = [1, 1]} : vector<2x128xf32> to vector<2x32xf32>
    %458 = arith.negf %457 : vector<2x32xf32>
    %459 = math.exp %458 : vector<2x32xf32>
    %cst_134 = arith.constant 1.000000e+00 : f32
    %460 = vector.broadcast %cst_134 : f32 to vector<2x32xf32>
    %461 = arith.addf %460, %459 : vector<2x32xf32>
    %462 = arith.divf %460, %461 : vector<2x32xf32>
    %463 = arith.mulf %454, %399 : vector<2x32xf32>
    %464 = arith.mulf %448, %456 : vector<2x32xf32>
    %465 = arith.addf %463, %464 : vector<2x32xf32>
    %466 = math.tanh %465 : vector<2x32xf32>
    %467 = arith.mulf %462, %466 : vector<2x32xf32>
    %c0_i32_135 = arith.constant 0 : i32
    %468 = arith.cmpi eq, %c6_i32, %c0_i32_135 : i32
    %469 = arith.andi %3, %468 : i1
    %470 = arith.select %469, %467, %404 : vector<2x32xf32>
    %c7_i32_136 = arith.constant 7 : i32
    %c7_i32_137 = arith.constant 7 : i32
    %471 = arith.subi %c7_i32_137, %c7_i32_136 : i32
    %c0_138 = arith.constant 0 : index
    %c0_139 = arith.constant 0 : index
    %472 = vector.load %arg3[%c0_138, %c0_139] : memref<32x128xf32, #tpu.memory_space<vmem>>, vector<32x128xf32>
    %cst_140 = arith.constant dense<0.000000e+00> : vector<2x128xf32>
    %473 = tpu.matmul %442, %472, %cst_140 {dimension_numbers = #tpu.dot_dimension_numbers<[1], [0], [0], [1], [0, 0, 1, 1], [], []>} : vector<2x32xf32>, vector<32x128xf32>, vector<2x128xf32> -> vector<2x128xf32>
    %474 = arith.index_cast %c7_i32_136 : i32 to index
    %c0_141 = arith.constant 0 : index
    %c0_142 = arith.constant 0 : index
    %475 = vector.load %arg1[%474, %c0_141, %c0_142] : memref<8x2x128xf32, #tpu.memory_space<vmem>>, vector<1x2x128xf32>
    %476 = vector.shape_cast %475 : vector<1x2x128xf32> to vector<2x128xf32>
    %477 = arith.addf %473, %476 : vector<2x128xf32>
    %c0_143 = arith.constant 0 : index
    %c0_144 = arith.constant 0 : index
    %478 = vector.load %arg4[%c0_143, %c0_144] : memref<32x128xf32, #tpu.memory_space<vmem>>, vector<32x128xf32>
    %cst_145 = arith.constant dense<0.000000e+00> : vector<2x128xf32>
    %479 = tpu.matmul %467, %478, %cst_145 {dimension_numbers = #tpu.dot_dimension_numbers<[1], [0], [0], [1], [0, 0, 1, 1], [], []>} : vector<2x32xf32>, vector<32x128xf32>, vector<2x128xf32> -> vector<2x128xf32>
    %480 = arith.index_cast %471 : i32 to index
    %c0_146 = arith.constant 0 : index
    %c0_147 = arith.constant 0 : index
    %481 = vector.load %arg2[%480, %c0_146, %c0_147] : memref<8x2x128xf32, #tpu.memory_space<vmem>>, vector<1x2x128xf32>
    %482 = vector.shape_cast %481 : vector<1x2x128xf32> to vector<2x128xf32>
    %483 = arith.addf %479, %482 : vector<2x128xf32>
    %484 = vector.extract_strided_slice %477 {offsets = [0, 0], sizes = [2, 32], strides = [1, 1]} : vector<2x128xf32> to vector<2x32xf32>
    %485 = arith.negf %484 : vector<2x32xf32>
    %486 = math.exp %485 : vector<2x32xf32>
    %cst_148 = arith.constant 1.000000e+00 : f32
    %487 = vector.broadcast %cst_148 : f32 to vector<2x32xf32>
    %488 = arith.addf %487, %486 : vector<2x32xf32>
    %489 = arith.divf %487, %488 : vector<2x32xf32>
    %490 = vector.extract_strided_slice %477 {offsets = [0, 32], sizes = [2, 32], strides = [1, 1]} : vector<2x128xf32> to vector<2x32xf32>
    %491 = arith.negf %490 : vector<2x32xf32>
    %492 = math.exp %491 : vector<2x32xf32>
    %cst_149 = arith.constant 1.000000e+00 : f32
    %493 = vector.broadcast %cst_149 : f32 to vector<2x32xf32>
    %494 = arith.addf %493, %492 : vector<2x32xf32>
    %495 = arith.divf %493, %494 : vector<2x32xf32>
    %496 = vector.extract_strided_slice %477 {offsets = [0, 64], sizes = [2, 32], strides = [1, 1]} : vector<2x128xf32> to vector<2x32xf32>
    %497 = math.tanh %496 : vector<2x32xf32>
    %498 = vector.extract_strided_slice %477 {offsets = [0, 96], sizes = [2, 32], strides = [1, 1]} : vector<2x128xf32> to vector<2x32xf32>
    %499 = arith.negf %498 : vector<2x32xf32>
    %500 = math.exp %499 : vector<2x32xf32>
    %cst_150 = arith.constant 1.000000e+00 : f32
    %501 = vector.broadcast %cst_150 : f32 to vector<2x32xf32>
    %502 = arith.addf %501, %500 : vector<2x32xf32>
    %503 = arith.divf %501, %502 : vector<2x32xf32>
    %504 = arith.mulf %495, %440 : vector<2x32xf32>
    %505 = arith.mulf %489, %497 : vector<2x32xf32>
    %506 = arith.addf %504, %505 : vector<2x32xf32>
    %507 = math.tanh %506 : vector<2x32xf32>
    %508 = arith.mulf %503, %507 : vector<2x32xf32>
    %509 = vector.extract_strided_slice %483 {offsets = [0, 0], sizes = [2, 32], strides = [1, 1]} : vector<2x128xf32> to vector<2x32xf32>
    %510 = arith.negf %509 : vector<2x32xf32>
    %511 = math.exp %510 : vector<2x32xf32>
    %cst_151 = arith.constant 1.000000e+00 : f32
    %512 = vector.broadcast %cst_151 : f32 to vector<2x32xf32>
    %513 = arith.addf %512, %511 : vector<2x32xf32>
    %514 = arith.divf %512, %513 : vector<2x32xf32>
    %515 = vector.extract_strided_slice %483 {offsets = [0, 32], sizes = [2, 32], strides = [1, 1]} : vector<2x128xf32> to vector<2x32xf32>
    %516 = arith.negf %515 : vector<2x32xf32>
    %517 = math.exp %516 : vector<2x32xf32>
    %cst_152 = arith.constant 1.000000e+00 : f32
    %518 = vector.broadcast %cst_152 : f32 to vector<2x32xf32>
    %519 = arith.addf %518, %517 : vector<2x32xf32>
    %520 = arith.divf %518, %519 : vector<2x32xf32>
    %521 = vector.extract_strided_slice %483 {offsets = [0, 64], sizes = [2, 32], strides = [1, 1]} : vector<2x128xf32> to vector<2x32xf32>
    %522 = math.tanh %521 : vector<2x32xf32>
    %523 = vector.extract_strided_slice %483 {offsets = [0, 96], sizes = [2, 32], strides = [1, 1]} : vector<2x128xf32> to vector<2x32xf32>
    %524 = arith.negf %523 : vector<2x32xf32>
    %525 = math.exp %524 : vector<2x32xf32>
    %cst_153 = arith.constant 1.000000e+00 : f32
    %526 = vector.broadcast %cst_153 : f32 to vector<2x32xf32>
    %527 = arith.addf %526, %525 : vector<2x32xf32>
    %528 = arith.divf %526, %527 : vector<2x32xf32>
    %529 = arith.mulf %520, %465 : vector<2x32xf32>
    %530 = arith.mulf %514, %522 : vector<2x32xf32>
    %531 = arith.addf %529, %530 : vector<2x32xf32>
    %532 = math.tanh %531 : vector<2x32xf32>
    %533 = arith.mulf %528, %532 : vector<2x32xf32>
    %c0_i32_154 = arith.constant 0 : i32
    %534 = arith.cmpi eq, %c7_i32_136, %c0_i32_154 : i32
    %535 = arith.andi %3, %534 : i1
    %536 = arith.select %535, %533, %470 : vector<2x32xf32>
    %c8_i32 = arith.constant 8 : i32
    %c0_155 = arith.constant 0 : index
    %c0_156 = arith.constant 0 : index
    %537 = vector.load %arg9[%c0_155, %c0_156] : memref<2x32xf32, #tpu.memory_space<vmem>>, vector<2x32xf32>
    tpu.vector_store %arg9[%c0_155, %c0_156], %508 {strides = array<i32>} : memref<2x32xf32, #tpu.memory_space<vmem>>, vector<2x32xf32>,
    %c0_157 = arith.constant 0 : index
    %c0_158 = arith.constant 0 : index
    %538 = vector.load %arg10[%c0_157, %c0_158] : memref<2x32xf32, #tpu.memory_space<vmem>>, vector<2x32xf32>
    tpu.vector_store %arg10[%c0_157, %c0_158], %506 {strides = array<i32>} : memref<2x32xf32, #tpu.memory_space<vmem>>, vector<2x32xf32>,
    %c0_159 = arith.constant 0 : index
    %c0_160 = arith.constant 0 : index
    %539 = vector.load %arg11[%c0_159, %c0_160] : memref<2x32xf32, #tpu.memory_space<vmem>>, vector<2x32xf32>
    tpu.vector_store %arg11[%c0_159, %c0_160], %533 {strides = array<i32>} : memref<2x32xf32, #tpu.memory_space<vmem>>, vector<2x32xf32>,
    %c0_161 = arith.constant 0 : index
    %c0_162 = arith.constant 0 : index
    %540 = vector.load %arg12[%c0_161, %c0_162] : memref<2x32xf32, #tpu.memory_space<vmem>>, vector<2x32xf32>
    tpu.vector_store %arg12[%c0_161, %c0_162], %531 {strides = array<i32>} : memref<2x32xf32, #tpu.memory_space<vmem>>, vector<2x32xf32>,
    %c0_163 = arith.constant 0 : index
    %c0_164 = arith.constant 0 : index
    %541 = vector.load %arg13[%c0_163, %c0_164] : memref<2x32xf32, #tpu.memory_space<vmem>>, vector<2x32xf32>
    tpu.vector_store %arg13[%c0_163, %c0_164], %536 {strides = array<i32>} : memref<2x32xf32, #tpu.memory_space<vmem>>, vector<2x32xf32>,
    %c0_i32_165 = arith.constant 0 : i32
    %542 = arith.cmpi eq, %arg0, %c0_i32_165 : i32
    %543 = arith.extui %542 : i1 to i32
    %c0_i32_166 = arith.constant 0 : i32
    %544 = arith.cmpi ne, %543, %c0_i32_166 : i32
    scf.if %544 {
      %c0_167 = arith.constant 0 : index
      %c0_168 = arith.constant 0 : index
      %545 = vector.load %arg9[%c0_167, %c0_168] : memref<2x32xf32, #tpu.memory_space<vmem>>, vector<2x32xf32>
      %c0_169 = arith.constant 0 : index
      %c0_170 = arith.constant 0 : index
      %546 = vector.load %arg5[%c0_169, %c0_170] : memref<32x4xf32, #tpu.memory_space<vmem>>, vector<32x4xf32>
      %cst_171 = arith.constant dense<0.000000e+00> : vector<2x4xf32>
      %547 = tpu.matmul %545, %546, %cst_171 {dimension_numbers = #tpu.dot_dimension_numbers<[1], [0], [0], [1], [0, 0, 1, 1], [], []>} : vector<2x32xf32>, vector<32x4xf32>, vector<2x4xf32> -> vector<2x4xf32>
      %c0_172 = arith.constant 0 : index
      %c0_173 = arith.constant 0 : index
      %548 = vector.load %arg13[%c0_172, %c0_173] : memref<2x32xf32, #tpu.memory_space<vmem>>, vector<2x32xf32>
      %c0_174 = arith.constant 0 : index
      %c0_175 = arith.constant 0 : index
      %549 = vector.load %arg6[%c0_174, %c0_175] : memref<32x4xf32, #tpu.memory_space<vmem>>, vector<32x4xf32>
      %cst_176 = arith.constant dense<0.000000e+00> : vector<2x4xf32>
      %550 = tpu.matmul %548, %549, %cst_176 {dimension_numbers = #tpu.dot_dimension_numbers<[1], [0], [0], [1], [0, 0, 1, 1], [], []>} : vector<2x32xf32>, vector<32x4xf32>, vector<2x4xf32> -> vector<2x4xf32>
      %551 = arith.addf %547, %550 : vector<2x4xf32>
      %c0_177 = arith.constant 0 : index
      %c0_178 = arith.constant 0 : index
      %552 = vector.load %arg7[%c0_177, %c0_178] : memref<1x4xf32, #tpu.memory_space<vmem>>, vector<1x4xf32>
      %553 = vector.broadcast %552 : vector<1x4xf32> to vector<2x4xf32>
      %554 = arith.addf %551, %553 : vector<2x4xf32>
      %c0_179 = arith.constant 0 : index
      %c0_180 = arith.constant 0 : index
      %555 = vector.load %arg8[%c0_179, %c0_180] : memref<2x4xf32, #tpu.memory_space<vmem>>, vector<2x4xf32>
      tpu.vector_store %arg8[%c0_179, %c0_180], %554 {strides = array<i32>} : memref<2x4xf32, #tpu.memory_space<vmem>>, vector<2x4xf32>,
    } else {
    }
    return
  }
  func.func @transform_0(%arg0: i32) -> (i32, i32, i32) {
    %c0_i32 = arith.constant 0 : i32
    %c0_i32_0 = arith.constant 0 : i32
    %c0_i32_1 = arith.constant 0 : i32
    return %arg0, %c0_i32, %c0_i32_0 : i32, i32, i32
  }
  func.func @transform_1(%arg0: i32) -> (i32, i32, i32) {
    %c0_i32 = arith.constant 0 : i32
    %0 = arith.subi %c0_i32, %arg0 : i32
    %c0_i32_0 = arith.constant 0 : i32
    %c0_i32_1 = arith.constant 0 : i32
    %c0_i32_2 = arith.constant 0 : i32
    return %0, %c0_i32_0, %c0_i32_1 : i32, i32, i32
  }
  func.func @transform_2(%arg0: i32) -> (i32, i32) {
    %c0_i32 = arith.constant 0 : i32
    %c0_i32_0 = arith.constant 0 : i32
    %c0_i32_1 = arith.constant 0 : i32
    return %c0_i32, %c0_i32_0 : i32, i32
  }
  func.func @transform_3(%arg0: i32) -> (i32, i32) {
    %c0_i32 = arith.constant 0 : i32
    %c0_i32_0 = arith.constant 0 : i32
    %c0_i32_1 = arith.constant 0 : i32
    return %c0_i32, %c0_i32_0 : i32, i32
  }
  func.func @transform_4(%arg0: i32) -> (i32, i32) {
    %c0_i32 = arith.constant 0 : i32
    %c0_i32_0 = arith.constant 0 : i32
    %c0_i32_1 = arith.constant 0 : i32
    return %c0_i32, %c0_i32_0 : i32, i32
  }
  func.func @transform_5(%arg0: i32) -> (i32, i32) {
    %c0_i32 = arith.constant 0 : i32
    %c0_i32_0 = arith.constant 0 : i32
    %c0_i32_1 = arith.constant 0 : i32
    return %c0_i32, %c0_i32_0 : i32, i32
  }
  func.func @transform_6(%arg0: i32) -> (i32, i32) {
    %c0_i32 = arith.constant 0 : i32
    %c0_i32_0 = arith.constant 0 : i32
    %c0_i32_1 = arith.constant 0 : i32
    return %c0_i32, %c0_i32_0 : i32, i32
  }
  func.func @transform_7(%arg0: i32) -> (i32, i32) {
    %c0_i32 = arith.constant 0 : i32
    %c0_i32_0 = arith.constant 0 : i32
    %c0_i32_1 = arith.constant 0 : i32
    return %c0_i32, %c0_i32_0 : i32, i32
  }
}

</mosaic_0001>

<llo_original>
// kernel: bilstm_forward.6
$region0: #{bilstm_forward.6}
  #allocation0 [shape = 'u32[]', space=smem, size = 0x4, offset = 0x4, fixed_abs, tag = 'smem constant byte address 0x4 - core index']
  #allocation1 [shape = 'u32[72,128]{1,0:T(1,128)}', space=vmem, size = 0x9000, scoped, tag = 'internal scratch']
  %s0 = inlined_call_operand.vmem [shape: f32[16,32], index: 0, kind: input, shape index: {}]
  %s1 = inlined_call_operand.vmem [shape: f32[16,32], index: 1, kind: input, shape index: {}]
  %s2 = inlined_call_operand.vmem [shape: f32[32,256], index: 2, kind: input, shape index: {}]
  %s3 = inlined_call_operand.vmem [shape: f32[32,256], index: 3, kind: input, shape index: {}]
  %s4 = inlined_call_operand.vmem [shape: f32[1,256], index: 4, kind: input, shape index: {}]
  %s5 = inlined_call_operand.vmem [shape: f32[16,128], index: 5, kind: output, shape index: {0}]
  %s6 = inlined_call_operand.vmem [shape: f32[16,128], index: 6, kind: output, shape index: {1}]
  %7 = xla_tuple %s5, %s6
  %s8 = sld [smem:[#allocation0]]
  $region38: #{bilstm_forward.6} parent=0
    _
  %s10 = ssub.s32 1, %s8
  %s11 = scalar_select 0, %s10, %s8
  // Predicated region
  $region2: #{bilstm_forward.6} parent=0 // pred_check
    _
  $region3: #{bilstm_forward.6} parent=0 // pred_check_branch
    %13 = sbr.rel (0) target = $region5
  $region4: #{bilstm_forward.6} parent=0 // pred_region
    _
  $region5: #{bilstm_forward.6} parent=0 // pred_fallthru
    _
  // Predicated region
  $region6: #{bilstm_forward.6} parent=0 // pred_check
    _
  $region7: #{bilstm_forward.6} parent=0 // pred_check_branch
    %15 = sbr.rel (0) target = $region9
  $region8: #{bilstm_forward.6} parent=0 // pred_region
    _
  $region9: #{bilstm_forward.6} parent=0 // pred_fallthru
    _
  // Predicated region
  $region10: #{bilstm_forward.6} parent=0 // pred_check
    _
  $region11: #{bilstm_forward.6} parent=0 // pred_check_branch
    %17 = sbr.rel (0) target = $region13
  $region12: #{bilstm_forward.6} parent=0 // pred_region
    _
  $region13: #{bilstm_forward.6} parent=0 // pred_fallthru
    _
  // Predicated region
  $region14: #{bilstm_forward.6} parent=0 // pred_check
    _
  $region15: #{bilstm_forward.6} parent=0 // pred_check_branch
    %19 = sbr.rel (0) target = $region17
  $region16: #{bilstm_forward.6} parent=0 // pred_region
    _
  $region17: #{bilstm_forward.6} parent=0 // pred_fallthru
    _
  // Predicated region
  $region18: #{bilstm_forward.6} parent=0 // pred_check
    _
  $region19: #{bilstm_forward.6} parent=0 // pred_check_branch
    %21 = sbr.rel (0) target = $region21
  $region20: #{bilstm_forward.6} parent=0 // pred_region
    _
  $region21: #{bilstm_forward.6} parent=0 // pred_fallthru
    _
  %v22 = vld [vmem:[%s0] sm:$0xff]
  %v23 = vld [vmem:[%s0 + $0x8] sm:$0xff]
  %v24 = vld [vmem:[%s2] sm:$0xff]
  %v25 = vld [vmem:[%s2 + $0x8] sm:$0xff]
  %v26 = vld [vmem:[%s2 + $0x10] sm:$0xff]
  %v27 = vld [vmem:[%s2 + $0x18] sm:$0xff]
  %v28 = vld [vmem:[%s2 + $0x20] sm:$0xff]
  %v29 = vld [vmem:[%s2 + $0x28] sm:$0xff]
  %v30 = vld [vmem:[%s2 + $0x30] sm:$0xff]
  %v31 = vld [vmem:[%s2 + $0x38] sm:$0xff]
  %v32 = vld [vmem:[%s1] sm:$0xff]
  %v33 = vld [vmem:[%s1 + $0x8] sm:$0xff]
  %v34 = vld [vmem:[%s3] sm:$0xff]
  %v35 = vld [vmem:[%s3 + $0x8] sm:$0xff]
  %v36 = vld [vmem:[%s3 + $0x10] sm:$0xff]
  %v37 = vld [vmem:[%s3 + $0x18] sm:$0xff]
  %v38 = vld [vmem:[%s3 + $0x20] sm:$0xff]
  %v39 = vld [vmem:[%s3 + $0x28] sm:$0xff]
  %v40 = vld [vmem:[%s3 + $0x30] sm:$0xff]
  %v41 = vld [vmem:[%s3 + $0x38] sm:$0xff]
  %vm42 = vcmask 261120
  %v44 = vsel %vm42, %v32, 0
  %v47 = vsel %vm42, %v33, 0
  %49 = vmatpush.msra.mxu0 0.0
  %50 = vmatpush.msra.mxu0 0.0
  %51 = vmatpush.msra.mxu0 0.0
  %52 = vmatpush.msra.mxu0 0.0
  %53 = vmatpush.msra.mxu0 0.0
  %54 = vmatpush.msra.mxu0 0.0
  %55 = vmatpush.msra.mxu0 0.0
  %56 = vmatpush.msra.mxu0 0.0
  %57 = vmatpush.msra.mxu0 0.0
  %58 = vmatpush.msra.mxu0 0.0
  %59 = vmatpush.msra.mxu0 0.0
  %60 = vmatpush.msra.mxu0 0.0
  %61 = vmatpush.msra.mxu0 %v40
  %62 = vmatpush.msra.mxu0 %v38
  %63 = vmatpush.msra.mxu0 %v36
  %64 = vmatpush.msra.mxu0 %v34
  %65 = vmatmul.f32.gmra.mxu0 %v44
  %v66 = vpop.f32.mrf.mxu0
  %v67 = vadd.f32 0.0, %v66
  %68 = vmatmul.f32.gmra.mxu0 %v47
  %v69 = vpop.f32.mrf.mxu0
  %v70 = vadd.f32 0.0, %v69
  %71 = vdwg.mxu0
  %72 = vmatpush.msra.mxu0 0.0
  %73 = vmatpush.msra.mxu0 0.0
  %74 = vmatpush.msra.mxu0 0.0
  %75 = vmatpush.msra.mxu0 0.0
  %76 = vmatpush.msra.mxu0 0.0
  %77 = vmatpush.msra.mxu0 0.0
  %78 = vmatpush.msra.mxu0 0.0
  %79 = vmatpush.msra.mxu0 0.0
  %80 = vmatpush.msra.mxu0 0.0
  %81 = vmatpush.msra.mxu0 0.0
  %82 = vmatpush.msra.mxu0 0.0
  %83 = vmatpush.msra.mxu0 0.0
  %84 = vmatpush.msra.mxu0 %v41
  %85 = vmatpush.msra.mxu0 %v39
  %86 = vmatpush.msra.mxu0 %v37
  %87 = vmatpush.msra.mxu0 %v35
  %88 = vmatmul.f32.gmra.mxu0 %v44
  %v89 = vpop.f32.mrf.mxu0
  %v90 = vadd.f32 0.0, %v89
  %91 = vmatmul.f32.gmra.mxu0 %v47
  %v92 = vpop.f32.mrf.mxu0
  %v93 = vadd.f32 0.0, %v92
  %94 = vdwg.mxu0
  %v96 = vsel %vm42, %v22, 0
  %v99 = vsel %vm42, %v23, 0
  %101 = vmatpush.msra.mxu0 0.0
  %102 = vmatpush.msra.mxu0 0.0
  %103 = vmatpush.msra.mxu0 0.0
  %104 = vmatpush.msra.mxu0 0.0
  %105 = vmatpush.msra.mxu0 0.0
  %106 = vmatpush.msra.mxu0 0.0
  %107 = vmatpush.msra.mxu0 0.0
  %108 = vmatpush.msra.mxu0 0.0
  %109 = vmatpush.msra.mxu0 0.0
  %110 = vmatpush.msra.mxu0 0.0
  %111 = vmatpush.msra.mxu0 0.0
  %112 = vmatpush.msra.mxu0 0.0
  %113 = vmatpush.msra.mxu0 %v30
  %114 = vmatpush.msra.mxu0 %v28
  %115 = vmatpush.msra.mxu0 %v26
  %116 = vmatpush.msra.mxu0 %v24
  %117 = vmatmul.f32.gmra.mxu0 %v96
  %v118 = vpop.f32.mrf.mxu0
  %v119 = vadd.f32 %v67, %v118
  %120 = vmatmul.f32.gmra.mxu0 %v99
  %v121 = vpop.f32.mrf.mxu0
  %v122 = vadd.f32 %v70, %v121
  %123 = vdwg.mxu0
  %124 = vmatpush.msra.mxu0 0.0
  %125 = vmatpush.msra.mxu0 0.0
  %126 = vmatpush.msra.mxu0 0.0
  %127 = vmatpush.msra.mxu0 0.0
  %128 = vmatpush.msra.mxu0 0.0
  %129 = vmatpush.msra.mxu0 0.0
  %130 = vmatpush.msra.mxu0 0.0
  %131 = vmatpush.msra.mxu0 0.0
  %132 = vmatpush.msra.mxu0 0.0
  %133 = vmatpush.msra.mxu0 0.0
  %134 = vmatpush.msra.mxu0 0.0
  %135 = vmatpush.msra.mxu0 0.0
  %136 = vmatpush.msra.mxu0 %v31
  %137 = vmatpush.msra.mxu0 %v29
  %138 = vmatpush.msra.mxu0 %v27
  %139 = vmatpush.msra.mxu0 %v25
  %140 = vmatmul.f32.gmra.mxu0 %v96
  %v141 = vpop.f32.mrf.mxu0
  %v142 = vadd.f32 %v90, %v141
  %143 = vmatmul.f32.gmra.mxu0 %v99
  %v144 = vpop.f32.mrf.mxu0
  %v145 = vadd.f32 %v93, %v144
  %146 = vdwg.mxu0
  %v147 = vld [vmem:[%s4] sm:$0x3]
  %v149 = vperm.slane %v147, 0
  %v150 = vperm.slane %v147, 1
  %v153 = vadd.f32 %v119, %v149
  %v154 = vadd.f32 %v142, %v150
  %v155 = vadd.f32 %v122, %v149
  %v156 = vadd.f32 %v145, %v150
  %157 = vst [vmem:[%s5] sm:$0xff] %v153
  %158 = vst [vmem:[%s5 + $0x8] sm:$0xff] %v155
  %159 = vst [vmem:[%s6] sm:$0xff] %v154
  %160 = vst [vmem:[%s6 + $0x8] sm:$0xff] %v156
  // Predicated region
  $region22: #{bilstm_forward.6} parent=0 // pred_check
    _
  $region23: #{bilstm_forward.6} parent=0 // pred_check_branch
    %162 = sbr.rel (0) target = $region25
  $region24: #{bilstm_forward.6} parent=0 // pred_region
    _
  $region25: #{bilstm_forward.6} parent=0 // pred_fallthru
    _
  // Predicated region
  $region26: #{bilstm_forward.6} parent=0 // pred_check
    _
  $region27: #{bilstm_forward.6} parent=0 // pred_check_branch
    %164 = sbr.rel (0) target = $region29
  $region28: #{bilstm_forward.6} parent=0 // pred_region
    _
  $region29: #{bilstm_forward.6} parent=0 // pred_fallthru
    _
  // Predicated region
  $region30: #{bilstm_forward.6} parent=0 // pred_check
    _
  $region31: #{bilstm_forward.6} parent=0 // pred_check_branch
    %166 = sbr.rel (0) target = $region33
  $region32: #{bilstm_forward.6} parent=0 // pred_region
    _
  $region33: #{bilstm_forward.6} parent=0 // pred_fallthru
    _
  // Predicated region
  $region34: #{bilstm_forward.6} parent=0 // pred_check
    _
  $region35: #{bilstm_forward.6} parent=0 // pred_check_branch
    %168 = sbr.rel (0) target = $region37
  $region36: #{bilstm_forward.6} parent=0 // pred_region
    _
  $region37: #{bilstm_forward.6} parent=0 // pred_fallthru
    _

// kernel: bilstm_forward.4
$region0: #{bilstm_forward.4}
  #allocation0 [shape = 'u32[]', space=smem, size = 0x4, offset = 0x4, fixed_abs, tag = 'smem constant byte address 0x4 - core index']
  #allocation1 [shape = 'u32[72,128]{1,0:T(1,128)}', space=vmem, size = 0x9000, scoped, tag = 'internal scratch']
  %s0 = inlined_call_operand.vmem [shape: f32[16,32], index: 0, kind: input, shape index: {}]
  %s1 = inlined_call_operand.vmem [shape: f32[32,256], index: 1, kind: input, shape index: {}]
  %s2 = inlined_call_operand.vmem [shape: f32[1,256], index: 2, kind: input, shape index: {}]
  %s3 = inlined_call_operand.vmem [shape: f32[16,128], index: 3, kind: output, shape index: {0}]
  %s4 = inlined_call_operand.vmem [shape: f32[16,128], index: 4, kind: output, shape index: {1}]
  %5 = xla_tuple %s3, %s4
  %s6 = sld [smem:[#allocation0]]
  $region30: #{bilstm_forward.4} parent=0
    _
  %s8 = ssub.s32 1, %s6
  %s9 = scalar_select 0, %s8, %s6
  // Predicated region
  $region2: #{bilstm_forward.4} parent=0 // pred_check
    _
  $region3: #{bilstm_forward.4} parent=0 // pred_check_branch
    %11 = sbr.rel (0) target = $region5
  $region4: #{bilstm_forward.4} parent=0 // pred_region
    _
  $region5: #{bilstm_forward.4} parent=0 // pred_fallthru
    _
  // Predicated region
  $region6: #{bilstm_forward.4} parent=0 // pred_check
    _
  $region7: #{bilstm_forward.4} parent=0 // pred_check_branch
    %13 = sbr.rel (0) target = $region9
  $region8: #{bilstm_forward.4} parent=0 // pred_region
    _
  $region9: #{bilstm_forward.4} parent=0 // pred_fallthru
    _
  // Predicated region
  $region10: #{bilstm_forward.4} parent=0 // pred_check
    _
  $region11: #{bilstm_forward.4} parent=0 // pred_check_branch
    %15 = sbr.rel (0) target = $region13
  $region12: #{bilstm_forward.4} parent=0 // pred_region
    _
  $region13: #{bilstm_forward.4} parent=0 // pred_fallthru
    _
  %v16 = vld [vmem:[%s0] sm:$0xff]
  %v17 = vld [vmem:[%s0 + $0x8] sm:$0xff]
  %v18 = vld [vmem:[%s1] sm:$0xff]
  %v19 = vld [vmem:[%s1 + $0x8] sm:$0xff]
  %v20 = vld [vmem:[%s1 + $0x10] sm:$0xff]
  %v21 = vld [vmem:[%s1 + $0x18] sm:$0xff]
  %v22 = vld [vmem:[%s1 + $0x20] sm:$0xff]
  %v23 = vld [vmem:[%s1 + $0x28] sm:$0xff]
  %v24 = vld [vmem:[%s1 + $0x30] sm:$0xff]
  %v25 = vld [vmem:[%s1 + $0x38] sm:$0xff]
  %v26 = vld [vmem:[%s2] sm:$0x3]
  %v28 = vperm.slane %v26, 0
  %v29 = vperm.slane %v26, 1
  %vm32 = vcmask 261120
  %v34 = vsel %vm32, %v16, 0
  %v37 = vsel %vm32, %v17, 0
  %39 = vmatpush.msra.mxu0 0.0
  %40 = vmatpush.msra.mxu0 0.0
  %41 = vmatpush.msra.mxu0 0.0
  %42 = vmatpush.msra.mxu0 0.0
  %43 = vmatpush.msra.mxu0 0.0
  %44 = vmatpush.msra.mxu0 0.0
  %45 = vmatpush.msra.mxu0 0.0
  %46 = vmatpush.msra.mxu0 0.0
  %47 = vmatpush.msra.mxu0 0.0
  %48 = vmatpush.msra.mxu0 0.0
  %49 = vmatpush.msra.mxu0 0.0
  %50 = vmatpush.msra.mxu0 0.0
  %51 = vmatpush.msra.mxu0 %v24
  %52 = vmatpush.msra.mxu0 %v22
  %53 = vmatpush.msra.mxu0 %v20
  %54 = vmatpush.msra.mxu0 %v18
  %55 = vmatmul.f32.gmra.mxu0 %v34
  %v56 = vpop.f32.mrf.mxu0
  %v57 = vadd.f32 %v28, %v56
  %58 = vmatmul.f32.gmra.mxu0 %v37
  %v59 = vpop.f32.mrf.mxu0
  %v60 = vadd.f32 %v28, %v59
  %61 = vdwg.mxu0
  %62 = vmatpush.msra.mxu0 0.0
  %63 = vmatpush.msra.mxu0 0.0
  %64 = vmatpush.msra.mxu0 0.0
  %65 = vmatpush.msra.mxu0 0.0
  %66 = vmatpush.msra.mxu0 0.0
  %67 = vmatpush.msra.mxu0 0.0
  %68 = vmatpush.msra.mxu0 0.0
  %69 = vmatpush.msra.mxu0 0.0
  %70 = vmatpush.msra.mxu0 0.0
  %71 = vmatpush.msra.mxu0 0.0
  %72 = vmatpush.msra.mxu0 0.0
  %73 = vmatpush.msra.mxu0 0.0
  %74 = vmatpush.msra.mxu0 %v25
  %75 = vmatpush.msra.mxu0 %v23
  %76 = vmatpush.msra.mxu0 %v21
  %77 = vmatpush.msra.mxu0 %v19
  %78 = vmatmul.f32.gmra.mxu0 %v34
  %v79 = vpop.f32.mrf.mxu0
  %v80 = vadd.f32 %v29, %v79
  %81 = vmatmul.f32.gmra.mxu0 %v37
  %v82 = vpop.f32.mrf.mxu0
  %v83 = vadd.f32 %v29, %v82
  %84 = vdwg.mxu0
  %85 = vst [vmem:[%s3] sm:$0xff] %v57
  %86 = vst [vmem:[%s3 + $0x8] sm:$0xff] %v60
  %87 = vst [vmem:[%s4] sm:$0xff] %v80
  %88 = vst [vmem:[%s4 + $0x8] sm:$0xff] %v83
  // Predicated region
  $region14: #{bilstm_forward.4} parent=0 // pred_check
    _
  $region15: #{bilstm_forward.4} parent=0 // pred_check_branch
    %90 = sbr.rel (0) target = $region17
  $region16: #{bilstm_forward.4} parent=0 // pred_region
    _
  $region17: #{bilstm_forward.4} parent=0 // pred_fallthru
    _
  // Predicated region
  $region18: #{bilstm_forward.4} parent=0 // pred_check
    _
  $region19: #{bilstm_forward.4} parent=0 // pred_check_branch
    %92 = sbr.rel (0) target = $region21
  $region20: #{bilstm_forward.4} parent=0 // pred_region
    _
  $region21: #{bilstm_forward.4} parent=0 // pred_fallthru
    _
  // Predicated region
  $region22: #{bilstm_forward.4} parent=0 // pred_check
    _
  $region23: #{bilstm_forward.4} parent=0 // pred_check_branch
    %94 = sbr.rel (0) target = $region25
  $region24: #{bilstm_forward.4} parent=0 // pred_region
    _
  $region25: #{bilstm_forward.4} parent=0 // pred_fallthru
    _
  // Predicated region
  $region26: #{bilstm_forward.4} parent=0 // pred_check
    _
  $region27: #{bilstm_forward.4} parent=0 // pred_check_branch
    %96 = sbr.rel (0) target = $region29
  $region28: #{bilstm_forward.4} parent=0 // pred_region
    _
  $region29: #{bilstm_forward.4} parent=0 // pred_fallthru
    _

// kernel: bilstm_forward.5
$region0: #{bilstm_forward.5}
  #allocation0 [shape = 'u32[]', space=smem, size = 0x4, offset = 0x4, fixed_abs, tag = 'smem constant byte address 0x4 - core index']
  #allocation1 [shape = 'u32[72,128]{1,0:T(1,128)}', space=vmem, size = 0x9000, scoped, tag = 'internal scratch']
  #allocation2 [shape = 'f32[2,32]{1,0:T(2,128)}', space=vmem, size = 0x400, scoped, tag = 'scratch operand']
  #allocation3 [shape = 'f32[2,32]{1,0:T(2,128)}', space=vmem, size = 0x400, scoped, tag = 'scratch operand']
  #allocation4 [shape = 'f32[2,32]{1,0:T(2,128)}', space=vmem, size = 0x400, scoped, tag = 'scratch operand']
  #allocation5 [shape = 'f32[2,32]{1,0:T(2,128)}', space=vmem, size = 0x400, scoped, tag = 'scratch operand']
  %s0 = inlined_call_operand.vmem [shape: f32[8,2,128], index: 0, kind: input, shape index: {}]
  %s1 = inlined_call_operand.vmem [shape: f32[8,2,128], index: 1, kind: input, shape index: {}]
  %s2 = inlined_call_operand.vmem [shape: f32[32,128], index: 2, kind: input, shape index: {}]
  %s3 = inlined_call_operand.vmem [shape: f32[32,128], index: 3, kind: input, shape index: {}]
  %s4 = inlined_call_operand.vmem [shape: f32[8,2,32], index: 4, kind: output, shape index: {0}]
  %s5 = inlined_call_operand.vmem [shape: f32[8,2,32], index: 5, kind: output, shape index: {1}]
  %6 = xla_tuple %s4, %s5
  %s7 = sld [smem:[#allocation0]]
  $region38: #{bilstm_forward.5} parent=0
    _
  %s9 = ssub.s32 1, %s7
  %s10 = scalar_select 0, %s9, %s7
  // Predicated region
  $region2: #{bilstm_forward.5} parent=0 // pred_check
    _
  $region3: #{bilstm_forward.5} parent=0 // pred_check_branch
    %12 = sbr.rel (0) target = $region5
  $region4: #{bilstm_forward.5} parent=0 // pred_region
    _
  $region5: #{bilstm_forward.5} parent=0 // pred_fallthru
    _
  // Predicated region
  $region6: #{bilstm_forward.5} parent=0 // pred_check
    _
  $region7: #{bilstm_forward.5} parent=0 // pred_check_branch
    %14 = sbr.rel (0) target = $region9
  $region8: #{bilstm_forward.5} parent=0 // pred_region
    %s15 = ssub.s32 0, 0
    %s16 = smul.u32 8, %s15
    %p17 = scmp.lt.s32.totalorder %s16, 7
    %s18 = scalar_select %p17, %s16, 7
    %s19 = smul.addr %s18, 2
    %s20 = scalar_lea.vmem %s1, %s19
    %s21 = ssub.s32 0, 0
    %s22 = smul.u32 8, %s21
  $region9: #{bilstm_forward.5} parent=0 // pred_fallthru
    _
  // Predicated region
  $region10: #{bilstm_forward.5} parent=0 // pred_check
    _
  $region11: #{bilstm_forward.5} parent=0 // pred_check_branch
    %24 = sbr.rel (0) target = $region13
  $region12: #{bilstm_forward.5} parent=0 // pred_region
    _
  $region13: #{bilstm_forward.5} parent=0 // pred_fallthru
    _
  // Predicated region
  $region14: #{bilstm_forward.5} parent=0 // pred_check
    _
  $region15: #{bilstm_forward.5} parent=0 // pred_check_branch
    %26 = sbr.rel (0) target = $region17
  $region16: #{bilstm_forward.5} parent=0 // pred_region
    _
  $region17: #{bilstm_forward.5} parent=0 // pred_fallthru
    _
  %s27 = ssub.s32 0, 0
  %s28 = smul.u32 8, %s27
  %p29 = scmp.lt.s32.totalorder %s28, 7
  %s30 = scalar_select %p29, %s28, 7
  %s31 = smul.addr %s30, 2
  %s32 = scalar_lea.vmem %s1, %s31
  %s33 = ssub.s32 0, 0
  %s34 = smul.u32 8, %s33
  %p35 = scmp.lt.s32.totalorder %s34, 7
  %s36 = scalar_select %p35, %s34, 7
  %s37 = smul.addr %s36, 2
  %s38 = scalar_lea.vmem %s5, %s37
  %s39 = ssub.s32 0, 0
  %s40 = smul.u32 8, %s39
  %p41 = scmp.lt.s32.totalorder %s40, 7
  %s42 = scalar_select %p41, %s40, 7
  %s43 = smul.addr %s42, 2
  %s44 = scalar_lea.vmem %s1, %s43
  %s45 = ssub.s32 0, 0
  %s46 = smul.u32 8, %s45
  %s47 = ssub.s32 0, 0
  %s48 = smul.u32 8, %s47
  %p49 = scmp.lt.s32.totalorder %s48, 7
  %s50 = scalar_select %p49, %s48, 7
  %s51 = smul.addr %s50, 2
  %s52 = scalar_lea.vmem %s5, %s51
  %s53 = ssub.s32 0, 0
  %s54 = smul.u32 8, %s53
  %p55 = scmp.eq.s32.totalorder 0, 0
  // Predicated region
  $region18: #{bilstm_forward.5} parent=0 // pred_check
    %p56 = pneg %p55
  $region19: #{bilstm_forward.5} parent=0 // pred_check_branch
    %58 = sbr.rel (%p56) target = $region21
  $region20: #{bilstm_forward.5} parent=0 // pred_region
    %vm59 = vcmask 254976
    %60 = vst.msk [vmem:[#allocation2] sm:$0x3] %vm59, 0.0
    %61 = vst.msk [vmem:[#allocation3] sm:$0x3] %vm59, 0.0
    %62 = vst.msk [vmem:[#allocation4] sm:$0x3] %vm59, 0.0
    %63 = vst.msk [vmem:[#allocation5] sm:$0x3] %vm59, 0.0
  $region21: #{bilstm_forward.5} parent=0 // pred_fallthru
    _
  %v64 = vld [vmem:[#allocation2] sm:$0x3]
  %v65 = vld [vmem:[#allocation3] sm:$0x3]
  %v66 = vld [vmem:[#allocation4] sm:$0x3]
  %v67 = vld [vmem:[#allocation5] sm:$0x3]
  %v68 = vld [vmem:[%s2] sm:$0xff]
  %v69 = vld [vmem:[%s2 + $0x8] sm:$0xff]
  %v70 = vld [vmem:[%s2 + $0x10] sm:$0xff]
  %v71 = vld [vmem:[%s2 + $0x18] sm:$0xff]
  %v72 = vld [vmem:[%s0] sm:$0x3]
  %vm73 = vcmask 261120
  %v75 = vsel %vm73, %v64, 0
  %77 = vmatpush.msra.mxu0 0.0
  %78 = vmatpush.msra.mxu0 0.0
  %79 = vmatpush.msra.mxu0 0.0
  %80 = vmatpush.msra.mxu0 0.0
  %81 = vmatpush.msra.mxu0 0.0
  %82 = vmatpush.msra.mxu0 0.0
  %83 = vmatpush.msra.mxu0 0.0
  %84 = vmatpush.msra.mxu0 0.0
  %85 = vmatpush.msra.mxu0 0.0
  %86 = vmatpush.msra.mxu0 0.0
  %87 = vmatpush.msra.mxu0 0.0
  %88 = vmatpush.msra.mxu0 0.0
  %89 = vmatpush.msra.mxu0 %v71
  %90 = vmatpush.msra.mxu0 %v70
  %91 = vmatpush.msra.mxu0 %v69
  %92 = vmatpush.msra.mxu0 %v68
  %93 = vmatmul.f32.gmra.mxu0 %v75
  %v94 = vpop.f32.mrf.mxu0
  %v95 = vadd.f32 %v72, %v94
  %96 = vdwg.mxu0
  %v97 = vld [vmem:[%s3] sm:$0xff]
  %v98 = vld [vmem:[%s3 + $0x8] sm:$0xff]
  %v99 = vld [vmem:[%s3 + $0x10] sm:$0xff]
  %v100 = vld [vmem:[%s3 + $0x18] sm:$0xff]
  %s101 = scalar_lea.vmem %s44, 14
  %v102 = vld [vmem:[%s101] sm:$0x3]
  %v104 = vsel %vm73, %v66, 0
  %106 = vmatpush.msra.mxu0 0.0
  %107 = vmatpush.msra.mxu0 0.0
  %108 = vmatpush.msra.mxu0 0.0
  %109 = vmatpush.msra.mxu0 0.0
  %110 = vmatpush.msra.mxu0 0.0
  %111 = vmatpush.msra.mxu0 0.0
  %112 = vmatpush.msra.mxu0 0.0
  %113 = vmatpush.msra.mxu0 0.0
  %114 = vmatpush.msra.mxu0 0.0
  %115 = vmatpush.msra.mxu0 0.0
  %116 = vmatpush.msra.mxu0 0.0
  %117 = vmatpush.msra.mxu0 0.0
  %118 = vmatpush.msra.mxu0 %v100
  %119 = vmatpush.msra.mxu0 %v99
  %120 = vmatpush.msra.mxu0 %v98
  %121 = vmatpush.msra.mxu0 %v97
  %122 = vmatmul.f32.gmra.mxu0 %v104
  %v123 = vpop.f32.mrf.mxu0
  %v124 = vadd.f32 %v102, %v123
  %125 = vdwg.mxu0
  %v126 = vxor.u32 %v95, 2147483648
  %v127 = vmul.f32 %v126, 1.442695
  %v128 = vpow.pop %v127
  %v129 = vadd.f32 %v128, 1.0
  %v130 = vrcp.pop %v129
  %v131 = vmul.f32 %v129, %v130
  %v132 = vsub.f32 1.0, %v131
  %v133 = vmul.f32 %v130, %v132
  %v134 = vadd.f32 %v130, %v133
  %vm135 = vweird.f32 %v129
  %vm136 = vweird.f32 %v130
  %vm137 = vmor %vm135, %vm136
  %v138 = vsel %vm137, %v130, %v134
  %v139 = vand.u32 2147483647, %v129
  %vm140 = vcmp.eq.f32.partialorder %v139, 8.507059e+37
  %v141 = vand.u32 %v129, 2147483648
  %v142 = vor.u32 1.1754944e-38, %v141
  %v143 = vsel %vm140, %v142, %v138
  %v144 = vmul.f32 1.0, %v143
  %v145 = vtanh.pop %v95
  %147 = vrot.lane.b32.xlu0 %v65, 32
  %v148 = vpop.permute.xlu0 %147
  %v150 = vmul.f32 %v144, %v148
  %152 = vrot.lane.b32.xlu0 %v145, 64
  %v153 = vpop.permute.xlu0 %152
  %v155 = vmul.f32 %v144, %v153
  %157 = vrot.lane.b32.xlu0 %v155, 32
  %v158 = vpop.permute.xlu0 %157
  %v160 = vadd.f32 %v150, %v158
  %v161 = vtanh.pop %v160
  %163 = vrot.lane.b32.xlu0 %v161, 64
  %v164 = vpop.permute.xlu0 %163
  %v166 = vmul.f32 %v144, %v164
  %v167 = vxor.u32 %v124, 2147483648
  %v168 = vmul.f32 %v167, 1.442695
  %v169 = vpow.pop %v168
  %v170 = vadd.f32 %v169, 1.0
  %v171 = vrcp.pop %v170
  %v172 = vmul.f32 %v170, %v171
  %v173 = vsub.f32 1.0, %v172
  %v174 = vmul.f32 %v171, %v173
  %v175 = vadd.f32 %v171, %v174
  %vm176 = vweird.f32 %v170
  %vm177 = vweird.f32 %v171
  %vm178 = vmor %vm176, %vm177
  %v179 = vsel %vm178, %v171, %v175
  %v180 = vand.u32 2147483647, %v170
  %vm181 = vcmp.eq.f32.partialorder %v180, 8.507059e+37
  %v182 = vand.u32 %v170, 2147483648
  %v183 = vor.u32 1.1754944e-38, %v182
  %v184 = vsel %vm181, %v183, %v179
  %v185 = vmul.f32 1.0, %v184
  %v186 = vtanh.pop %v124
  %188 = vrot.lane.b32.xlu0 %v67, 32
  %v189 = vpop.permute.xlu0 %188
  %v191 = vmul.f32 %v185, %v189
  %193 = vrot.lane.b32.xlu0 %v186, 64
  %v194 = vpop.permute.xlu0 %193
  %v196 = vmul.f32 %v185, %v194
  %198 = vrot.lane.b32.xlu0 %v196, 32
  %v199 = vpop.permute.xlu0 %198
  %v201 = vadd.f32 %v191, %v199
  %v202 = vtanh.pop %v201
  %204 = vrot.lane.b32.xlu0 %v202, 64
  %v205 = vpop.permute.xlu0 %204
  %v207 = vmul.f32 %v185, %v205
  %209 = vrot.lane.b32.xlu0 %v166, 32
  %v210 = vpop.permute.xlu0 %209
  %vm212 = vcmask 254976
  %213 = vst.msk [vmem:[%s4] sm:$0x3] %vm212, %v210
  %215 = vrot.lane.b32.xlu0 %v207, 32
  %v216 = vpop.permute.xlu0 %215
  %s218 = scalar_lea.vmem %s52, 14
  %219 = vst.msk [vmem:[%s218] sm:$0x3] %vm212, %v216
  %v220 = vld [vmem:[%s2] sm:$0xff]
  %v221 = vld [vmem:[%s2 + $0x8] sm:$0xff]
  %v222 = vld [vmem:[%s2 + $0x10] sm:$0xff]
  %v223 = vld [vmem:[%s2 + $0x18] sm:$0xff]
  %s224 = scalar_lea.vmem %s0, 2
  %v225 = vld [vmem:[%s224] sm:$0x3]
  %v226 = vsel %vm73, %v210, 0
  %228 = vmatpush.msra.mxu0 0.0
  %229 = vmatpush.msra.mxu0 0.0
  %230 = vmatpush.msra.mxu0 0.0
  %231 = vmatpush.msra.mxu0 0.0
  %232 = vmatpush.msra.mxu0 0.0
  %233 = vmatpush.msra.mxu0 0.0
  %234 = vmatpush.msra.mxu0 0.0
  %235 = vmatpush.msra.mxu0 0.0
  %236 = vmatpush.msra.mxu0 0.0
  %237 = vmatpush.msra.mxu0 0.0
  %238 = vmatpush.msra.mxu0 0.0
  %239 = vmatpush.msra.mxu0 0.0
  %240 = vmatpush.msra.mxu0 %v223
  %241 = vmatpush.msra.mxu0 %v222
  %242 = vmatpush.msra.mxu0 %v221
  %243 = vmatpush.msra.mxu0 %v220
  %244 = vmatmul.f32.gmra.mxu0 %v226
  %v245 = vpop.f32.mrf.mxu0
  %v246 = vadd.f32 %v225, %v245
  %247 = vdwg.mxu0
  %v248 = vld [vmem:[%s3] sm:$0xff]
  %v249 = vld [vmem:[%s3 + $0x8] sm:$0xff]
  %v250 = vld [vmem:[%s3 + $0x10] sm:$0xff]
  %v251 = vld [vmem:[%s3 + $0x18] sm:$0xff]
  %s252 = scalar_lea.vmem %s44, 12
  %v253 = vld [vmem:[%s252] sm:$0x3]
  %v254 = vsel %vm73, %v216, 0
  %256 = vmatpush.msra.mxu0 0.0
  %257 = vmatpush.msra.mxu0 0.0
  %258 = vmatpush.msra.mxu0 0.0
  %259 = vmatpush.msra.mxu0 0.0
  %260 = vmatpush.msra.mxu0 0.0
  %261 = vmatpush.msra.mxu0 0.0
  %262 = vmatpush.msra.mxu0 0.0
  %263 = vmatpush.msra.mxu0 0.0
  %264 = vmatpush.msra.mxu0 0.0
  %265 = vmatpush.msra.mxu0 0.0
  %266 = vmatpush.msra.mxu0 0.0
  %267 = vmatpush.msra.mxu0 0.0
  %268 = vmatpush.msra.mxu0 %v251
  %269 = vmatpush.msra.mxu0 %v250
  %270 = vmatpush.msra.mxu0 %v249
  %271 = vmatpush.msra.mxu0 %v248
  %272 = vmatmul.f32.gmra.mxu0 %v254
  %v273 = vpop.f32.mrf.mxu0
  %v274 = vadd.f32 %v253, %v273
  %275 = vdwg.mxu0
  %v276 = vxor.u32 %v246, 2147483648
  %v277 = vmul.f32 %v276, 1.442695
  %v278 = vpow.pop %v277
  %v279 = vadd.f32 %v278, 1.0
  %v280 = vrcp.pop %v279
  %v281 = vmul.f32 %v279, %v280
  %v282 = vsub.f32 1.0, %v281
  %v283 = vmul.f32 %v280, %v282
  %v284 = vadd.f32 %v280, %v283
  %vm285 = vweird.f32 %v279
  %vm286 = vweird.f32 %v280
  %vm287 = vmor %vm285, %vm286
  %v288 = vsel %vm287, %v280, %v284
  %v289 = vand.u32 2147483647, %v279
  %vm290 = vcmp.eq.f32.partialorder %v289, 8.507059e+37
  %v291 = vand.u32 %v279, 2147483648
  %v292 = vor.u32 1.1754944e-38, %v291
  %v293 = vsel %vm290, %v292, %v288
  %v294 = vmul.f32 1.0, %v293
  %v295 = vtanh.pop %v246
  %v296 = vmul.f32 %v294, %v160
  %298 = vrot.lane.b32.xlu0 %v295, 64
  %v299 = vpop.permute.xlu0 %298
  %v301 = vmul.f32 %v294, %v299
  %303 = vrot.lane.b32.xlu0 %v301, 32
  %v304 = vpop.permute.xlu0 %303
  %v306 = vadd.f32 %v296, %v304
  %v307 = vtanh.pop %v306
  %309 = vrot.lane.b32.xlu0 %v307, 64
  %v310 = vpop.permute.xlu0 %309
  %v312 = vmul.f32 %v294, %v310
  %v313 = vxor.u32 %v274, 2147483648
  %v314 = vmul.f32 %v313, 1.442695
  %v315 = vpow.pop %v314
  %v316 = vadd.f32 %v315, 1.0
  %v317 = vrcp.pop %v316
  %v318 = vmul.f32 %v316, %v317
  %v319 = vsub.f32 1.0, %v318
  %v320 = vmul.f32 %v317, %v319
  %v321 = vadd.f32 %v317, %v320
  %vm322 = vweird.f32 %v316
  %vm323 = vweird.f32 %v317
  %vm324 = vmor %vm322, %vm323
  %v325 = vsel %vm324, %v317, %v321
  %v326 = vand.u32 2147483647, %v316
  %vm327 = vcmp.eq.f32.partialorder %v326, 8.507059e+37
  %v328 = vand.u32 %v316, 2147483648
  %v329 = vor.u32 1.1754944e-38, %v328
  %v330 = vsel %vm327, %v329, %v325
  %v331 = vmul.f32 1.0, %v330
  %v332 = vtanh.pop %v274
  %v333 = vmul.f32 %v331, %v201
  %335 = vrot.lane.b32.xlu0 %v332, 64
  %v336 = vpop.permute.xlu0 %335
  %v338 = vmul.f32 %v331, %v336
  %340 = vrot.lane.b32.xlu0 %v338, 32
  %v341 = vpop.permute.xlu0 %340
  %v343 = vadd.f32 %v333, %v341
  %v344 = vtanh.pop %v343
  %346 = vrot.lane.b32.xlu0 %v344, 64
  %v347 = vpop.permute.xlu0 %346
  %v349 = vmul.f32 %v331, %v347
  %351 = vrot.lane.b32.xlu0 %v312, 32
  %v352 = vpop.permute.xlu0 %351
  %s354 = scalar_lea.vmem %s4, 2
  %355 = vst.msk [vmem:[%s354] sm:$0x3] %vm212, %v352
  %357 = vrot.lane.b32.xlu0 %v349, 32
  %v358 = vpop.permute.xlu0 %357
  %s360 = scalar_lea.vmem %s52, 12
  %361 = vst.msk [vmem:[%s360] sm:$0x3] %vm212, %v358
  %v362 = vld [vmem:[%s2] sm:$0xff]
  %v363 = vld [vmem:[%s2 + $0x8] sm:$0xff]
  %v364 = vld [vmem:[%s2 + $0x10] sm:$0xff]
  %v365 = vld [vmem:[%s2 + $0x18] sm:$0xff]
  %s366 = scalar_lea.vmem %s0, 4
  %v367 = vld [vmem:[%s366] sm:$0x3]
  %v368 = vsel %vm73, %v352, 0
  %370 = vmatpush.msra.mxu0 0.0
  %371 = vmatpush.msra.mxu0 0.0
  %372 = vmatpush.msra.mxu0 0.0
  %373 = vmatpush.msra.mxu0 0.0
  %374 = vmatpush.msra.mxu0 0.0
  %375 = vmatpush.msra.mxu0 0.0
  %376 = vmatpush.msra.mxu0 0.0
  %377 = vmatpush.msra.mxu0 0.0
  %378 = vmatpush.msra.mxu0 0.0
  %379 = vmatpush.msra.mxu0 0.0
  %380 = vmatpush.msra.mxu0 0.0
  %381 = vmatpush.msra.mxu0 0.0
  %382 = vmatpush.msra.mxu0 %v365
  %383 = vmatpush.msra.mxu0 %v364
  %384 = vmatpush.msra.mxu0 %v363
  %385 = vmatpush.msra.mxu0 %v362
  %386 = vmatmul.f32.gmra.mxu0 %v368
  %v387 = vpop.f32.mrf.mxu0
  %v388 = vadd.f32 %v367, %v387
  %389 = vdwg.mxu0
  %v390 = vld [vmem:[%s3] sm:$0xff]
  %v391 = vld [vmem:[%s3 + $0x8] sm:$0xff]
  %v392 = vld [vmem:[%s3 + $0x10] sm:$0xff]
  %v393 = vld [vmem:[%s3 + $0x18] sm:$0xff]
  %s394 = scalar_lea.vmem %s44, 10
  %v395 = vld [vmem:[%s394] sm:$0x3]
  %v396 = vsel %vm73, %v358, 0
  %398 = vmatpush.msra.mxu0 0.0
  %399 = vmatpush.msra.mxu0 0.0
  %400 = vmatpush.msra.mxu0 0.0
  %401 = vmatpush.msra.mxu0 0.0
  %402 = vmatpush.msra.mxu0 0.0
  %403 = vmatpush.msra.mxu0 0.0
  %404 = vmatpush.msra.mxu0 0.0
  %405 = vmatpush.msra.mxu0 0.0
  %406 = vmatpush.msra.mxu0 0.0
  %407 = vmatpush.msra.mxu0 0.0
  %408 = vmatpush.msra.mxu0 0.0
  %409 = vmatpush.msra.mxu0 0.0
  %410 = vmatpush.msra.mxu0 %v393
  %411 = vmatpush.msra.mxu0 %v392
  %412 = vmatpush.msra.mxu0 %v391
  %413 = vmatpush.msra.mxu0 %v390
  %414 = vmatmul.f32.gmra.mxu0 %v396
  %v415 = vpop.f32.mrf.mxu0
  %v416 = vadd.f32 %v395, %v415
  %417 = vdwg.mxu0
  %v418 = vxor.u32 %v388, 2147483648
  %v419 = vmul.f32 %v418, 1.442695
  %v420 = vpow.pop %v419
  %v421 = vadd.f32 %v420, 1.0
  %v422 = vrcp.pop %v421
  %v423 = vmul.f32 %v421, %v422
  %v424 = vsub.f32 1.0, %v423
  %v425 = vmul.f32 %v422, %v424
  %v426 = vadd.f32 %v422, %v425
  %vm427 = vweird.f32 %v421
  %vm428 = vweird.f32 %v422
  %vm429 = vmor %vm427, %vm428
  %v430 = vsel %vm429, %v422, %v426
  %v431 = vand.u32 2147483647, %v421
  %vm432 = vcmp.eq.f32.partialorder %v431, 8.507059e+37
  %v433 = vand.u32 %v421, 2147483648
  %v434 = vor.u32 1.1754944e-38, %v433
  %v435 = vsel %vm432, %v434, %v430
  %v436 = vmul.f32 1.0, %v435
  %v437 = vtanh.pop %v388
  %v438 = vmul.f32 %v436, %v306
  %440 = vrot.lane.b32.xlu0 %v437, 64
  %v441 = vpop.permute.xlu0 %440
  %v443 = vmul.f32 %v436, %v441
  %445 = vrot.lane.b32.xlu0 %v443, 32
  %v446 = vpop.permute.xlu0 %445
  %v448 = vadd.f32 %v438, %v446
  %v449 = vtanh.pop %v448
  %451 = vrot.lane.b32.xlu0 %v449, 64
  %v452 = vpop.permute.xlu0 %451
  %v454 = vmul.f32 %v436, %v452
  %v455 = vxor.u32 %v416, 2147483648
  %v456 = vmul.f32 %v455, 1.442695
  %v457 = vpow.pop %v456
  %v458 = vadd.f32 %v457, 1.0
  %v459 = vrcp.pop %v458
  %v460 = vmul.f32 %v458, %v459
  %v461 = vsub.f32 1.0, %v460
  %v462 = vmul.f32 %v459, %v461
  %v463 = vadd.f32 %v459, %v462
  %vm464 = vweird.f32 %v458
  %vm465 = vweird.f32 %v459
  %vm466 = vmor %vm464, %vm465
  %v467 = vsel %vm466, %v459, %v463
  %v468 = vand.u32 2147483647, %v458
  %vm469 = vcmp.eq.f32.partialorder %v468, 8.507059e+37
  %v470 = vand.u32 %v458, 2147483648
  %v471 = vor.u32 1.1754944e-38, %v470
  %v472 = vsel %vm469, %v471, %v467
  %v473 = vmul.f32 1.0, %v472
  %v474 = vtanh.pop %v416
  %v475 = vmul.f32 %v473, %v343
  %477 = vrot.lane.b32.xlu0 %v474, 64
  %v478 = vpop.permute.xlu0 %477
  %v480 = vmul.f32 %v473, %v478
  %482 = vrot.lane.b32.xlu0 %v480, 32
  %v483 = vpop.permute.xlu0 %482
  %v485 = vadd.f32 %v475, %v483
  %v486 = vtanh.pop %v485
  %488 = vrot.lane.b32.xlu0 %v486, 64
  %v489 = vpop.permute.xlu0 %488
  %v491 = vmul.f32 %v473, %v489
  %493 = vrot.lane.b32.xlu0 %v454, 32
  %v494 = vpop.permute.xlu0 %493
  %s496 = scalar_lea.vmem %s4, 4
  %497 = vst.msk [vmem:[%s496] sm:$0x3] %vm212, %v494
  %499 = vrot.lane.b32.xlu0 %v491, 32
  %v500 = vpop.permute.xlu0 %499
  %s502 = scalar_lea.vmem %s52, 10
  %503 = vst.msk [vmem:[%s502] sm:$0x3] %vm212, %v500
  %v504 = vld [vmem:[%s2] sm:$0xff]
  %v505 = vld [vmem:[%s2 + $0x8] sm:$0xff]
  %v506 = vld [vmem:[%s2 + $0x10] sm:$0xff]
  %v507 = vld [vmem:[%s2 + $0x18] sm:$0xff]
  %s508 = scalar_lea.vmem %s0, 6
  %v509 = vld [vmem:[%s508] sm:$0x3]
  %v510 = vsel %vm73, %v494, 0
  %512 = vmatpush.msra.mxu0 0.0
  %513 = vmatpush.msra.mxu0 0.0
  %514 = vmatpush.msra.mxu0 0.0
  %515 = vmatpush.msra.mxu0 0.0
  %516 = vmatpush.msra.mxu0 0.0
  %517 = vmatpush.msra.mxu0 0.0
  %518 = vmatpush.msra.mxu0 0.0
  %519 = vmatpush.msra.mxu0 0.0
  %520 = vmatpush.msra.mxu0 0.0
  %521 = vmatpush.msra.mxu0 0.0
  %522 = vmatpush.msra.mxu0 0.0
  %523 = vmatpush.msra.mxu0 0.0
  %524 = vmatpush.msra.mxu0 %v507
  %525 = vmatpush.msra.mxu0 %v506
  %526 = vmatpush.msra.mxu0 %v505
  %527 = vmatpush.msra.mxu0 %v504
  %528 = vmatmul.f32.gmra.mxu0 %v510
  %v529 = vpop.f32.mrf.mxu0
  %v530 = vadd.f32 %v509, %v529
  %531 = vdwg.mxu0
  %v532 = vld [vmem:[%s3] sm:$0xff]
  %v533 = vld [vmem:[%s3 + $0x8] sm:$0xff]
  %v534 = vld [vmem:[%s3 + $0x10] sm:$0xff]
  %v535 = vld [vmem:[%s3 + $0x18] sm:$0xff]
  %s536 = scalar_lea.vmem %s44, 8
  %v537 = vld [vmem:[%s536] sm:$0x3]
  %v538 = vsel %vm73, %v500, 0
  %540 = vmatpush.msra.mxu0 0.0
  %541 = vmatpush.msra.mxu0 0.0
  %542 = vmatpush.msra.mxu0 0.0
  %543 = vmatpush.msra.mxu0 0.0
  %544 = vmatpush.msra.mxu0 0.0
  %545 = vmatpush.msra.mxu0 0.0
  %546 = vmatpush.msra.mxu0 0.0
  %547 = vmatpush.msra.mxu0 0.0
  %548 = vmatpush.msra.mxu0 0.0
  %549 = vmatpush.msra.mxu0 0.0
  %550 = vmatpush.msra.mxu0 0.0
  %551 = vmatpush.msra.mxu0 0.0
  %552 = vmatpush.msra.mxu0 %v535
  %553 = vmatpush.msra.mxu0 %v534
  %554 = vmatpush.msra.mxu0 %v533
  %555 = vmatpush.msra.mxu0 %v532
  %556 = vmatmul.f32.gmra.mxu0 %v538
  %v557 = vpop.f32.mrf.mxu0
  %v558 = vadd.f32 %v537, %v557
  %559 = vdwg.mxu0
  %v560 = vxor.u32 %v530, 2147483648
  %v561 = vmul.f32 %v560, 1.442695
  %v562 = vpow.pop %v561
  %v563 = vadd.f32 %v562, 1.0
  %v564 = vrcp.pop %v563
  %v565 = vmul.f32 %v563, %v564
  %v566 = vsub.f32 1.0, %v565
  %v567 = vmul.f32 %v564, %v566
  %v568 = vadd.f32 %v564, %v567
  %vm569 = vweird.f32 %v563
  %vm570 = vweird.f32 %v564
  %vm571 = vmor %vm569, %vm570
  %v572 = vsel %vm571, %v564, %v568
  %v573 = vand.u32 2147483647, %v563
  %vm574 = vcmp.eq.f32.partialorder %v573, 8.507059e+37
  %v575 = vand.u32 %v563, 2147483648
  %v576 = vor.u32 1.1754944e-38, %v575
  %v577 = vsel %vm574, %v576, %v572
  %v578 = vmul.f32 1.0, %v577
  %v579 = vtanh.pop %v530
  %v580 = vmul.f32 %v578, %v448
  %582 = vrot.lane.b32.xlu0 %v579, 64
  %v583 = vpop.permute.xlu0 %582
  %v585 = vmul.f32 %v578, %v583
  %587 = vrot.lane.b32.xlu0 %v585, 32
  %v588 = vpop.permute.xlu0 %587
  %v590 = vadd.f32 %v580, %v588
  %v591 = vtanh.pop %v590
  %593 = vrot.lane.b32.xlu0 %v591, 64
  %v594 = vpop.permute.xlu0 %593
  %v596 = vmul.f32 %v578, %v594
  %v597 = vxor.u32 %v558, 2147483648
  %v598 = vmul.f32 %v597, 1.442695
  %v599 = vpow.pop %v598
  %v600 = vadd.f32 %v599, 1.0
  %v601 = vrcp.pop %v600
  %v602 = vmul.f32 %v600, %v601
  %v603 = vsub.f32 1.0, %v602
  %v604 = vmul.f32 %v601, %v603
  %v605 = vadd.f32 %v601, %v604
  %vm606 = vweird.f32 %v600
  %vm607 = vweird.f32 %v601
  %vm608 = vmor %vm606, %vm607
  %v609 = vsel %vm608, %v601, %v605
  %v610 = vand.u32 2147483647, %v600
  %vm611 = vcmp.eq.f32.partialorder %v610, 8.507059e+37
  %v612 = vand.u32 %v600, 2147483648
  %v613 = vor.u32 1.1754944e-38, %v612
  %v614 = vsel %vm611, %v613, %v609
  %v615 = vmul.f32 1.0, %v614
  %v616 = vtanh.pop %v558
  %v617 = vmul.f32 %v615, %v485
  %619 = vrot.lane.b32.xlu0 %v616, 64
  %v620 = vpop.permute.xlu0 %619
  %v622 = vmul.f32 %v615, %v620
  %624 = vrot.lane.b32.xlu0 %v622, 32
  %v625 = vpop.permute.xlu0 %624
  %v627 = vadd.f32 %v617, %v625
  %v628 = vtanh.pop %v627
  %630 = vrot.lane.b32.xlu0 %v628, 64
  %v631 = vpop.permute.xlu0 %630
  %v633 = vmul.f32 %v615, %v631
  %635 = vrot.lane.b32.xlu0 %v596, 32
  %v636 = vpop.permute.xlu0 %635
  %s638 = scalar_lea.vmem %s4, 6
  %639 = vst.msk [vmem:[%s638] sm:$0x3] %vm212, %v636
  %641 = vrot.lane.b32.xlu0 %v633, 32
  %v642 = vpop.permute.xlu0 %641
  %s644 = scalar_lea.vmem %s52, 8
  %645 = vst.msk [vmem:[%s644] sm:$0x3] %vm212, %v642
  %v646 = vld [vmem:[%s2] sm:$0xff]
  %v647 = vld [vmem:[%s2 + $0x8] sm:$0xff]
  %v648 = vld [vmem:[%s2 + $0x10] sm:$0xff]
  %v649 = vld [vmem:[%s2 + $0x18] sm:$0xff]
  %s650 = scalar_lea.vmem %s0, 8
  %v651 = vld [vmem:[%s650] sm:$0x3]
  %v652 = vsel %vm73, %v636, 0
  %654 = vmatpush.msra.mxu0 0.0
  %655 = vmatpush.msra.mxu0 0.0
  %656 = vmatpush.msra.mxu0 0.0
  %657 = vmatpush.msra.mxu0 0.0
  %658 = vmatpush.msra.mxu0 0.0
  %659 = vmatpush.msra.mxu0 0.0
  %660 = vmatpush.msra.mxu0 0.0
  %661 = vmatpush.msra.mxu0 0.0
  %662 = vmatpush.msra.mxu0 0.0
  %663 = vmatpush.msra.mxu0 0.0
  %664 = vmatpush.msra.mxu0 0.0
  %665 = vmatpush.msra.mxu0 0.0
  %666 = vmatpush.msra.mxu0 %v649
  %667 = vmatpush.msra.mxu0 %v648
  %668 = vmatpush.msra.mxu0 %v647
  %669 = vmatpush.msra.mxu0 %v646
  %670 = vmatmul.f32.gmra.mxu0 %v652
  %v671 = vpop.f32.mrf.mxu0
  %v672 = vadd.f32 %v651, %v671
  %673 = vdwg.mxu0
  %v674 = vld [vmem:[%s3] sm:$0xff]
  %v675 = vld [vmem:[%s3 + $0x8] sm:$0xff]
  %v676 = vld [vmem:[%s3 + $0x10] sm:$0xff]
  %v677 = vld [vmem:[%s3 + $0x18] sm:$0xff]
  %s678 = scalar_lea.vmem %s44, 6
  %v679 = vld [vmem:[%s678] sm:$0x3]
  %v680 = vsel %vm73, %v642, 0
  %682 = vmatpush.msra.mxu0 0.0
  %683 = vmatpush.msra.mxu0 0.0
  %684 = vmatpush.msra.mxu0 0.0
  %685 = vmatpush.msra.mxu0 0.0
  %686 = vmatpush.msra.mxu0 0.0
  %687 = vmatpush.msra.mxu0 0.0
  %688 = vmatpush.msra.mxu0 0.0
  %689 = vmatpush.msra.mxu0 0.0
  %690 = vmatpush.msra.mxu0 0.0
  %691 = vmatpush.msra.mxu0 0.0
  %692 = vmatpush.msra.mxu0 0.0
  %693 = vmatpush.msra.mxu0 0.0
  %694 = vmatpush.msra.mxu0 %v677
  %695 = vmatpush.msra.mxu0 %v676
  %696 = vmatpush.msra.mxu0 %v675
  %697 = vmatpush.msra.mxu0 %v674
  %698 = vmatmul.f32.gmra.mxu0 %v680
  %v699 = vpop.f32.mrf.mxu0
  %v700 = vadd.f32 %v679, %v699
  %701 = vdwg.mxu0
  %v702 = vxor.u32 %v672, 2147483648
  %v703 = vmul.f32 %v702, 1.442695
  %v704 = vpow.pop %v703
  %v705 = vadd.f32 %v704, 1.0
  %v706 = vrcp.pop %v705
  %v707 = vmul.f32 %v705, %v706
  %v708 = vsub.f32 1.0, %v707
  %v709 = vmul.f32 %v706, %v708
  %v710 = vadd.f32 %v706, %v709
  %vm711 = vweird.f32 %v705
  %vm712 = vweird.f32 %v706
  %vm713 = vmor %vm711, %vm712
  %v714 = vsel %vm713, %v706, %v710
  %v715 = vand.u32 2147483647, %v705
  %vm716 = vcmp.eq.f32.partialorder %v715, 8.507059e+37
  %v717 = vand.u32 %v705, 2147483648
  %v718 = vor.u32 1.1754944e-38, %v717
  %v719 = vsel %vm716, %v718, %v714
  %v720 = vmul.f32 1.0, %v719
  %v721 = vtanh.pop %v672
  %v722 = vmul.f32 %v720, %v590
  %724 = vrot.lane.b32.xlu0 %v721, 64
  %v725 = vpop.permute.xlu0 %724
  %v727 = vmul.f32 %v720, %v725
  %729 = vrot.lane.b32.xlu0 %v727, 32
  %v730 = vpop.permute.xlu0 %729
  %v732 = vadd.f32 %v722, %v730
  %v733 = vtanh.pop %v732
  %735 = vrot.lane.b32.xlu0 %v733, 64
  %v736 = vpop.permute.xlu0 %735
  %v738 = vmul.f32 %v720, %v736
  %v739 = vxor.u32 %v700, 2147483648
  %v740 = vmul.f32 %v739, 1.442695
  %v741 = vpow.pop %v740
  %v742 = vadd.f32 %v741, 1.0
  %v743 = vrcp.pop %v742
  %v744 = vmul.f32 %v742, %v743
  %v745 = vsub.f32 1.0, %v744
  %v746 = vmul.f32 %v743, %v745
  %v747 = vadd.f32 %v743, %v746
  %vm748 = vweird.f32 %v742
  %vm749 = vweird.f32 %v743
  %vm750 = vmor %vm748, %vm749
  %v751 = vsel %vm750, %v743, %v747
  %v752 = vand.u32 2147483647, %v742
  %vm753 = vcmp.eq.f32.partialorder %v752, 8.507059e+37
  %v754 = vand.u32 %v742, 2147483648
  %v755 = vor.u32 1.1754944e-38, %v754
  %v756 = vsel %vm753, %v755, %v751
  %v757 = vmul.f32 1.0, %v756
  %v758 = vtanh.pop %v700
  %v759 = vmul.f32 %v757, %v627
  %761 = vrot.lane.b32.xlu0 %v758, 64
  %v762 = vpop.permute.xlu0 %761
  %v764 = vmul.f32 %v757, %v762
  %766 = vrot.lane.b32.xlu0 %v764, 32
  %v767 = vpop.permute.xlu0 %766
  %v769 = vadd.f32 %v759, %v767
  %v770 = vtanh.pop %v769
  %772 = vrot.lane.b32.xlu0 %v770, 64
  %v773 = vpop.permute.xlu0 %772
  %v775 = vmul.f32 %v757, %v773
  %777 = vrot.lane.b32.xlu0 %v738, 32
  %v778 = vpop.permute.xlu0 %777
  %s780 = scalar_lea.vmem %s4, 8
  %781 = vst.msk [vmem:[%s780] sm:$0x3] %vm212, %v778
  %783 = vrot.lane.b32.xlu0 %v775, 32
  %v784 = vpop.permute.xlu0 %783
  %s786 = scalar_lea.vmem %s52, 6
  %787 = vst.msk [vmem:[%s786] sm:$0x3] %vm212, %v784
  %v788 = vld [vmem:[%s2] sm:$0xff]
  %v789 = vld [vmem:[%s2 + $0x8] sm:$0xff]
  %v790 = vld [vmem:[%s2 + $0x10] sm:$0xff]
  %v791 = vld [vmem:[%s2 + $0x18] sm:$0xff]
  %s792 = scalar_lea.vmem %s0, 10
  %v793 = vld [vmem:[%s792] sm:$0x3]
  %v794 = vsel %vm73, %v778, 0
  %796 = vmatpush.msra.mxu0 0.0
  %797 = vmatpush.msra.mxu0 0.0
  %798 = vmatpush.msra.mxu0 0.0
  %799 = vmatpush.msra.mxu0 0.0
  %800 = vmatpush.msra.mxu0 0.0
  %801 = vmatpush.msra.mxu0 0.0
  %802 = vmatpush.msra.mxu0 0.0
  %803 = vmatpush.msra.mxu0 0.0
  %804 = vmatpush.msra.mxu0 0.0
  %805 = vmatpush.msra.mxu0 0.0
  %806 = vmatpush.msra.mxu0 0.0
  %807 = vmatpush.msra.mxu0 0.0
  %808 = vmatpush.msra.mxu0 %v791
  %809 = vmatpush.msra.mxu0 %v790
  %810 = vmatpush.msra.mxu0 %v789
  %811 = vmatpush.msra.mxu0 %v788
  %812 = vmatmul.f32.gmra.mxu0 %v794
  %v813 = vpop.f32.mrf.mxu0
  %v814 = vadd.f32 %v793, %v813
  %815 = vdwg.mxu0
  %v816 = vld [vmem:[%s3] sm:$0xff]
  %v817 = vld [vmem:[%s3 + $0x8] sm:$0xff]
  %v818 = vld [vmem:[%s3 + $0x10] sm:$0xff]
  %v819 = vld [vmem:[%s3 + $0x18] sm:$0xff]
  %s820 = scalar_lea.vmem %s44, 4
  %v821 = vld [vmem:[%s820] sm:$0x3]
  %v822 = vsel %vm73, %v784, 0
  %824 = vmatpush.msra.mxu0 0.0
  %825 = vmatpush.msra.mxu0 0.0
  %826 = vmatpush.msra.mxu0 0.0
  %827 = vmatpush.msra.mxu0 0.0
  %828 = vmatpush.msra.mxu0 0.0
  %829 = vmatpush.msra.mxu0 0.0
  %830 = vmatpush.msra.mxu0 0.0
  %831 = vmatpush.msra.mxu0 0.0
  %832 = vmatpush.msra.mxu0 0.0
  %833 = vmatpush.msra.mxu0 0.0
  %834 = vmatpush.msra.mxu0 0.0
  %835 = vmatpush.msra.mxu0 0.0
  %836 = vmatpush.msra.mxu0 %v819
  %837 = vmatpush.msra.mxu0 %v818
  %838 = vmatpush.msra.mxu0 %v817
  %839 = vmatpush.msra.mxu0 %v816
  %840 = vmatmul.f32.gmra.mxu0 %v822
  %v841 = vpop.f32.mrf.mxu0
  %v842 = vadd.f32 %v821, %v841
  %843 = vdwg.mxu0
  %v844 = vxor.u32 %v814, 2147483648
  %v845 = vmul.f32 %v844, 1.442695
  %v846 = vpow.pop %v845
  %v847 = vadd.f32 %v846, 1.0
  %v848 = vrcp.pop %v847
  %v849 = vmul.f32 %v847, %v848
  %v850 = vsub.f32 1.0, %v849
  %v851 = vmul.f32 %v848, %v850
  %v852 = vadd.f32 %v848, %v851
  %vm853 = vweird.f32 %v847
  %vm854 = vweird.f32 %v848
  %vm855 = vmor %vm853, %vm854
  %v856 = vsel %vm855, %v848, %v852
  %v857 = vand.u32 2147483647, %v847
  %vm858 = vcmp.eq.f32.partialorder %v857, 8.507059e+37
  %v859 = vand.u32 %v847, 2147483648
  %v860 = vor.u32 1.1754944e-38, %v859
  %v861 = vsel %vm858, %v860, %v856
  %v862 = vmul.f32 1.0, %v861
  %v863 = vtanh.pop %v814
  %v864 = vmul.f32 %v862, %v732
  %866 = vrot.lane.b32.xlu0 %v863, 64
  %v867 = vpop.permute.xlu0 %866
  %v869 = vmul.f32 %v862, %v867
  %871 = vrot.lane.b32.xlu0 %v869, 32
  %v872 = vpop.permute.xlu0 %871
  %v874 = vadd.f32 %v864, %v872
  %v875 = vtanh.pop %v874
  %877 = vrot.lane.b32.xlu0 %v875, 64
  %v878 = vpop.permute.xlu0 %877
  %v880 = vmul.f32 %v862, %v878
  %v881 = vxor.u32 %v842, 2147483648
  %v882 = vmul.f32 %v881, 1.442695
  %v883 = vpow.pop %v882
  %v884 = vadd.f32 %v883, 1.0
  %v885 = vrcp.pop %v884
  %v886 = vmul.f32 %v884, %v885
  %v887 = vsub.f32 1.0, %v886
  %v888 = vmul.f32 %v885, %v887
  %v889 = vadd.f32 %v885, %v888
  %vm890 = vweird.f32 %v884
  %vm891 = vweird.f32 %v885
  %vm892 = vmor %vm890, %vm891
  %v893 = vsel %vm892, %v885, %v889
  %v894 = vand.u32 2147483647, %v884
  %vm895 = vcmp.eq.f32.partialorder %v894, 8.507059e+37
  %v896 = vand.u32 %v884, 2147483648
  %v897 = vor.u32 1.1754944e-38, %v896
  %v898 = vsel %vm895, %v897, %v893
  %v899 = vmul.f32 1.0, %v898
  %v900 = vtanh.pop %v842
  %v901 = vmul.f32 %v899, %v769
  %903 = vrot.lane.b32.xlu0 %v900, 64
  %v904 = vpop.permute.xlu0 %903
  %v906 = vmul.f32 %v899, %v904
  %908 = vrot.lane.b32.xlu0 %v906, 32
  %v909 = vpop.permute.xlu0 %908
  %v911 = vadd.f32 %v901, %v909
  %v912 = vtanh.pop %v911
  %914 = vrot.lane.b32.xlu0 %v912, 64
  %v915 = vpop.permute.xlu0 %914
  %v917 = vmul.f32 %v899, %v915
  %919 = vrot.lane.b32.xlu0 %v880, 32
  %v920 = vpop.permute.xlu0 %919
  %s922 = scalar_lea.vmem %s4, 10
  %923 = vst.msk [vmem:[%s922] sm:$0x3] %vm212, %v920
  %925 = vrot.lane.b32.xlu0 %v917, 32
  %v926 = vpop.permute.xlu0 %925
  %s928 = scalar_lea.vmem %s52, 4
  %929 = vst.msk [vmem:[%s928] sm:$0x3] %vm212, %v926
  %v930 = vld [vmem:[%s2] sm:$0xff]
  %v931 = vld [vmem:[%s2 + $0x8] sm:$0xff]
  %v932 = vld [vmem:[%s2 + $0x10] sm:$0xff]
  %v933 = vld [vmem:[%s2 + $0x18] sm:$0xff]
  %s934 = scalar_lea.vmem %s0, 12
  %v935 = vld [vmem:[%s934] sm:$0x3]
  %v936 = vsel %vm73, %v920, 0
  %938 = vmatpush.msra.mxu0 0.0
  %939 = vmatpush.msra.mxu0 0.0
  %940 = vmatpush.msra.mxu0 0.0
  %941 = vmatpush.msra.mxu0 0.0
  %942 = vmatpush.msra.mxu0 0.0
  %943 = vmatpush.msra.mxu0 0.0
  %944 = vmatpush.msra.mxu0 0.0
  %945 = vmatpush.msra.mxu0 0.0
  %946 = vmatpush.msra.mxu0 0.0
  %947 = vmatpush.msra.mxu0 0.0
  %948 = vmatpush.msra.mxu0 0.0
  %949 = vmatpush.msra.mxu0 0.0
  %950 = vmatpush.msra.mxu0 %v933
  %951 = vmatpush.msra.mxu0 %v932
  %952 = vmatpush.msra.mxu0 %v931
  %953 = vmatpush.msra.mxu0 %v930
  %954 = vmatmul.f32.gmra.mxu0 %v936
  %v955 = vpop.f32.mrf.mxu0
  %v956 = vadd.f32 %v935, %v955
  %957 = vdwg.mxu0
  %v958 = vld [vmem:[%s3] sm:$0xff]
  %v959 = vld [vmem:[%s3 + $0x8] sm:$0xff]
  %v960 = vld [vmem:[%s3 + $0x10] sm:$0xff]
  %v961 = vld [vmem:[%s3 + $0x18] sm:$0xff]
  %s962 = scalar_lea.vmem %s44, 2
  %v963 = vld [vmem:[%s962] sm:$0x3]
  %v964 = vsel %vm73, %v926, 0
  %966 = vmatpush.msra.mxu0 0.0
  %967 = vmatpush.msra.mxu0 0.0
  %968 = vmatpush.msra.mxu0 0.0
  %969 = vmatpush.msra.mxu0 0.0
  %970 = vmatpush.msra.mxu0 0.0
  %971 = vmatpush.msra.mxu0 0.0
  %972 = vmatpush.msra.mxu0 0.0
  %973 = vmatpush.msra.mxu0 0.0
  %974 = vmatpush.msra.mxu0 0.0
  %975 = vmatpush.msra.mxu0 0.0
  %976 = vmatpush.msra.mxu0 0.0
  %977 = vmatpush.msra.mxu0 0.0
  %978 = vmatpush.msra.mxu0 %v961
  %979 = vmatpush.msra.mxu0 %v960
  %980 = vmatpush.msra.mxu0 %v959
  %981 = vmatpush.msra.mxu0 %v958
  %982 = vmatmul.f32.gmra.mxu0 %v964
  %v983 = vpop.f32.mrf.mxu0
  %v984 = vadd.f32 %v963, %v983
  %985 = vdwg.mxu0
  %v986 = vxor.u32 %v956, 2147483648
  %v987 = vmul.f32 %v986, 1.442695
  %v988 = vpow.pop %v987
  %v989 = vadd.f32 %v988, 1.0
  %v990 = vrcp.pop %v989
  %v991 = vmul.f32 %v989, %v990
  %v992 = vsub.f32 1.0, %v991
  %v993 = vmul.f32 %v990, %v992
  %v994 = vadd.f32 %v990, %v993
  %vm995 = vweird.f32 %v989
  %vm996 = vweird.f32 %v990
  %vm997 = vmor %vm995, %vm996
  %v998 = vsel %vm997, %v990, %v994
  %v999 = vand.u32 2147483647, %v989
  %vm1000 = vcmp.eq.f32.partialorder %v999, 8.507059e+37
  %v1001 = vand.u32 %v989, 2147483648
  %v1002 = vor.u32 1.1754944e-38, %v1001
  %v1003 = vsel %vm1000, %v1002, %v998
  %v1004 = vmul.f32 1.0, %v1003
  %v1005 = vtanh.pop %v956
  %v1006 = vmul.f32 %v1004, %v874
  %1008 = vrot.lane.b32.xlu0 %v1005, 64
  %v1009 = vpop.permute.xlu0 %1008
  %v1011 = vmul.f32 %v1004, %v1009
  %1013 = vrot.lane.b32.xlu0 %v1011, 32
  %v1014 = vpop.permute.xlu0 %1013
  %v1016 = vadd.f32 %v1006, %v1014
  %v1017 = vtanh.pop %v1016
  %1019 = vrot.lane.b32.xlu0 %v1017, 64
  %v1020 = vpop.permute.xlu0 %1019
  %v1022 = vmul.f32 %v1004, %v1020
  %v1023 = vxor.u32 %v984, 2147483648
  %v1024 = vmul.f32 %v1023, 1.442695
  %v1025 = vpow.pop %v1024
  %v1026 = vadd.f32 %v1025, 1.0
  %v1027 = vrcp.pop %v1026
  %v1028 = vmul.f32 %v1026, %v1027
  %v1029 = vsub.f32 1.0, %v1028
  %v1030 = vmul.f32 %v1027, %v1029
  %v1031 = vadd.f32 %v1027, %v1030
  %vm1032 = vweird.f32 %v1026
  %vm1033 = vweird.f32 %v1027
  %vm1034 = vmor %vm1032, %vm1033
  %v1035 = vsel %vm1034, %v1027, %v1031
  %v1036 = vand.u32 2147483647, %v1026
  %vm1037 = vcmp.eq.f32.partialorder %v1036, 8.507059e+37
  %v1038 = vand.u32 %v1026, 2147483648
  %v1039 = vor.u32 1.1754944e-38, %v1038
  %v1040 = vsel %vm1037, %v1039, %v1035
  %v1041 = vmul.f32 1.0, %v1040
  %v1042 = vtanh.pop %v984
  %v1043 = vmul.f32 %v1041, %v911
  %1045 = vrot.lane.b32.xlu0 %v1042, 64
  %v1046 = vpop.permute.xlu0 %1045
  %v1048 = vmul.f32 %v1041, %v1046
  %1050 = vrot.lane.b32.xlu0 %v1048, 32
  %v1051 = vpop.permute.xlu0 %1050
  %v1053 = vadd.f32 %v1043, %v1051
  %v1054 = vtanh.pop %v1053
  %1056 = vrot.lane.b32.xlu0 %v1054, 64
  %v1057 = vpop.permute.xlu0 %1056
  %v1059 = vmul.f32 %v1041, %v1057
  %1061 = vrot.lane.b32.xlu0 %v1022, 32
  %v1062 = vpop.permute.xlu0 %1061
  %s1064 = scalar_lea.vmem %s4, 12
  %1065 = vst.msk [vmem:[%s1064] sm:$0x3] %vm212, %v1062
  %1067 = vrot.lane.b32.xlu0 %v1059, 32
  %v1068 = vpop.permute.xlu0 %1067
  %s1070 = scalar_lea.vmem %s52, 2
  %1071 = vst.msk [vmem:[%s1070] sm:$0x3] %vm212, %v1068
  %v1072 = vld [vmem:[%s2] sm:$0xff]
  %v1073 = vld [vmem:[%s2 + $0x8] sm:$0xff]
  %v1074 = vld [vmem:[%s2 + $0x10] sm:$0xff]
  %v1075 = vld [vmem:[%s2 + $0x18] sm:$0xff]
  %s1076 = scalar_lea.vmem %s0, 14
  %v1077 = vld [vmem:[%s1076] sm:$0x3]
  %v1078 = vsel %vm73, %v1062, 0
  %1080 = vmatpush.msra.mxu0 0.0
  %1081 = vmatpush.msra.mxu0 0.0
  %1082 = vmatpush.msra.mxu0 0.0
  %1083 = vmatpush.msra.mxu0 0.0
  %1084 = vmatpush.msra.mxu0 0.0
  %1085 = vmatpush.msra.mxu0 0.0
  %1086 = vmatpush.msra.mxu0 0.0
  %1087 = vmatpush.msra.mxu0 0.0
  %1088 = vmatpush.msra.mxu0 0.0
  %1089 = vmatpush.msra.mxu0 0.0
  %1090 = vmatpush.msra.mxu0 0.0
  %1091 = vmatpush.msra.mxu0 0.0
  %1092 = vmatpush.msra.mxu0 %v1075
  %1093 = vmatpush.msra.mxu0 %v1074
  %1094 = vmatpush.msra.mxu0 %v1073
  %1095 = vmatpush.msra.mxu0 %v1072
  %1096 = vmatmul.f32.gmra.mxu0 %v1078
  %v1097 = vpop.f32.mrf.mxu0
  %v1098 = vadd.f32 %v1077, %v1097
  %1099 = vdwg.mxu0
  %v1100 = vld [vmem:[%s3] sm:$0xff]
  %v1101 = vld [vmem:[%s3 + $0x8] sm:$0xff]
  %v1102 = vld [vmem:[%s3 + $0x10] sm:$0xff]
  %v1103 = vld [vmem:[%s3 + $0x18] sm:$0xff]
  %v1104 = vld [vmem:[%s44] sm:$0x3]
  %v1105 = vsel %vm73, %v1068, 0
  %1107 = vmatpush.msra.mxu0 0.0
  %1108 = vmatpush.msra.mxu0 0.0
  %1109 = vmatpush.msra.mxu0 0.0
  %1110 = vmatpush.msra.mxu0 0.0
  %1111 = vmatpush.msra.mxu0 0.0
  %1112 = vmatpush.msra.mxu0 0.0
  %1113 = vmatpush.msra.mxu0 0.0
  %1114 = vmatpush.msra.mxu0 0.0
  %1115 = vmatpush.msra.mxu0 0.0
  %1116 = vmatpush.msra.mxu0 0.0
  %1117 = vmatpush.msra.mxu0 0.0
  %1118 = vmatpush.msra.mxu0 0.0
  %1119 = vmatpush.msra.mxu0 %v1103
  %1120 = vmatpush.msra.mxu0 %v1102
  %1121 = vmatpush.msra.mxu0 %v1101
  %1122 = vmatpush.msra.mxu0 %v1100
  %1123 = vmatmul.f32.gmra.mxu0 %v1105
  %v1124 = vpop.f32.mrf.mxu0
  %v1125 = vadd.f32 %v1104, %v1124
  %1126 = vdwg.mxu0
  %v1127 = vxor.u32 %v1098, 2147483648
  %v1128 = vmul.f32 %v1127, 1.442695
  %v1129 = vpow.pop %v1128
  %v1130 = vadd.f32 %v1129, 1.0
  %v1131 = vrcp.pop %v1130
  %v1132 = vmul.f32 %v1130, %v1131
  %v1133 = vsub.f32 1.0, %v1132
  %v1134 = vmul.f32 %v1131, %v1133
  %v1135 = vadd.f32 %v1131, %v1134
  %vm1136 = vweird.f32 %v1130
  %vm1137 = vweird.f32 %v1131
  %vm1138 = vmor %vm1136, %vm1137
  %v1139 = vsel %vm1138, %v1131, %v1135
  %v1140 = vand.u32 2147483647, %v1130
  %vm1141 = vcmp.eq.f32.partialorder %v1140, 8.507059e+37
  %v1142 = vand.u32 %v1130, 2147483648
  %v1143 = vor.u32 1.1754944e-38, %v1142
  %v1144 = vsel %vm1141, %v1143, %v1139
  %v1145 = vmul.f32 1.0, %v1144
  %v1146 = vtanh.pop %v1098
  %v1147 = vmul.f32 %v1145, %v1016
  %1149 = vrot.lane.b32.xlu0 %v1146, 64
  %v1150 = vpop.permute.xlu0 %1149
  %v1152 = vmul.f32 %v1145, %v1150
  %1154 = vrot.lane.b32.xlu0 %v1152, 32
  %v1155 = vpop.permute.xlu0 %1154
  %v1157 = vadd.f32 %v1147, %v1155
  %v1158 = vtanh.pop %v1157
  %1160 = vrot.lane.b32.xlu0 %v1158, 64
  %v1161 = vpop.permute.xlu0 %1160
  %v1163 = vmul.f32 %v1145, %v1161
  %v1164 = vxor.u32 %v1125, 2147483648
  %v1165 = vmul.f32 %v1164, 1.442695
  %v1166 = vpow.pop %v1165
  %v1167 = vadd.f32 %v1166, 1.0
  %v1168 = vrcp.pop %v1167
  %v1169 = vmul.f32 %v1167, %v1168
  %v1170 = vsub.f32 1.0, %v1169
  %v1171 = vmul.f32 %v1168, %v1170
  %v1172 = vadd.f32 %v1168, %v1171
  %vm1173 = vweird.f32 %v1167
  %vm1174 = vweird.f32 %v1168
  %vm1175 = vmor %vm1173, %vm1174
  %v1176 = vsel %vm1175, %v1168, %v1172
  %v1177 = vand.u32 2147483647, %v1167
  %vm1178 = vcmp.eq.f32.partialorder %v1177, 8.507059e+37
  %v1179 = vand.u32 %v1167, 2147483648
  %v1180 = vor.u32 1.1754944e-38, %v1179
  %v1181 = vsel %vm1178, %v1180, %v1176
  %v1182 = vmul.f32 1.0, %v1181
  %v1183 = vtanh.pop %v1125
  %v1184 = vmul.f32 %v1182, %v1053
  %1186 = vrot.lane.b32.xlu0 %v1183, 64
  %v1187 = vpop.permute.xlu0 %1186
  %v1189 = vmul.f32 %v1182, %v1187
  %1191 = vrot.lane.b32.xlu0 %v1189, 32
  %v1192 = vpop.permute.xlu0 %1191
  %v1194 = vadd.f32 %v1184, %v1192
  %v1195 = vtanh.pop %v1194
  %1197 = vrot.lane.b32.xlu0 %v1195, 64
  %v1198 = vpop.permute.xlu0 %1197
  %v1200 = vmul.f32 %v1182, %v1198
  %1202 = vrot.lane.b32.xlu0 %v1163, 32
  %v1203 = vpop.permute.xlu0 %1202
  %s1205 = scalar_lea.vmem %s4, 14
  %1206 = vst.msk [vmem:[%s1205] sm:$0x3] %vm212, %v1203
  %1208 = vrot.lane.b32.xlu0 %v1200, 32
  %v1209 = vpop.permute.xlu0 %1208
  %1211 = vst.msk [vmem:[%s52] sm:$0x3] %vm212, %v1209
  %1212 = vst.msk [vmem:[#allocation2] sm:$0x3] %vm212, %v1203
  %1214 = vrot.lane.b32.xlu0 %v1157, 96
  %v1215 = vpop.permute.xlu0 %1214
  %1217 = vst.msk [vmem:[#allocation3] sm:$0x3] %vm212, %v1215
  %1218 = vst.msk [vmem:[#allocation4] sm:$0x3] %vm212, %v1209
  %1220 = vrot.lane.b32.xlu0 %v1194, 96
  %v1221 = vpop.permute.xlu0 %1220
  %1223 = vst.msk [vmem:[#allocation5] sm:$0x3] %vm212, %v1221
  %s1224 = ssub.s32 0, 0
  %s1225 = smul.u32 8, %s1224
  %p1226 = scmp.lt.s32.totalorder %s1225, 7
  %s1227 = scalar_select %p1226, %s1225, 7
  %s1228 = smul.addr %s1227, 2
  %s1229 = scalar_lea.vmem %s5, %s1228
  // Predicated region
  $region22: #{bilstm_forward.5} parent=0 // pred_check
    _
  $region23: #{bilstm_forward.5} parent=0 // pred_check_branch
    %1231 = sbr.rel (0) target = $region25
  $region24: #{bilstm_forward.5} parent=0 // pred_region
    _
  $region25: #{bilstm_forward.5} parent=0 // pred_fallthru
    _
  // Predicated region
  $region26: #{bilstm_forward.5} parent=0 // pred_check
    _
  $region27: #{bilstm_forward.5} parent=0 // pred_check_branch
    %1233 = sbr.rel (0) target = $region29
  $region28: #{bilstm_forward.5} parent=0 // pred_region
    %s1234 = ssub.s32 0, 0
    %s1235 = smul.u32 8, %s1234
  $region29: #{bilstm_forward.5} parent=0 // pred_fallthru
    _
  // Predicated region
  $region30: #{bilstm_forward.5} parent=0 // pred_check
    _
  $region31: #{bilstm_forward.5} parent=0 // pred_check_branch
    %1237 = sbr.rel (0) target = $region33
  $region32: #{bilstm_forward.5} parent=0 // pred_region
    _
  $region33: #{bilstm_forward.5} parent=0 // pred_fallthru
    _
  // Predicated region
  $region34: #{bilstm_forward.5} parent=0 // pred_check
    _
  $region35: #{bilstm_forward.5} parent=0 // pred_check_branch
    %1239 = sbr.rel (0) target = $region37
  $region36: #{bilstm_forward.5} parent=0 // pred_region
    %s1240 = ssub.s32 0, 0
    %s1241 = smul.u32 8, %s1240
    %p1242 = scmp.lt.s32.totalorder %s1241, 7
    %s1243 = scalar_select %p1242, %s1241, 7
    %s1244 = smul.addr %s1243, 2
    %s1245 = scalar_lea.vmem %s5, %s1244
  $region37: #{bilstm_forward.5} parent=0 // pred_fallthru
    _

// kernel: bilstm_forward.7
$region0: #{bilstm_forward.7}
  #allocation0 [shape = 'u32[]', space=smem, size = 0x4, offset = 0x4, fixed_abs, tag = 'smem constant byte address 0x4 - core index']
  #allocation1 [shape = 'u32[72,128]{1,0:T(1,128)}', space=vmem, size = 0x9000, scoped, tag = 'internal scratch']
  #allocation2 [shape = 'f32[2,32]{1,0:T(2,128)}', space=vmem, size = 0x400, scoped, tag = 'scratch operand']
  #allocation3 [shape = 'f32[2,32]{1,0:T(2,128)}', space=vmem, size = 0x400, scoped, tag = 'scratch operand']
  #allocation4 [shape = 'f32[2,32]{1,0:T(2,128)}', space=vmem, size = 0x400, scoped, tag = 'scratch operand']
  #allocation5 [shape = 'f32[2,32]{1,0:T(2,128)}', space=vmem, size = 0x400, scoped, tag = 'scratch operand']
  #allocation6 [shape = 'f32[2,32]{1,0:T(2,128)}', space=vmem, size = 0x400, scoped, tag = 'scratch operand']
  %s0 = inlined_call_operand.vmem [shape: f32[8,2,128], index: 0, kind: input, shape index: {}]
  %s1 = inlined_call_operand.vmem [shape: f32[8,2,128], index: 1, kind: input, shape index: {}]
  %s2 = inlined_call_operand.vmem [shape: f32[32,128], index: 2, kind: input, shape index: {}]
  %s3 = inlined_call_operand.vmem [shape: f32[32,128], index: 3, kind: input, shape index: {}]
  %s4 = inlined_call_operand.vmem [shape: f32[32,4], index: 4, kind: input, shape index: {}]
  %s5 = inlined_call_operand.vmem [shape: f32[32,4], index: 5, kind: input, shape index: {}]
  %s6 = inlined_call_operand.vmem [shape: f32[1,4], index: 6, kind: input, shape index: {}]
  %s7 = inlined_call_operand.hbm [shape: f32[2,4], index: 7, kind: output, shape index: {}]
  %s8 = sld [smem:[#allocation0]]
  $region46: #{bilstm_forward.7} parent=0
    _
  %s10 = ssub.s32 1, %s8
  %s11 = scalar_select 0, %s10, %s8
  $region1: #{bilstm_forward.7} parent=0
    #allocation7 [shape = 'u8[1024]{0}', space=vmem, size = 0x400, scoped, tag = 'output window, operand 0, single buffered']
    #allocation8 [shape = 's32[1]{0}', space=sflag, size = 0x4, scoped, tag = 'scoped memory for bilstm_forward.7']
    %12 = vsyncpa [#allocation8], 0
    // Predicated region
    $region2: #{bilstm_forward.7} parent=1 // pred_check
      _
    $region3: #{bilstm_forward.7} parent=1 // pred_check_branch
      %14 = sbr.rel (0) target = $region5
    $region4: #{bilstm_forward.7} parent=1 // pred_region
      _
    $region5: #{bilstm_forward.7} parent=1 // pred_fallthru
      _
    // Predicated region
    $region6: #{bilstm_forward.7} parent=1 // pred_check
      _
    $region7: #{bilstm_forward.7} parent=1 // pred_check_branch
      %16 = sbr.rel (0) target = $region9
    $region8: #{bilstm_forward.7} parent=1 // pred_region
      %s17 = ssub.s32 0, 0
      %s18 = smul.u32 8, %s17
      %p19 = scmp.lt.s32.totalorder %s18, 7
      %s20 = scalar_select %p19, %s18, 7
      %s21 = smul.addr %s20, 2
      %s22 = scalar_lea.vmem %s1, %s21
      %s23 = ssub.s32 0, 0
      %s24 = smul.u32 8, %s23
    $region9: #{bilstm_forward.7} parent=1 // pred_fallthru
      _
    // Predicated region
    $region10: #{bilstm_forward.7} parent=1 // pred_check
      _
    $region11: #{bilstm_forward.7} parent=1 // pred_check_branch
      %26 = sbr.rel (0) target = $region13
    $region12: #{bilstm_forward.7} parent=1 // pred_region
      _
    $region13: #{bilstm_forward.7} parent=1 // pred_fallthru
      _
    // Predicated region
    $region14: #{bilstm_forward.7} parent=1 // pred_check
      _
    $region15: #{bilstm_forward.7} parent=1 // pred_check_branch
      %28 = sbr.rel (0) target = $region17
    $region16: #{bilstm_forward.7} parent=1 // pred_region
      _
    $region17: #{bilstm_forward.7} parent=1 // pred_fallthru
      _
    // Predicated region
    $region18: #{bilstm_forward.7} parent=1 // pred_check
      _
    $region19: #{bilstm_forward.7} parent=1 // pred_check_branch
      %30 = sbr.rel (0) target = $region21
    $region20: #{bilstm_forward.7} parent=1 // pred_region
      _
    $region21: #{bilstm_forward.7} parent=1 // pred_fallthru
      _
    // Predicated region
    $region22: #{bilstm_forward.7} parent=1 // pred_check
      _
    $region23: #{bilstm_forward.7} parent=1 // pred_check_branch
      %32 = sbr.rel (0) target = $region25
    $region24: #{bilstm_forward.7} parent=1 // pred_region
      _
    $region25: #{bilstm_forward.7} parent=1 // pred_fallthru
      _
    // Predicated region
    $region26: #{bilstm_forward.7} parent=1 // pred_check
      _
    $region27: #{bilstm_forward.7} parent=1 // pred_check_branch
      %34 = sbr.rel (0) target = $region29
    $region28: #{bilstm_forward.7} parent=1 // pred_region
      _
    $region29: #{bilstm_forward.7} parent=1 // pred_fallthru
      _
    %s35 = ssub.s32 0, 0
    %s36 = smul.u32 8, %s35
    %p37 = scmp.lt.s32.totalorder %s36, 7
    %s38 = scalar_select %p37, %s36, 7
    %s39 = smul.addr %s38, 2
    %s40 = scalar_lea.vmem %s1, %s39
    %s41 = ssub.s32 0, 0
    %s42 = smul.u32 8, %s41
    %p43 = scmp.lt.s32.totalorder %s42, 7
    %s44 = scalar_select %p43, %s42, 7
    %s45 = smul.addr %s44, 2
    %s46 = scalar_lea.vmem %s1, %s45
    %s47 = ssub.s32 0, 0
    %s48 = smul.u32 8, %s47
    %p49 = scmp.eq.s32.totalorder 0, 0
    // Predicated region
    $region30: #{bilstm_forward.7} parent=1 // pred_check
      %p50 = pneg %p49
    $region31: #{bilstm_forward.7} parent=1 // pred_check_branch
      %52 = sbr.rel (%p50) target = $region33
    $region32: #{bilstm_forward.7} parent=1 // pred_region
      %vm53 = vcmask 254976
      %54 = vst.msk [vmem:[#allocation2] sm:$0x3] %vm53, 0.0
      %55 = vst.msk [vmem:[#allocation3] sm:$0x3] %vm53, 0.0
      %56 = vst.msk [vmem:[#allocation4] sm:$0x3] %vm53, 0.0
      %57 = vst.msk [vmem:[#allocation5] sm:$0x3] %vm53, 0.0
      %58 = vst.msk [vmem:[#allocation6] sm:$0x3] %vm53, 0.0
    $region33: #{bilstm_forward.7} parent=1 // pred_fallthru
      _
    %v59 = vld [vmem:[#allocation2] sm:$0x3]
    %v60 = vld [vmem:[#allocation3] sm:$0x3]
    %v61 = vld [vmem:[#allocation4] sm:$0x3]
    %v62 = vld [vmem:[#allocation5] sm:$0x3]
    %v63 = vld [vmem:[#allocation6] sm:$0x3]
    %v64 = vld [vmem:[%s2] sm:$0xff]
    %v65 = vld [vmem:[%s2 + $0x8] sm:$0xff]
    %v66 = vld [vmem:[%s2 + $0x10] sm:$0xff]
    %v67 = vld [vmem:[%s2 + $0x18] sm:$0xff]
    %v68 = vld [vmem:[%s0] sm:$0x3]
    %vm69 = vcmask 261120
    %v71 = vsel %vm69, %v59, 0
    %73 = vmatpush.msra.mxu0 0.0
    %74 = vmatpush.msra.mxu0 0.0
    %75 = vmatpush.msra.mxu0 0.0
    %76 = vmatpush.msra.mxu0 0.0
    %77 = vmatpush.msra.mxu0 0.0
    %78 = vmatpush.msra.mxu0 0.0
    %79 = vmatpush.msra.mxu0 0.0
    %80 = vmatpush.msra.mxu0 0.0
    %81 = vmatpush.msra.mxu0 0.0
    %82 = vmatpush.msra.mxu0 0.0
    %83 = vmatpush.msra.mxu0 0.0
    %84 = vmatpush.msra.mxu0 0.0
    %85 = vmatpush.msra.mxu0 %v67
    %86 = vmatpush.msra.mxu0 %v66
    %87 = vmatpush.msra.mxu0 %v65
    %88 = vmatpush.msra.mxu0 %v64
    %89 = vmatmul.f32.gmra.mxu0 %v71
    %v90 = vpop.f32.mrf.mxu0
    %v91 = vadd.f32 %v68, %v90
    %92 = vdwg.mxu0
    %v93 = vld [vmem:[%s3] sm:$0xff]
    %v94 = vld [vmem:[%s3 + $0x8] sm:$0xff]
    %v95 = vld [vmem:[%s3 + $0x10] sm:$0xff]
    %v96 = vld [vmem:[%s3 + $0x18] sm:$0xff]
    %s97 = scalar_lea.vmem %s46, 14
    %v98 = vld [vmem:[%s97] sm:$0x3]
    %v100 = vsel %vm69, %v61, 0
    %102 = vmatpush.msra.mxu0 0.0
    %103 = vmatpush.msra.mxu0 0.0
    %104 = vmatpush.msra.mxu0 0.0
    %105 = vmatpush.msra.mxu0 0.0
    %106 = vmatpush.msra.mxu0 0.0
    %107 = vmatpush.msra.mxu0 0.0
    %108 = vmatpush.msra.mxu0 0.0
    %109 = vmatpush.msra.mxu0 0.0
    %110 = vmatpush.msra.mxu0 0.0
    %111 = vmatpush.msra.mxu0 0.0
    %112 = vmatpush.msra.mxu0 0.0
    %113 = vmatpush.msra.mxu0 0.0
    %114 = vmatpush.msra.mxu0 %v96
    %115 = vmatpush.msra.mxu0 %v95
    %116 = vmatpush.msra.mxu0 %v94
    %117 = vmatpush.msra.mxu0 %v93
    %118 = vmatmul.f32.gmra.mxu0 %v100
    %v119 = vpop.f32.mrf.mxu0
    %v120 = vadd.f32 %v98, %v119
    %121 = vdwg.mxu0
    %v122 = vxor.u32 %v91, 2147483648
    %v123 = vmul.f32 %v122, 1.442695
    %v124 = vpow.pop %v123
    %v125 = vadd.f32 %v124, 1.0
    %v126 = vrcp.pop %v125
    %v127 = vmul.f32 %v125, %v126
    %v128 = vsub.f32 1.0, %v127
    %v129 = vmul.f32 %v126, %v128
    %v130 = vadd.f32 %v126, %v129
    %vm131 = vweird.f32 %v125
    %vm132 = vweird.f32 %v126
    %vm133 = vmor %vm131, %vm132
    %v134 = vsel %vm133, %v126, %v130
    %v135 = vand.u32 2147483647, %v125
    %vm136 = vcmp.eq.f32.partialorder %v135, 8.507059e+37
    %v137 = vand.u32 %v125, 2147483648
    %v138 = vor.u32 1.1754944e-38, %v137
    %v139 = vsel %vm136, %v138, %v134
    %v140 = vmul.f32 1.0, %v139
    %v141 = vtanh.pop %v91
    %143 = vrot.lane.b32.xlu0 %v60, 32
    %v144 = vpop.permute.xlu0 %143
    %v146 = vmul.f32 %v140, %v144
    %148 = vrot.lane.b32.xlu0 %v141, 64
    %v149 = vpop.permute.xlu0 %148
    %v151 = vmul.f32 %v140, %v149
    %153 = vrot.lane.b32.xlu0 %v151, 32
    %v154 = vpop.permute.xlu0 %153
    %v156 = vadd.f32 %v146, %v154
    %v157 = vtanh.pop %v156
    %159 = vrot.lane.b32.xlu0 %v157, 64
    %v160 = vpop.permute.xlu0 %159
    %v162 = vmul.f32 %v140, %v160
    %v163 = vxor.u32 %v120, 2147483648
    %v164 = vmul.f32 %v163, 1.442695
    %v165 = vpow.pop %v164
    %v166 = vadd.f32 %v165, 1.0
    %v167 = vrcp.pop %v166
    %v168 = vmul.f32 %v166, %v167
    %v169 = vsub.f32 1.0, %v168
    %v170 = vmul.f32 %v167, %v169
    %v171 = vadd.f32 %v167, %v170
    %vm172 = vweird.f32 %v166
    %vm173 = vweird.f32 %v167
    %vm174 = vmor %vm172, %vm173
    %v175 = vsel %vm174, %v167, %v171
    %v176 = vand.u32 2147483647, %v166
    %vm177 = vcmp.eq.f32.partialorder %v176, 8.507059e+37
    %v178 = vand.u32 %v166, 2147483648
    %v179 = vor.u32 1.1754944e-38, %v178
    %v180 = vsel %vm177, %v179, %v175
    %v181 = vmul.f32 1.0, %v180
    %v182 = vtanh.pop %v120
    %184 = vrot.lane.b32.xlu0 %v62, 32
    %v185 = vpop.permute.xlu0 %184
    %v187 = vmul.f32 %v181, %v185
    %189 = vrot.lane.b32.xlu0 %v182, 64
    %v190 = vpop.permute.xlu0 %189
    %v192 = vmul.f32 %v181, %v190
    %194 = vrot.lane.b32.xlu0 %v192, 32
    %v195 = vpop.permute.xlu0 %194
    %v197 = vadd.f32 %v187, %v195
    %v198 = vtanh.pop %v197
    %200 = vrot.lane.b32.xlu0 %v198, 64
    %v201 = vpop.permute.xlu0 %200
    %v203 = vmul.f32 %v181, %v201
    %s204 = scalar_select %p49, 1, 0
    %v205 = vstv %s204
    %vm206 = vcmp.eq.s32.totalorder %v205, 1
    %208 = vrot.lane.b32.xlu0 %v63, 96
    %v209 = vpop.permute.xlu0 %208
    %v211 = vsel %vm206, %v203, %v209
    %s212 = scalar_lea.vmem %s0, 2
    %v213 = vld [vmem:[%s212] sm:$0x3]
    %215 = vrot.lane.b32.xlu0 %v162, 32
    %v216 = vpop.permute.xlu0 %215
    %v217 = vsel %vm69, %v216, 0
    %219 = vmatpush.msra.mxu0 0.0
    %220 = vmatpush.msra.mxu0 0.0
    %221 = vmatpush.msra.mxu0 0.0
    %222 = vmatpush.msra.mxu0 0.0
    %223 = vmatpush.msra.mxu0 0.0
    %224 = vmatpush.msra.mxu0 0.0
    %225 = vmatpush.msra.mxu0 0.0
    %226 = vmatpush.msra.mxu0 0.0
    %227 = vmatpush.msra.mxu0 0.0
    %228 = vmatpush.msra.mxu0 0.0
    %229 = vmatpush.msra.mxu0 0.0
    %230 = vmatpush.msra.mxu0 0.0
    %231 = vmatpush.msra.mxu0 %v67
    %232 = vmatpush.msra.mxu0 %v66
    %233 = vmatpush.msra.mxu0 %v65
    %234 = vmatpush.msra.mxu0 %v64
    %235 = vmatmul.f32.gmra.mxu0 %v217
    %v236 = vpop.f32.mrf.mxu0
    %v237 = vadd.f32 %v213, %v236
    %238 = vdwg.mxu0
    %s239 = scalar_lea.vmem %s46, 12
    %v240 = vld [vmem:[%s239] sm:$0x3]
    %242 = vrot.lane.b32.xlu0 %v203, 32
    %v243 = vpop.permute.xlu0 %242
    %v244 = vsel %vm69, %v243, 0
    %246 = vmatpush.msra.mxu0 0.0
    %247 = vmatpush.msra.mxu0 0.0
    %248 = vmatpush.msra.mxu0 0.0
    %249 = vmatpush.msra.mxu0 0.0
    %250 = vmatpush.msra.mxu0 0.0
    %251 = vmatpush.msra.mxu0 0.0
    %252 = vmatpush.msra.mxu0 0.0
    %253 = vmatpush.msra.mxu0 0.0
    %254 = vmatpush.msra.mxu0 0.0
    %255 = vmatpush.msra.mxu0 0.0
    %256 = vmatpush.msra.mxu0 0.0
    %257 = vmatpush.msra.mxu0 0.0
    %258 = vmatpush.msra.mxu0 %v96
    %259 = vmatpush.msra.mxu0 %v95
    %260 = vmatpush.msra.mxu0 %v94
    %261 = vmatpush.msra.mxu0 %v93
    %262 = vmatmul.f32.gmra.mxu0 %v244
    %v263 = vpop.f32.mrf.mxu0
    %v264 = vadd.f32 %v240, %v263
    %265 = vdwg.mxu0
    %v266 = vxor.u32 %v237, 2147483648
    %v267 = vmul.f32 %v266, 1.442695
    %v268 = vpow.pop %v267
    %v269 = vadd.f32 %v268, 1.0
    %v270 = vrcp.pop %v269
    %v271 = vmul.f32 %v269, %v270
    %v272 = vsub.f32 1.0, %v271
    %v273 = vmul.f32 %v270, %v272
    %v274 = vadd.f32 %v270, %v273
    %vm275 = vweird.f32 %v269
    %vm276 = vweird.f32 %v270
    %vm277 = vmor %vm275, %vm276
    %v278 = vsel %vm277, %v270, %v274
    %v279 = vand.u32 2147483647, %v269
    %vm280 = vcmp.eq.f32.partialorder %v279, 8.507059e+37
    %v281 = vand.u32 %v269, 2147483648
    %v282 = vor.u32 1.1754944e-38, %v281
    %v283 = vsel %vm280, %v282, %v278
    %v284 = vmul.f32 1.0, %v283
    %v285 = vtanh.pop %v237
    %v286 = vmul.f32 %v284, %v156
    %288 = vrot.lane.b32.xlu0 %v285, 64
    %v289 = vpop.permute.xlu0 %288
    %v291 = vmul.f32 %v284, %v289
    %293 = vrot.lane.b32.xlu0 %v291, 32
    %v294 = vpop.permute.xlu0 %293
    %v296 = vadd.f32 %v286, %v294
    %v297 = vtanh.pop %v296
    %299 = vrot.lane.b32.xlu0 %v297, 64
    %v300 = vpop.permute.xlu0 %299
    %v302 = vmul.f32 %v284, %v300
    %v303 = vxor.u32 %v264, 2147483648
    %v304 = vmul.f32 %v303, 1.442695
    %v305 = vpow.pop %v304
    %v306 = vadd.f32 %v305, 1.0
    %v307 = vrcp.pop %v306
    %v308 = vmul.f32 %v306, %v307
    %v309 = vsub.f32 1.0, %v308
    %v310 = vmul.f32 %v307, %v309
    %v311 = vadd.f32 %v307, %v310
    %vm312 = vweird.f32 %v306
    %vm313 = vweird.f32 %v307
    %vm314 = vmor %vm312, %vm313
    %v315 = vsel %vm314, %v307, %v311
    %v316 = vand.u32 2147483647, %v306
    %vm317 = vcmp.eq.f32.partialorder %v316, 8.507059e+37
    %v318 = vand.u32 %v306, 2147483648
    %v319 = vor.u32 1.1754944e-38, %v318
    %v320 = vsel %vm317, %v319, %v315
    %v321 = vmul.f32 1.0, %v320
    %v322 = vtanh.pop %v264
    %v323 = vmul.f32 %v321, %v197
    %325 = vrot.lane.b32.xlu0 %v322, 64
    %v326 = vpop.permute.xlu0 %325
    %v328 = vmul.f32 %v321, %v326
    %330 = vrot.lane.b32.xlu0 %v328, 32
    %v331 = vpop.permute.xlu0 %330
    %v333 = vadd.f32 %v323, %v331
    %v334 = vtanh.pop %v333
    %336 = vrot.lane.b32.xlu0 %v334, 64
    %v337 = vpop.permute.xlu0 %336
    %v339 = vmul.f32 %v321, %v337
    %s340 = scalar_lea.vmem %s0, 4
    %v341 = vld [vmem:[%s340] sm:$0x3]
    %343 = vrot.lane.b32.xlu0 %v302, 32
    %v344 = vpop.permute.xlu0 %343
    %v345 = vsel %vm69, %v344, 0
    %347 = vmatpush.msra.mxu0 0.0
    %348 = vmatpush.msra.mxu0 0.0
    %349 = vmatpush.msra.mxu0 0.0
    %350 = vmatpush.msra.mxu0 0.0
    %351 = vmatpush.msra.mxu0 0.0
    %352 = vmatpush.msra.mxu0 0.0
    %353 = vmatpush.msra.mxu0 0.0
    %354 = vmatpush.msra.mxu0 0.0
    %355 = vmatpush.msra.mxu0 0.0
    %356 = vmatpush.msra.mxu0 0.0
    %357 = vmatpush.msra.mxu0 0.0
    %358 = vmatpush.msra.mxu0 0.0
    %359 = vmatpush.msra.mxu0 %v67
    %360 = vmatpush.msra.mxu0 %v66
    %361 = vmatpush.msra.mxu0 %v65
    %362 = vmatpush.msra.mxu0 %v64
    %363 = vmatmul.f32.gmra.mxu0 %v345
    %v364 = vpop.f32.mrf.mxu0
    %v365 = vadd.f32 %v341, %v364
    %366 = vdwg.mxu0
    %s367 = scalar_lea.vmem %s46, 10
    %v368 = vld [vmem:[%s367] sm:$0x3]
    %370 = vrot.lane.b32.xlu0 %v339, 32
    %v371 = vpop.permute.xlu0 %370
    %v372 = vsel %vm69, %v371, 0
    %374 = vmatpush.msra.mxu0 0.0
    %375 = vmatpush.msra.mxu0 0.0
    %376 = vmatpush.msra.mxu0 0.0
    %377 = vmatpush.msra.mxu0 0.0
    %378 = vmatpush.msra.mxu0 0.0
    %379 = vmatpush.msra.mxu0 0.0
    %380 = vmatpush.msra.mxu0 0.0
    %381 = vmatpush.msra.mxu0 0.0
    %382 = vmatpush.msra.mxu0 0.0
    %383 = vmatpush.msra.mxu0 0.0
    %384 = vmatpush.msra.mxu0 0.0
    %385 = vmatpush.msra.mxu0 0.0
    %386 = vmatpush.msra.mxu0 %v96
    %387 = vmatpush.msra.mxu0 %v95
    %388 = vmatpush.msra.mxu0 %v94
    %389 = vmatpush.msra.mxu0 %v93
    %390 = vmatmul.f32.gmra.mxu0 %v372
    %v391 = vpop.f32.mrf.mxu0
    %v392 = vadd.f32 %v368, %v391
    %393 = vdwg.mxu0
    %v394 = vxor.u32 %v365, 2147483648
    %v395 = vmul.f32 %v394, 1.442695
    %v396 = vpow.pop %v395
    %v397 = vadd.f32 %v396, 1.0
    %v398 = vrcp.pop %v397
    %v399 = vmul.f32 %v397, %v398
    %v400 = vsub.f32 1.0, %v399
    %v401 = vmul.f32 %v398, %v400
    %v402 = vadd.f32 %v398, %v401
    %vm403 = vweird.f32 %v397
    %vm404 = vweird.f32 %v398
    %vm405 = vmor %vm403, %vm404
    %v406 = vsel %vm405, %v398, %v402
    %v407 = vand.u32 2147483647, %v397
    %vm408 = vcmp.eq.f32.partialorder %v407, 8.507059e+37
    %v409 = vand.u32 %v397, 2147483648
    %v410 = vor.u32 1.1754944e-38, %v409
    %v411 = vsel %vm408, %v410, %v406
    %v412 = vmul.f32 1.0, %v411
    %v413 = vtanh.pop %v365
    %v414 = vmul.f32 %v412, %v296
    %416 = vrot.lane.b32.xlu0 %v413, 64
    %v417 = vpop.permute.xlu0 %416
    %v419 = vmul.f32 %v412, %v417
    %421 = vrot.lane.b32.xlu0 %v419, 32
    %v422 = vpop.permute.xlu0 %421
    %v424 = vadd.f32 %v414, %v422
    %v425 = vtanh.pop %v424
    %427 = vrot.lane.b32.xlu0 %v425, 64
    %v428 = vpop.permute.xlu0 %427
    %v430 = vmul.f32 %v412, %v428
    %v431 = vxor.u32 %v392, 2147483648
    %v432 = vmul.f32 %v431, 1.442695
    %v433 = vpow.pop %v432
    %v434 = vadd.f32 %v433, 1.0
    %v435 = vrcp.pop %v434
    %v436 = vmul.f32 %v434, %v435
    %v437 = vsub.f32 1.0, %v436
    %v438 = vmul.f32 %v435, %v437
    %v439 = vadd.f32 %v435, %v438
    %vm440 = vweird.f32 %v434
    %vm441 = vweird.f32 %v435
    %vm442 = vmor %vm440, %vm441
    %v443 = vsel %vm442, %v435, %v439
    %v444 = vand.u32 2147483647, %v434
    %vm445 = vcmp.eq.f32.partialorder %v444, 8.507059e+37
    %v446 = vand.u32 %v434, 2147483648
    %v447 = vor.u32 1.1754944e-38, %v446
    %v448 = vsel %vm445, %v447, %v443
    %v449 = vmul.f32 1.0, %v448
    %v450 = vtanh.pop %v392
    %v451 = vmul.f32 %v449, %v333
    %453 = vrot.lane.b32.xlu0 %v450, 64
    %v454 = vpop.permute.xlu0 %453
    %v456 = vmul.f32 %v449, %v454
    %458 = vrot.lane.b32.xlu0 %v456, 32
    %v459 = vpop.permute.xlu0 %458
    %v461 = vadd.f32 %v451, %v459
    %v462 = vtanh.pop %v461
    %464 = vrot.lane.b32.xlu0 %v462, 64
    %v465 = vpop.permute.xlu0 %464
    %v467 = vmul.f32 %v449, %v465
    %s468 = scalar_lea.vmem %s0, 6
    %v469 = vld [vmem:[%s468] sm:$0x3]
    %471 = vrot.lane.b32.xlu0 %v430, 32
    %v472 = vpop.permute.xlu0 %471
    %v473 = vsel %vm69, %v472, 0
    %475 = vmatpush.msra.mxu0 0.0
    %476 = vmatpush.msra.mxu0 0.0
    %477 = vmatpush.msra.mxu0 0.0
    %478 = vmatpush.msra.mxu0 0.0
    %479 = vmatpush.msra.mxu0 0.0
    %480 = vmatpush.msra.mxu0 0.0
    %481 = vmatpush.msra.mxu0 0.0
    %482 = vmatpush.msra.mxu0 0.0
    %483 = vmatpush.msra.mxu0 0.0
    %484 = vmatpush.msra.mxu0 0.0
    %485 = vmatpush.msra.mxu0 0.0
    %486 = vmatpush.msra.mxu0 0.0
    %487 = vmatpush.msra.mxu0 %v67
    %488 = vmatpush.msra.mxu0 %v66
    %489 = vmatpush.msra.mxu0 %v65
    %490 = vmatpush.msra.mxu0 %v64
    %491 = vmatmul.f32.gmra.mxu0 %v473
    %v492 = vpop.f32.mrf.mxu0
    %v493 = vadd.f32 %v469, %v492
    %494 = vdwg.mxu0
    %s495 = scalar_lea.vmem %s46, 8
    %v496 = vld [vmem:[%s495] sm:$0x3]
    %498 = vrot.lane.b32.xlu0 %v467, 32
    %v499 = vpop.permute.xlu0 %498
    %v500 = vsel %vm69, %v499, 0
    %502 = vmatpush.msra.mxu0 0.0
    %503 = vmatpush.msra.mxu0 0.0
    %504 = vmatpush.msra.mxu0 0.0
    %505 = vmatpush.msra.mxu0 0.0
    %506 = vmatpush.msra.mxu0 0.0
    %507 = vmatpush.msra.mxu0 0.0
    %508 = vmatpush.msra.mxu0 0.0
    %509 = vmatpush.msra.mxu0 0.0
    %510 = vmatpush.msra.mxu0 0.0
    %511 = vmatpush.msra.mxu0 0.0
    %512 = vmatpush.msra.mxu0 0.0
    %513 = vmatpush.msra.mxu0 0.0
    %514 = vmatpush.msra.mxu0 %v96
    %515 = vmatpush.msra.mxu0 %v95
    %516 = vmatpush.msra.mxu0 %v94
    %517 = vmatpush.msra.mxu0 %v93
    %518 = vmatmul.f32.gmra.mxu0 %v500
    %v519 = vpop.f32.mrf.mxu0
    %v520 = vadd.f32 %v496, %v519
    %521 = vdwg.mxu0
    %v522 = vxor.u32 %v493, 2147483648
    %v523 = vmul.f32 %v522, 1.442695
    %v524 = vpow.pop %v523
    %v525 = vadd.f32 %v524, 1.0
    %v526 = vrcp.pop %v525
    %v527 = vmul.f32 %v525, %v526
    %v528 = vsub.f32 1.0, %v527
    %v529 = vmul.f32 %v526, %v528
    %v530 = vadd.f32 %v526, %v529
    %vm531 = vweird.f32 %v525
    %vm532 = vweird.f32 %v526
    %vm533 = vmor %vm531, %vm532
    %v534 = vsel %vm533, %v526, %v530
    %v535 = vand.u32 2147483647, %v525
    %vm536 = vcmp.eq.f32.partialorder %v535, 8.507059e+37
    %v537 = vand.u32 %v525, 2147483648
    %v538 = vor.u32 1.1754944e-38, %v537
    %v539 = vsel %vm536, %v538, %v534
    %v540 = vmul.f32 1.0, %v539
    %v541 = vtanh.pop %v493
    %v542 = vmul.f32 %v540, %v424
    %544 = vrot.lane.b32.xlu0 %v541, 64
    %v545 = vpop.permute.xlu0 %544
    %v547 = vmul.f32 %v540, %v545
    %549 = vrot.lane.b32.xlu0 %v547, 32
    %v550 = vpop.permute.xlu0 %549
    %v552 = vadd.f32 %v542, %v550
    %v553 = vtanh.pop %v552
    %555 = vrot.lane.b32.xlu0 %v553, 64
    %v556 = vpop.permute.xlu0 %555
    %v558 = vmul.f32 %v540, %v556
    %v559 = vxor.u32 %v520, 2147483648
    %v560 = vmul.f32 %v559, 1.442695
    %v561 = vpow.pop %v560
    %v562 = vadd.f32 %v561, 1.0
    %v563 = vrcp.pop %v562
    %v564 = vmul.f32 %v562, %v563
    %v565 = vsub.f32 1.0, %v564
    %v566 = vmul.f32 %v563, %v565
    %v567 = vadd.f32 %v563, %v566
    %vm568 = vweird.f32 %v562
    %vm569 = vweird.f32 %v563
    %vm570 = vmor %vm568, %vm569
    %v571 = vsel %vm570, %v563, %v567
    %v572 = vand.u32 2147483647, %v562
    %vm573 = vcmp.eq.f32.partialorder %v572, 8.507059e+37
    %v574 = vand.u32 %v562, 2147483648
    %v575 = vor.u32 1.1754944e-38, %v574
    %v576 = vsel %vm573, %v575, %v571
    %v577 = vmul.f32 1.0, %v576
    %v578 = vtanh.pop %v520
    %v579 = vmul.f32 %v577, %v461
    %581 = vrot.lane.b32.xlu0 %v578, 64
    %v582 = vpop.permute.xlu0 %581
    %v584 = vmul.f32 %v577, %v582
    %586 = vrot.lane.b32.xlu0 %v584, 32
    %v587 = vpop.permute.xlu0 %586
    %v589 = vadd.f32 %v579, %v587
    %v590 = vtanh.pop %v589
    %592 = vrot.lane.b32.xlu0 %v590, 64
    %v593 = vpop.permute.xlu0 %592
    %v595 = vmul.f32 %v577, %v593
    %s596 = scalar_lea.vmem %s0, 8
    %v597 = vld [vmem:[%s596] sm:$0x3]
    %599 = vrot.lane.b32.xlu0 %v558, 32
    %v600 = vpop.permute.xlu0 %599
    %v601 = vsel %vm69, %v600, 0
    %603 = vmatpush.msra.mxu0 0.0
    %604 = vmatpush.msra.mxu0 0.0
    %605 = vmatpush.msra.mxu0 0.0
    %606 = vmatpush.msra.mxu0 0.0
    %607 = vmatpush.msra.mxu0 0.0
    %608 = vmatpush.msra.mxu0 0.0
    %609 = vmatpush.msra.mxu0 0.0
    %610 = vmatpush.msra.mxu0 0.0
    %611 = vmatpush.msra.mxu0 0.0
    %612 = vmatpush.msra.mxu0 0.0
    %613 = vmatpush.msra.mxu0 0.0
    %614 = vmatpush.msra.mxu0 0.0
    %615 = vmatpush.msra.mxu0 %v67
    %616 = vmatpush.msra.mxu0 %v66
    %617 = vmatpush.msra.mxu0 %v65
    %618 = vmatpush.msra.mxu0 %v64
    %619 = vmatmul.f32.gmra.mxu0 %v601
    %v620 = vpop.f32.mrf.mxu0
    %v621 = vadd.f32 %v597, %v620
    %622 = vdwg.mxu0
    %s623 = scalar_lea.vmem %s46, 6
    %v624 = vld [vmem:[%s623] sm:$0x3]
    %626 = vrot.lane.b32.xlu0 %v595, 32
    %v627 = vpop.permute.xlu0 %626
    %v628 = vsel %vm69, %v627, 0
    %630 = vmatpush.msra.mxu0 0.0
    %631 = vmatpush.msra.mxu0 0.0
    %632 = vmatpush.msra.mxu0 0.0
    %633 = vmatpush.msra.mxu0 0.0
    %634 = vmatpush.msra.mxu0 0.0
    %635 = vmatpush.msra.mxu0 0.0
    %636 = vmatpush.msra.mxu0 0.0
    %637 = vmatpush.msra.mxu0 0.0
    %638 = vmatpush.msra.mxu0 0.0
    %639 = vmatpush.msra.mxu0 0.0
    %640 = vmatpush.msra.mxu0 0.0
    %641 = vmatpush.msra.mxu0 0.0
    %642 = vmatpush.msra.mxu0 %v96
    %643 = vmatpush.msra.mxu0 %v95
    %644 = vmatpush.msra.mxu0 %v94
    %645 = vmatpush.msra.mxu0 %v93
    %646 = vmatmul.f32.gmra.mxu0 %v628
    %v647 = vpop.f32.mrf.mxu0
    %v648 = vadd.f32 %v624, %v647
    %649 = vdwg.mxu0
    %v650 = vxor.u32 %v621, 2147483648
    %v651 = vmul.f32 %v650, 1.442695
    %v652 = vpow.pop %v651
    %v653 = vadd.f32 %v652, 1.0
    %v654 = vrcp.pop %v653
    %v655 = vmul.f32 %v653, %v654
    %v656 = vsub.f32 1.0, %v655
    %v657 = vmul.f32 %v654, %v656
    %v658 = vadd.f32 %v654, %v657
    %vm659 = vweird.f32 %v653
    %vm660 = vweird.f32 %v654
    %vm661 = vmor %vm659, %vm660
    %v662 = vsel %vm661, %v654, %v658
    %v663 = vand.u32 2147483647, %v653
    %vm664 = vcmp.eq.f32.partialorder %v663, 8.507059e+37
    %v665 = vand.u32 %v653, 2147483648
    %v666 = vor.u32 1.1754944e-38, %v665
    %v667 = vsel %vm664, %v666, %v662
    %v668 = vmul.f32 1.0, %v667
    %v669 = vtanh.pop %v621
    %v670 = vmul.f32 %v668, %v552
    %672 = vrot.lane.b32.xlu0 %v669, 64
    %v673 = vpop.permute.xlu0 %672
    %v675 = vmul.f32 %v668, %v673
    %677 = vrot.lane.b32.xlu0 %v675, 32
    %v678 = vpop.permute.xlu0 %677
    %v680 = vadd.f32 %v670, %v678
    %v681 = vtanh.pop %v680
    %683 = vrot.lane.b32.xlu0 %v681, 64
    %v684 = vpop.permute.xlu0 %683
    %v686 = vmul.f32 %v668, %v684
    %v687 = vxor.u32 %v648, 2147483648
    %v688 = vmul.f32 %v687, 1.442695
    %v689 = vpow.pop %v688
    %v690 = vadd.f32 %v689, 1.0
    %v691 = vrcp.pop %v690
    %v692 = vmul.f32 %v690, %v691
    %v693 = vsub.f32 1.0, %v692
    %v694 = vmul.f32 %v691, %v693
    %v695 = vadd.f32 %v691, %v694
    %vm696 = vweird.f32 %v690
    %vm697 = vweird.f32 %v691
    %vm698 = vmor %vm696, %vm697
    %v699 = vsel %vm698, %v691, %v695
    %v700 = vand.u32 2147483647, %v690
    %vm701 = vcmp.eq.f32.partialorder %v700, 8.507059e+37
    %v702 = vand.u32 %v690, 2147483648
    %v703 = vor.u32 1.1754944e-38, %v702
    %v704 = vsel %vm701, %v703, %v699
    %v705 = vmul.f32 1.0, %v704
    %v706 = vtanh.pop %v648
    %v707 = vmul.f32 %v705, %v589
    %709 = vrot.lane.b32.xlu0 %v706, 64
    %v710 = vpop.permute.xlu0 %709
    %v712 = vmul.f32 %v705, %v710
    %714 = vrot.lane.b32.xlu0 %v712, 32
    %v715 = vpop.permute.xlu0 %714
    %v717 = vadd.f32 %v707, %v715
    %v718 = vtanh.pop %v717
    %720 = vrot.lane.b32.xlu0 %v718, 64
    %v721 = vpop.permute.xlu0 %720
    %v723 = vmul.f32 %v705, %v721
    %s724 = scalar_lea.vmem %s0, 10
    %v725 = vld [vmem:[%s724] sm:$0x3]
    %727 = vrot.lane.b32.xlu0 %v686, 32
    %v728 = vpop.permute.xlu0 %727
    %v729 = vsel %vm69, %v728, 0
    %731 = vmatpush.msra.mxu0 0.0
    %732 = vmatpush.msra.mxu0 0.0
    %733 = vmatpush.msra.mxu0 0.0
    %734 = vmatpush.msra.mxu0 0.0
    %735 = vmatpush.msra.mxu0 0.0
    %736 = vmatpush.msra.mxu0 0.0
    %737 = vmatpush.msra.mxu0 0.0
    %738 = vmatpush.msra.mxu0 0.0
    %739 = vmatpush.msra.mxu0 0.0
    %740 = vmatpush.msra.mxu0 0.0
    %741 = vmatpush.msra.mxu0 0.0
    %742 = vmatpush.msra.mxu0 0.0
    %743 = vmatpush.msra.mxu0 %v67
    %744 = vmatpush.msra.mxu0 %v66
    %745 = vmatpush.msra.mxu0 %v65
    %746 = vmatpush.msra.mxu0 %v64
    %747 = vmatmul.f32.gmra.mxu0 %v729
    %v748 = vpop.f32.mrf.mxu0
    %v749 = vadd.f32 %v725, %v748
    %750 = vdwg.mxu0
    %s751 = scalar_lea.vmem %s46, 4
    %v752 = vld [vmem:[%s751] sm:$0x3]
    %754 = vrot.lane.b32.xlu0 %v723, 32
    %v755 = vpop.permute.xlu0 %754
    %v756 = vsel %vm69, %v755, 0
    %758 = vmatpush.msra.mxu0 0.0
    %759 = vmatpush.msra.mxu0 0.0
    %760 = vmatpush.msra.mxu0 0.0
    %761 = vmatpush.msra.mxu0 0.0
    %762 = vmatpush.msra.mxu0 0.0
    %763 = vmatpush.msra.mxu0 0.0
    %764 = vmatpush.msra.mxu0 0.0
    %765 = vmatpush.msra.mxu0 0.0
    %766 = vmatpush.msra.mxu0 0.0
    %767 = vmatpush.msra.mxu0 0.0
    %768 = vmatpush.msra.mxu0 0.0
    %769 = vmatpush.msra.mxu0 0.0
    %770 = vmatpush.msra.mxu0 %v96
    %771 = vmatpush.msra.mxu0 %v95
    %772 = vmatpush.msra.mxu0 %v94
    %773 = vmatpush.msra.mxu0 %v93
    %774 = vmatmul.f32.gmra.mxu0 %v756
    %v775 = vpop.f32.mrf.mxu0
    %v776 = vadd.f32 %v752, %v775
    %777 = vdwg.mxu0
    %v778 = vxor.u32 %v749, 2147483648
    %v779 = vmul.f32 %v778, 1.442695
    %v780 = vpow.pop %v779
    %v781 = vadd.f32 %v780, 1.0
    %v782 = vrcp.pop %v781
    %v783 = vmul.f32 %v781, %v782
    %v784 = vsub.f32 1.0, %v783
    %v785 = vmul.f32 %v782, %v784
    %v786 = vadd.f32 %v782, %v785
    %vm787 = vweird.f32 %v781
    %vm788 = vweird.f32 %v782
    %vm789 = vmor %vm787, %vm788
    %v790 = vsel %vm789, %v782, %v786
    %v791 = vand.u32 2147483647, %v781
    %vm792 = vcmp.eq.f32.partialorder %v791, 8.507059e+37
    %v793 = vand.u32 %v781, 2147483648
    %v794 = vor.u32 1.1754944e-38, %v793
    %v795 = vsel %vm792, %v794, %v790
    %v796 = vmul.f32 1.0, %v795
    %v797 = vtanh.pop %v749
    %v798 = vmul.f32 %v796, %v680
    %800 = vrot.lane.b32.xlu0 %v797, 64
    %v801 = vpop.permute.xlu0 %800
    %v803 = vmul.f32 %v796, %v801
    %805 = vrot.lane.b32.xlu0 %v803, 32
    %v806 = vpop.permute.xlu0 %805
    %v808 = vadd.f32 %v798, %v806
    %v809 = vtanh.pop %v808
    %811 = vrot.lane.b32.xlu0 %v809, 64
    %v812 = vpop.permute.xlu0 %811
    %v814 = vmul.f32 %v796, %v812
    %v815 = vxor.u32 %v776, 2147483648
    %v816 = vmul.f32 %v815, 1.442695
    %v817 = vpow.pop %v816
    %v818 = vadd.f32 %v817, 1.0
    %v819 = vrcp.pop %v818
    %v820 = vmul.f32 %v818, %v819
    %v821 = vsub.f32 1.0, %v820
    %v822 = vmul.f32 %v819, %v821
    %v823 = vadd.f32 %v819, %v822
    %vm824 = vweird.f32 %v818
    %vm825 = vweird.f32 %v819
    %vm826 = vmor %vm824, %vm825
    %v827 = vsel %vm826, %v819, %v823
    %v828 = vand.u32 2147483647, %v818
    %vm829 = vcmp.eq.f32.partialorder %v828, 8.507059e+37
    %v830 = vand.u32 %v818, 2147483648
    %v831 = vor.u32 1.1754944e-38, %v830
    %v832 = vsel %vm829, %v831, %v827
    %v833 = vmul.f32 1.0, %v832
    %v834 = vtanh.pop %v776
    %v835 = vmul.f32 %v833, %v717
    %837 = vrot.lane.b32.xlu0 %v834, 64
    %v838 = vpop.permute.xlu0 %837
    %v840 = vmul.f32 %v833, %v838
    %842 = vrot.lane.b32.xlu0 %v840, 32
    %v843 = vpop.permute.xlu0 %842
    %v845 = vadd.f32 %v835, %v843
    %v846 = vtanh.pop %v845
    %848 = vrot.lane.b32.xlu0 %v846, 64
    %v849 = vpop.permute.xlu0 %848
    %v851 = vmul.f32 %v833, %v849
    %s852 = scalar_lea.vmem %s0, 12
    %v853 = vld [vmem:[%s852] sm:$0x3]
    %855 = vrot.lane.b32.xlu0 %v814, 32
    %v856 = vpop.permute.xlu0 %855
    %v857 = vsel %vm69, %v856, 0
    %859 = vmatpush.msra.mxu0 0.0
    %860 = vmatpush.msra.mxu0 0.0
    %861 = vmatpush.msra.mxu0 0.0
    %862 = vmatpush.msra.mxu0 0.0
    %863 = vmatpush.msra.mxu0 0.0
    %864 = vmatpush.msra.mxu0 0.0
    %865 = vmatpush.msra.mxu0 0.0
    %866 = vmatpush.msra.mxu0 0.0
    %867 = vmatpush.msra.mxu0 0.0
    %868 = vmatpush.msra.mxu0 0.0
    %869 = vmatpush.msra.mxu0 0.0
    %870 = vmatpush.msra.mxu0 0.0
    %871 = vmatpush.msra.mxu0 %v67
    %872 = vmatpush.msra.mxu0 %v66
    %873 = vmatpush.msra.mxu0 %v65
    %874 = vmatpush.msra.mxu0 %v64
    %875 = vmatmul.f32.gmra.mxu0 %v857
    %v876 = vpop.f32.mrf.mxu0
    %v877 = vadd.f32 %v853, %v876
    %878 = vdwg.mxu0
    %s879 = scalar_lea.vmem %s46, 2
    %v880 = vld [vmem:[%s879] sm:$0x3]
    %882 = vrot.lane.b32.xlu0 %v851, 32
    %v883 = vpop.permute.xlu0 %882
    %v884 = vsel %vm69, %v883, 0
    %886 = vmatpush.msra.mxu0 0.0
    %887 = vmatpush.msra.mxu0 0.0
    %888 = vmatpush.msra.mxu0 0.0
    %889 = vmatpush.msra.mxu0 0.0
    %890 = vmatpush.msra.mxu0 0.0
    %891 = vmatpush.msra.mxu0 0.0
    %892 = vmatpush.msra.mxu0 0.0
    %893 = vmatpush.msra.mxu0 0.0
    %894 = vmatpush.msra.mxu0 0.0
    %895 = vmatpush.msra.mxu0 0.0
    %896 = vmatpush.msra.mxu0 0.0
    %897 = vmatpush.msra.mxu0 0.0
    %898 = vmatpush.msra.mxu0 %v96
    %899 = vmatpush.msra.mxu0 %v95
    %900 = vmatpush.msra.mxu0 %v94
    %901 = vmatpush.msra.mxu0 %v93
    %902 = vmatmul.f32.gmra.mxu0 %v884
    %v903 = vpop.f32.mrf.mxu0
    %v904 = vadd.f32 %v880, %v903
    %905 = vdwg.mxu0
    %v906 = vxor.u32 %v877, 2147483648
    %v907 = vmul.f32 %v906, 1.442695
    %v908 = vpow.pop %v907
    %v909 = vadd.f32 %v908, 1.0
    %v910 = vrcp.pop %v909
    %v911 = vmul.f32 %v909, %v910
    %v912 = vsub.f32 1.0, %v911
    %v913 = vmul.f32 %v910, %v912
    %v914 = vadd.f32 %v910, %v913
    %vm915 = vweird.f32 %v909
    %vm916 = vweird.f32 %v910
    %vm917 = vmor %vm915, %vm916
    %v918 = vsel %vm917, %v910, %v914
    %v919 = vand.u32 2147483647, %v909
    %vm920 = vcmp.eq.f32.partialorder %v919, 8.507059e+37
    %v921 = vand.u32 %v909, 2147483648
    %v922 = vor.u32 1.1754944e-38, %v921
    %v923 = vsel %vm920, %v922, %v918
    %v924 = vmul.f32 1.0, %v923
    %v925 = vtanh.pop %v877
    %v926 = vmul.f32 %v924, %v808
    %928 = vrot.lane.b32.xlu0 %v925, 64
    %v929 = vpop.permute.xlu0 %928
    %v931 = vmul.f32 %v924, %v929
    %933 = vrot.lane.b32.xlu0 %v931, 32
    %v934 = vpop.permute.xlu0 %933
    %v936 = vadd.f32 %v926, %v934
    %v937 = vtanh.pop %v936
    %939 = vrot.lane.b32.xlu0 %v937, 64
    %v940 = vpop.permute.xlu0 %939
    %v942 = vmul.f32 %v924, %v940
    %v943 = vxor.u32 %v904, 2147483648
    %v944 = vmul.f32 %v943, 1.442695
    %v945 = vpow.pop %v944
    %v946 = vadd.f32 %v945, 1.0
    %v947 = vrcp.pop %v946
    %v948 = vmul.f32 %v946, %v947
    %v949 = vsub.f32 1.0, %v948
    %v950 = vmul.f32 %v947, %v949
    %v951 = vadd.f32 %v947, %v950
    %vm952 = vweird.f32 %v946
    %vm953 = vweird.f32 %v947
    %vm954 = vmor %vm952, %vm953
    %v955 = vsel %vm954, %v947, %v951
    %v956 = vand.u32 2147483647, %v946
    %vm957 = vcmp.eq.f32.partialorder %v956, 8.507059e+37
    %v958 = vand.u32 %v946, 2147483648
    %v959 = vor.u32 1.1754944e-38, %v958
    %v960 = vsel %vm957, %v959, %v955
    %v961 = vmul.f32 1.0, %v960
    %v962 = vtanh.pop %v904
    %v963 = vmul.f32 %v961, %v845
    %965 = vrot.lane.b32.xlu0 %v962, 64
    %v966 = vpop.permute.xlu0 %965
    %v968 = vmul.f32 %v961, %v966
    %970 = vrot.lane.b32.xlu0 %v968, 32
    %v971 = vpop.permute.xlu0 %970
    %v973 = vadd.f32 %v963, %v971
    %v974 = vtanh.pop %v973
    %976 = vrot.lane.b32.xlu0 %v974, 64
    %v977 = vpop.permute.xlu0 %976
    %v979 = vmul.f32 %v961, %v977
    %s980 = scalar_lea.vmem %s0, 14
    %v981 = vld [vmem:[%s980] sm:$0x3]
    %983 = vrot.lane.b32.xlu0 %v942, 32
    %v984 = vpop.permute.xlu0 %983
    %v985 = vsel %vm69, %v984, 0
    %987 = vmatpush.msra.mxu0 0.0
    %988 = vmatpush.msra.mxu0 0.0
    %989 = vmatpush.msra.mxu0 0.0
    %990 = vmatpush.msra.mxu0 0.0
    %991 = vmatpush.msra.mxu0 0.0
    %992 = vmatpush.msra.mxu0 0.0
    %993 = vmatpush.msra.mxu0 0.0
    %994 = vmatpush.msra.mxu0 0.0
    %995 = vmatpush.msra.mxu0 0.0
    %996 = vmatpush.msra.mxu0 0.0
    %997 = vmatpush.msra.mxu0 0.0
    %998 = vmatpush.msra.mxu0 0.0
    %999 = vmatpush.msra.mxu0 %v67
    %1000 = vmatpush.msra.mxu0 %v66
    %1001 = vmatpush.msra.mxu0 %v65
    %1002 = vmatpush.msra.mxu0 %v64
    %1003 = vmatmul.f32.gmra.mxu0 %v985
    %v1004 = vpop.f32.mrf.mxu0
    %v1005 = vadd.f32 %v981, %v1004
    %1006 = vdwg.mxu0
    %v1007 = vld [vmem:[%s46] sm:$0x3]
    %1009 = vrot.lane.b32.xlu0 %v979, 32
    %v1010 = vpop.permute.xlu0 %1009
    %v1011 = vsel %vm69, %v1010, 0
    %1013 = vmatpush.msra.mxu0 0.0
    %1014 = vmatpush.msra.mxu0 0.0
    %1015 = vmatpush.msra.mxu0 0.0
    %1016 = vmatpush.msra.mxu0 0.0
    %1017 = vmatpush.msra.mxu0 0.0
    %1018 = vmatpush.msra.mxu0 0.0
    %1019 = vmatpush.msra.mxu0 0.0
    %1020 = vmatpush.msra.mxu0 0.0
    %1021 = vmatpush.msra.mxu0 0.0
    %1022 = vmatpush.msra.mxu0 0.0
    %1023 = vmatpush.msra.mxu0 0.0
    %1024 = vmatpush.msra.mxu0 0.0
    %1025 = vmatpush.msra.mxu0 %v96
    %1026 = vmatpush.msra.mxu0 %v95
    %1027 = vmatpush.msra.mxu0 %v94
    %1028 = vmatpush.msra.mxu0 %v93
    %1029 = vmatmul.f32.gmra.mxu0 %v1011
    %v1030 = vpop.f32.mrf.mxu0
    %v1031 = vadd.f32 %v1007, %v1030
    %1032 = vdwg.mxu0
    %v1033 = vxor.u32 %v1005, 2147483648
    %v1034 = vmul.f32 %v1033, 1.442695
    %v1035 = vpow.pop %v1034
    %v1036 = vadd.f32 %v1035, 1.0
    %v1037 = vrcp.pop %v1036
    %v1038 = vmul.f32 %v1036, %v1037
    %v1039 = vsub.f32 1.0, %v1038
    %v1040 = vmul.f32 %v1037, %v1039
    %v1041 = vadd.f32 %v1037, %v1040
    %vm1042 = vweird.f32 %v1036
    %vm1043 = vweird.f32 %v1037
    %vm1044 = vmor %vm1042, %vm1043
    %v1045 = vsel %vm1044, %v1037, %v1041
    %v1046 = vand.u32 2147483647, %v1036
    %vm1047 = vcmp.eq.f32.partialorder %v1046, 8.507059e+37
    %v1048 = vand.u32 %v1036, 2147483648
    %v1049 = vor.u32 1.1754944e-38, %v1048
    %v1050 = vsel %vm1047, %v1049, %v1045
    %v1051 = vmul.f32 1.0, %v1050
    %v1052 = vtanh.pop %v1005
    %v1053 = vmul.f32 %v1051, %v936
    %1055 = vrot.lane.b32.xlu0 %v1052, 64
    %v1056 = vpop.permute.xlu0 %1055
    %v1058 = vmul.f32 %v1051, %v1056
    %1060 = vrot.lane.b32.xlu0 %v1058, 32
    %v1061 = vpop.permute.xlu0 %1060
    %v1063 = vadd.f32 %v1053, %v1061
    %v1064 = vtanh.pop %v1063
    %1066 = vrot.lane.b32.xlu0 %v1064, 64
    %v1067 = vpop.permute.xlu0 %1066
    %v1069 = vmul.f32 %v1051, %v1067
    %v1070 = vxor.u32 %v1031, 2147483648
    %v1071 = vmul.f32 %v1070, 1.442695
    %v1072 = vpow.pop %v1071
    %v1073 = vadd.f32 %v1072, 1.0
    %v1074 = vrcp.pop %v1073
    %v1075 = vmul.f32 %v1073, %v1074
    %v1076 = vsub.f32 1.0, %v1075
    %v1077 = vmul.f32 %v1074, %v1076
    %v1078 = vadd.f32 %v1074, %v1077
    %vm1079 = vweird.f32 %v1073
    %vm1080 = vweird.f32 %v1074
    %vm1081 = vmor %vm1079, %vm1080
    %v1082 = vsel %vm1081, %v1074, %v1078
    %v1083 = vand.u32 2147483647, %v1073
    %vm1084 = vcmp.eq.f32.partialorder %v1083, 8.507059e+37
    %v1085 = vand.u32 %v1073, 2147483648
    %v1086 = vor.u32 1.1754944e-38, %v1085
    %v1087 = vsel %vm1084, %v1086, %v1082
    %v1088 = vmul.f32 1.0, %v1087
    %v1089 = vtanh.pop %v1031
    %v1090 = vmul.f32 %v1088, %v973
    %1092 = vrot.lane.b32.xlu0 %v1089, 64
    %v1093 = vpop.permute.xlu0 %1092
    %v1095 = vmul.f32 %v1088, %v1093
    %1097 = vrot.lane.b32.xlu0 %v1095, 32
    %v1098 = vpop.permute.xlu0 %1097
    %v1100 = vadd.f32 %v1090, %v1098
    %v1101 = vtanh.pop %v1100
    %1103 = vrot.lane.b32.xlu0 %v1101, 64
    %v1104 = vpop.permute.xlu0 %1103
    %v1106 = vmul.f32 %v1088, %v1104
    %1108 = vrot.lane.b32.xlu0 %v1069, 32
    %v1109 = vpop.permute.xlu0 %1108
    %vm1111 = vcmask 254976
    %1112 = vst.msk [vmem:[#allocation2] sm:$0x3] %vm1111, %v1109
    %1114 = vrot.lane.b32.xlu0 %v1063, 96
    %v1115 = vpop.permute.xlu0 %1114
    %1117 = vst.msk [vmem:[#allocation3] sm:$0x3] %vm1111, %v1115
    %1119 = vrot.lane.b32.xlu0 %v1106, 32
    %v1120 = vpop.permute.xlu0 %1119
    %1122 = vst.msk [vmem:[#allocation4] sm:$0x3] %vm1111, %v1120
    %1124 = vrot.lane.b32.xlu0 %v1100, 96
    %v1125 = vpop.permute.xlu0 %1124
    %1127 = vst.msk [vmem:[#allocation5] sm:$0x3] %vm1111, %v1125
    %1129 = vrot.lane.b32.xlu0 %v211, 32
    %v1130 = vpop.permute.xlu0 %1129
    %1132 = vst.msk [vmem:[#allocation6] sm:$0x3] %vm1111, %v1130
    // Predicated region
    $region34: #{bilstm_forward.7} parent=1 // pred_check
      %p1133 = pneg %p49
    $region35: #{bilstm_forward.7} parent=1 // pred_check_branch
      %1135 = sbr.rel (%p1133) target = $region37
    $region36: #{bilstm_forward.7} parent=1 // pred_region
      %v1136 = vld [vmem:[#allocation2] sm:$0x3]
      %v1137 = vld [vmem:[%s4] sm:$0xff]
      %v1138 = vld [vmem:[%s4 + $0x8] sm:$0xff]
      %v1139 = vld [vmem:[%s4 + $0x10] sm:$0xff]
      %v1140 = vld [vmem:[%s4 + $0x18] sm:$0xff]
      %v1141 = vld [vmem:[#allocation6] sm:$0x3]
      %v1142 = vld [vmem:[%s5] sm:$0xff]
      %v1143 = vld [vmem:[%s5 + $0x8] sm:$0xff]
      %v1144 = vld [vmem:[%s5 + $0x10] sm:$0xff]
      %v1145 = vld [vmem:[%s5 + $0x18] sm:$0xff]
      %v1147 = vsel %vm69, %v1141, 0
      %1149 = vmatpush.msra.mxu0 0.0
      %1150 = vmatpush.msra.mxu0 0.0
      %1151 = vmatpush.msra.mxu0 0.0
      %1152 = vmatpush.msra.mxu0 0.0
      %1153 = vmatpush.msra.mxu0 0.0
      %1154 = vmatpush.msra.mxu0 0.0
      %1155 = vmatpush.msra.mxu0 0.0
      %1156 = vmatpush.msra.mxu0 0.0
      %1157 = vmatpush.msra.mxu0 0.0
      %1158 = vmatpush.msra.mxu0 0.0
      %1159 = vmatpush.msra.mxu0 0.0
      %1160 = vmatpush.msra.mxu0 0.0
      %1161 = vmatpush.msra.mxu0 %v1145
      %1162 = vmatpush.msra.mxu0 %v1144
      %1163 = vmatpush.msra.mxu0 %v1143
      %1164 = vmatpush.msra.mxu0 %v1142
      %1165 = vmatmul.f32.gmra.mxu0 %v1147
      %v1166 = vpop.f32.mrf.mxu0
      %v1167 = vadd.f32 0.0, %v1166
      %1168 = vdwg.mxu0
      %v1170 = vsel %vm69, %v1136, 0
      %1172 = vmatpush.msra.mxu0 0.0
      %1173 = vmatpush.msra.mxu0 0.0
      %1174 = vmatpush.msra.mxu0 0.0
      %1175 = vmatpush.msra.mxu0 0.0
      %1176 = vmatpush.msra.mxu0 0.0
      %1177 = vmatpush.msra.mxu0 0.0
      %1178 = vmatpush.msra.mxu0 0.0
      %1179 = vmatpush.msra.mxu0 0.0
      %1180 = vmatpush.msra.mxu0 0.0
      %1181 = vmatpush.msra.mxu0 0.0
      %1182 = vmatpush.msra.mxu0 0.0
      %1183 = vmatpush.msra.mxu0 0.0
      %1184 = vmatpush.msra.mxu0 %v1140
      %1185 = vmatpush.msra.mxu0 %v1139
      %1186 = vmatpush.msra.mxu0 %v1138
      %1187 = vmatpush.msra.mxu0 %v1137
      %1188 = vmatmul.f32.gmra.mxu0 %v1170
      %v1189 = vpop.f32.mrf.mxu0
      %v1190 = vadd.f32 %v1167, %v1189
      %1191 = vdwg.mxu0
      %v1192 = vld [vmem:[%s6] sm:$0x1]
      %v1194 = vperm.slane %v1192, 0
      %v1196 = vadd.f32 %v1190, %v1194
      %vm1197 = vcmask 25600
      %1198 = vst.msk [vmem:[#allocation7] sm:$0x3] %vm1197, %v1196
    $region37: #{bilstm_forward.7} parent=1 // pred_fallthru
      _
    // Predicated region
    $region38: #{bilstm_forward.7} parent=1 // pred_check
      _
    $region39: #{bilstm_forward.7} parent=1 // pred_check_branch
      %1200 = sbr.rel (0) target = $region41
    $region40: #{bilstm_forward.7} parent=1 // pred_region
      %1202 = vsyncadd [#allocation8], 0
      %s1204 = sshll.u32 [#allocation7], 4
      %s1205 = int_to_ptr.vmem [resolvable:$true] %s1204
      %s1206 = sshll.u32 %s7, 4
      %s1207 = int_to_ptr.hbm [resolvable:$true] %s1206
      %1209 = dma.vmem_to_hbm [thread:$0]  %s1205, 32, %s1207, [#allocation8]
    $region41: #{bilstm_forward.7} parent=1 // pred_fallthru
      _
    // Predicated region
    $region42: #{bilstm_forward.7} parent=1 // pred_check
      _
    $region43: #{bilstm_forward.7} parent=1 // pred_check_branch
      %1211 = sbr.rel (0) target = $region45
    $region44: #{bilstm_forward.7} parent=1 // pred_region
      %1213 = dma.done [#allocation8], 32
    $region45: #{bilstm_forward.7} parent=1 // pred_fallthru
      _
    %1214 = vsyncpa [#allocation8], 1

</llo_original>
